<compile_context>
chip_gen: v7x
topology: tpu7x:2x2x1
jax: 0.10.0
libtpu: 0.0.40
codegen_flags: <defaults>
</compile_context>

<pallas_src>
import jax
import jax.numpy as jnp
from jax.experimental import pallas as pl
from jax.experimental.pallas import tpu as pltpu


# ----------------------------- Pallas kernel ------------------------------

def _fused_model_interp_kernel(wmat_ref, bias_ref, xsd_ref, wh_ref, wwt_ref,
                               o_ref, small_ref):
    """One grid step = (batch b, output-row tile h).

    wmat_ref : SMEM (K*CPP,)       flattened conv weight, (k, c*P*P+kh*P+kw)
    bias_ref : SMEM (K,)           conv bias
    xsd_ref  : VMEM (CPP, H4, W4)  space-to-depth image patches for batch b
    wh_ref   : VMEM (TH, H4)       rows of the H-interp matrix for this tile
    wwt_ref  : VMEM (W4, W)        transposed W-interp matrix (resident)
    o_ref    : VMEM (K, TH, W)     output logits tile
    small_ref: VMEM (K, H4, W4)    scratch: low-res logits, persists over h
    """
    K, TH, W = o_ref.shape
    CPP, H4, W4 = xsd_ref.shape
    h_tile = pl.program_id(1)

    # --- synthetic HF model head: 4x4 / stride-4 conv, once per batch -------
    @pl.when(h_tile == 0)
    def _conv():
        for k in range(K):                       # K = num classes (small)
            acc = jnp.zeros((H4, W4), dtype=jnp.float32)
            for c in range(CPP):                 # VPU FMA chain, hides under DMA
                acc = acc + wmat_ref[k * CPP + c] * xsd_ref[c]
            small_ref[k] = acc + bias_ref[k]

    # --- wrapper: F.interpolate(..., mode='bilinear', align_corners=False) --
    # expressed as two MXU matmuls per class:  Wh_tile @ small @ Ww^T
    for k in range(K):
        tmp = jnp.dot(wh_ref[...], small_ref[k],
                      preferred_element_type=jnp.float32)          # (TH, W4)
        o_ref[k] = jnp.dot(tmp, wwt_ref[...],
                           preferred_element_type=jnp.float32
                           ).astype(o_ref.dtype)                   # (TH, W)


# ----------------------------- host-side glue ------------------------------

def build_interp_matrix(out_size, in_size):
    """Exact PyTorch F.interpolate(mode='bilinear', align_corners=False) weights."""
    scale = in_size / out_size
    dst = jnp.arange(out_size, dtype=jnp.float32)
    src = jnp.maximum((dst + 0.5) * scale - 0.5, 0.0)
    i0 = jnp.minimum(jnp.floor(src).astype(jnp.int32), in_size - 1)
    i1 = jnp.minimum(i0 + 1, in_size - 1)
    lam = src - i0.astype(jnp.float32)
    m = ((1.0 - lam)[:, None] * jax.nn.one_hot(i0, in_size, dtype=jnp.float32)
         + lam[:, None] * jax.nn.one_hot(i1, in_size, dtype=jnp.float32))
    return m  # (out_size, in_size)


def huggingface_wrapper_forward(image, conv_w, conv_b, *, patch=4, h_tile=256):
    """image: (B, C, H, W) NCHW float32.  Returns dict(logits=(B,K,H,W), scores=None)."""
    B, C, H, W = image.shape
    P = patch
    assert H % P == 0 and W % P == 0, "synthetic head needs H, W divisible by patch"
    H4, W4 = H // P, W // P
    K = conv_w.shape[0]
    CPP = C * P * P

    # Single XLA rearrangement pass: space-to-depth patches (B, C*P*P, H4, W4).
    xsd = (image.astype(jnp.float32)
                .reshape(B, C, H4, P, W4, P)
                .transpose(0, 1, 3, 5, 2, 4)
                .reshape(B, CPP, H4, W4))
    wmat = conv_w.reshape(K * CPP).astype(jnp.float32)   # -> SMEM scalars
    bias = conv_b.astype(jnp.float32)                    # -> SMEM scalars

    # Exact PyTorch align_corners=False interpolation matrices.
    wh = build_interp_matrix(H, H4)          # (H, H4)
    wwt = build_interp_matrix(W, W4).T       # (W4, W)

    # Output-row tiling (keeps blocks small on v7x's 64 MiB VMEM).
    TH = H if H <= h_tile else h_tile        # h_tile is a multiple of 8
    nH = pl.cdiv(H, TH)

    flops = 2 * B * K * (CPP * H4 * W4 + H * H4 * W4 + H * W * W4)
    bytes_accessed = 4 * (B * CPP * H4 * W4 + B * K * H * W
                          + H * H4 + W4 * W + K * CPP + K)

    logits = pl.pallas_call(
        _fused_model_interp_kernel,
        out_shape=jax.ShapeDtypeStruct((B, K, H, W), jnp.float32),
        grid=(B, nH),
        in_specs=[
            pl.BlockSpec(memory_space=pltpu.MemorySpace.SMEM),             # wmat
            pl.BlockSpec(memory_space=pltpu.MemorySpace.SMEM),             # bias
            pl.BlockSpec((None, CPP, H4, W4), lambda b, h: (b, 0, 0, 0)),  # xsd
            pl.BlockSpec((TH, H4), lambda b, h: (h, 0)),                   # Wh rows
            pl.BlockSpec((W4, W), lambda b, h: (0, 0)),                    # Ww^T
        ],
        out_specs=pl.BlockSpec((None, K, TH, W), lambda b, h: (b, 0, h, 0)),
        scratch_shapes=[pltpu.VMEM((K, H4, W4), jnp.float32)],
        compiler_params=pltpu.CompilerParams(
            dimension_semantics=("parallel", "arbitrary")),
        cost_estimate=pl.CostEstimate(flops=flops, transcendentals=0,
                                      bytes_accessed=bytes_accessed),
    )(wmat, bias, xsd, wh, wwt)

    return {"logits": logits, "scores": None}            # RowWeederModelOutput


if __name__ == "__main__":
    key = jax.random.PRNGKey(0)
    kx, kw, kb = jax.random.split(key, 3)

    B, C, H, W = 2, 4, 16, 16
    NUM_CLASSES = 3

    image = jax.random.normal(kx, (B, C, H, W), dtype=jnp.float32)
    conv_w = 0.1 * jax.random.normal(kw, (NUM_CLASSES, C, 4, 4), dtype=jnp.float32)
    conv_b = 0.01 * jax.random.normal(kb, (NUM_CLASSES,), dtype=jnp.float32)

    out = jax.jit(huggingface_wrapper_forward)(image, conv_w, conv_b)
    jax.block_until_ready(out["logits"])
    assert out["logits"].shape == (B, NUM_CLASSES, H, W)
    assert out["scores"] is None
    print("KERNEL_OK")
</pallas_src>

<mosaic_0001>
module attributes {stable_mosaic.version = 11 : i64} {
  func.func @_fused_model_interp_kernel(%arg0: i32, %arg1: i32, %arg2: memref<192xf32, #tpu.memory_space<smem>>, %arg3: memref<3xf32, #tpu.memory_space<smem>>, %arg4: memref<1x64x4x4xf32, #tpu.memory_space<vmem>>, %arg5: memref<16x4xf32, #tpu.memory_space<vmem>>, %arg6: memref<4x16xf32, #tpu.memory_space<vmem>>, %arg7: memref<1x3x16x16xf32, #tpu.memory_space<vmem>>, %arg8: memref<3x4x4xf32, #tpu.memory_space<vmem>>) attributes {dimension_semantics = [#tpu.dimension_semantics<parallel>, #tpu.dimension_semantics<arbitrary>], iteration_bounds = array<i64: 2, 1>, scalar_prefetch = 0 : i64, scratch_operands = 1 : i64, tpu.core_type = #tpu.core_type<tc>, window_params = [{transform_indices = @transform_0, window_bounds = array<i64: 192>}, {transform_indices = @transform_1, window_bounds = array<i64: 3>}, {transform_indices = @transform_2, window_bounds = array<i64: 1, 64, 4, 4>}, {transform_indices = @transform_3, window_bounds = array<i64: 16, 4>}, {pipeline_mode = #tpu.pipeline_mode<synchronous>, transform_indices = @transform_4, window_bounds = array<i64: 4, 16>}, {transform_indices = @transform_5, window_bounds = array<i64: 1, 3, 16, 16>}]} {
    %c0_i32 = arith.constant 0 : i32
    %0 = arith.cmpi eq, %arg1, %c0_i32 : i32
    %1 = arith.extui %0 : i1 to i32
    %c0_i32_0 = arith.constant 0 : i32
    %2 = arith.cmpi ne, %1, %c0_i32_0 : i32
    scf.if %2 {
      %cst_36 = arith.constant 0.000000e+00 : f32
      %30 = vector.broadcast %cst_36 : f32 to vector<4x4xf32>
      %c0_37 = arith.constant 0 : index
      %31 = memref.load %arg2[%c0_37] : memref<192xf32, #tpu.memory_space<smem>>
      %c0_38 = arith.constant 0 : index
      %c0_39 = arith.constant 0 : index
      %c0_40 = arith.constant 0 : index
      %c0_41 = arith.constant 0 : index
      %32 = vector.load %arg4[%c0_38, %c0_39, %c0_40, %c0_41] : memref<1x64x4x4xf32, #tpu.memory_space<vmem>>, vector<1x1x4x4xf32>
      %33 = vector.shape_cast %32 : vector<1x1x4x4xf32> to vector<4x4xf32>
      %34 = vector.broadcast %31 : f32 to vector<4x4xf32>
      %35 = arith.mulf %34, %33 : vector<4x4xf32>
      %36 = arith.addf %30, %35 : vector<4x4xf32>
      %c1_42 = arith.constant 1 : index
      %37 = memref.load %arg2[%c1_42] : memref<192xf32, #tpu.memory_space<smem>>
      %c0_43 = arith.constant 0 : index
      %c1_44 = arith.constant 1 : index
      %c0_45 = arith.constant 0 : index
      %c0_46 = arith.constant 0 : index
      %38 = vector.load %arg4[%c0_43, %c1_44, %c0_45, %c0_46] : memref<1x64x4x4xf32, #tpu.memory_space<vmem>>, vector<1x1x4x4xf32>
      %39 = vector.shape_cast %38 : vector<1x1x4x4xf32> to vector<4x4xf32>
      %40 = vector.broadcast %37 : f32 to vector<4x4xf32>
      %41 = arith.mulf %40, %39 : vector<4x4xf32>
      %42 = arith.addf %36, %41 : vector<4x4xf32>
      %c2_47 = arith.constant 2 : index
      %43 = memref.load %arg2[%c2_47] : memref<192xf32, #tpu.memory_space<smem>>
      %c0_48 = arith.constant 0 : index
      %c2_49 = arith.constant 2 : index
      %c0_50 = arith.constant 0 : index
      %c0_51 = arith.constant 0 : index
      %44 = vector.load %arg4[%c0_48, %c2_49, %c0_50, %c0_51] : memref<1x64x4x4xf32, #tpu.memory_space<vmem>>, vector<1x1x4x4xf32>
      %45 = vector.shape_cast %44 : vector<1x1x4x4xf32> to vector<4x4xf32>
      %46 = vector.broadcast %43 : f32 to vector<4x4xf32>
      %47 = arith.mulf %46, %45 : vector<4x4xf32>
      %48 = arith.addf %42, %47 : vector<4x4xf32>
      %c3 = arith.constant 3 : index
      %49 = memref.load %arg2[%c3] : memref<192xf32, #tpu.memory_space<smem>>
      %c0_52 = arith.constant 0 : index
      %c3_53 = arith.constant 3 : index
      %c0_54 = arith.constant 0 : index
      %c0_55 = arith.constant 0 : index
      %50 = vector.load %arg4[%c0_52, %c3_53, %c0_54, %c0_55] : memref<1x64x4x4xf32, #tpu.memory_space<vmem>>, vector<1x1x4x4xf32>
      %51 = vector.shape_cast %50 : vector<1x1x4x4xf32> to vector<4x4xf32>
      %52 = vector.broadcast %49 : f32 to vector<4x4xf32>
      %53 = arith.mulf %52, %51 : vector<4x4xf32>
      %54 = arith.addf %48, %53 : vector<4x4xf32>
      %c4 = arith.constant 4 : index
      %55 = memref.load %arg2[%c4] : memref<192xf32, #tpu.memory_space<smem>>
      %c0_56 = arith.constant 0 : index
      %c4_57 = arith.constant 4 : index
      %c0_58 = arith.constant 0 : index
      %c0_59 = arith.constant 0 : index
      %56 = vector.load %arg4[%c0_56, %c4_57, %c0_58, %c0_59] : memref<1x64x4x4xf32, #tpu.memory_space<vmem>>, vector<1x1x4x4xf32>
      %57 = vector.shape_cast %56 : vector<1x1x4x4xf32> to vector<4x4xf32>
      %58 = vector.broadcast %55 : f32 to vector<4x4xf32>
      %59 = arith.mulf %58, %57 : vector<4x4xf32>
      %60 = arith.addf %54, %59 : vector<4x4xf32>
      %c5 = arith.constant 5 : index
      %61 = memref.load %arg2[%c5] : memref<192xf32, #tpu.memory_space<smem>>
      %c0_60 = arith.constant 0 : index
      %c5_61 = arith.constant 5 : index
      %c0_62 = arith.constant 0 : index
      %c0_63 = arith.constant 0 : index
      %62 = vector.load %arg4[%c0_60, %c5_61, %c0_62, %c0_63] : memref<1x64x4x4xf32, #tpu.memory_space<vmem>>, vector<1x1x4x4xf32>
      %63 = vector.shape_cast %62 : vector<1x1x4x4xf32> to vector<4x4xf32>
      %64 = vector.broadcast %61 : f32 to vector<4x4xf32>
      %65 = arith.mulf %64, %63 : vector<4x4xf32>
      %66 = arith.addf %60, %65 : vector<4x4xf32>
      %c6 = arith.constant 6 : index
      %67 = memref.load %arg2[%c6] : memref<192xf32, #tpu.memory_space<smem>>
      %c0_64 = arith.constant 0 : index
      %c6_65 = arith.constant 6 : index
      %c0_66 = arith.constant 0 : index
      %c0_67 = arith.constant 0 : index
      %68 = vector.load %arg4[%c0_64, %c6_65, %c0_66, %c0_67] : memref<1x64x4x4xf32, #tpu.memory_space<vmem>>, vector<1x1x4x4xf32>
      %69 = vector.shape_cast %68 : vector<1x1x4x4xf32> to vector<4x4xf32>
      %70 = vector.broadcast %67 : f32 to vector<4x4xf32>
      %71 = arith.mulf %70, %69 : vector<4x4xf32>
      %72 = arith.addf %66, %71 : vector<4x4xf32>
      %c7 = arith.constant 7 : index
      %73 = memref.load %arg2[%c7] : memref<192xf32, #tpu.memory_space<smem>>
      %c0_68 = arith.constant 0 : index
      %c7_69 = arith.constant 7 : index
      %c0_70 = arith.constant 0 : index
      %c0_71 = arith.constant 0 : index
      %74 = vector.load %arg4[%c0_68, %c7_69, %c0_70, %c0_71] : memref<1x64x4x4xf32, #tpu.memory_space<vmem>>, vector<1x1x4x4xf32>
      %75 = vector.shape_cast %74 : vector<1x1x4x4xf32> to vector<4x4xf32>
      %76 = vector.broadcast %73 : f32 to vector<4x4xf32>
      %77 = arith.mulf %76, %75 : vector<4x4xf32>
      %78 = arith.addf %72, %77 : vector<4x4xf32>
      %c8 = arith.constant 8 : index
      %79 = memref.load %arg2[%c8] : memref<192xf32, #tpu.memory_space<smem>>
      %c0_72 = arith.constant 0 : index
      %c8_73 = arith.constant 8 : index
      %c0_74 = arith.constant 0 : index
      %c0_75 = arith.constant 0 : index
      %80 = vector.load %arg4[%c0_72, %c8_73, %c0_74, %c0_75] : memref<1x64x4x4xf32, #tpu.memory_space<vmem>>, vector<1x1x4x4xf32>
      %81 = vector.shape_cast %80 : vector<1x1x4x4xf32> to vector<4x4xf32>
      %82 = vector.broadcast %79 : f32 to vector<4x4xf32>
      %83 = arith.mulf %82, %81 : vector<4x4xf32>
      %84 = arith.addf %78, %83 : vector<4x4xf32>
      %c9 = arith.constant 9 : index
      %85 = memref.load %arg2[%c9] : memref<192xf32, #tpu.memory_space<smem>>
      %c0_76 = arith.constant 0 : index
      %c9_77 = arith.constant 9 : index
      %c0_78 = arith.constant 0 : index
      %c0_79 = arith.constant 0 : index
      %86 = vector.load %arg4[%c0_76, %c9_77, %c0_78, %c0_79] : memref<1x64x4x4xf32, #tpu.memory_space<vmem>>, vector<1x1x4x4xf32>
      %87 = vector.shape_cast %86 : vector<1x1x4x4xf32> to vector<4x4xf32>
      %88 = vector.broadcast %85 : f32 to vector<4x4xf32>
      %89 = arith.mulf %88, %87 : vector<4x4xf32>
      %90 = arith.addf %84, %89 : vector<4x4xf32>
      %c10 = arith.constant 10 : index
      %91 = memref.load %arg2[%c10] : memref<192xf32, #tpu.memory_space<smem>>
      %c0_80 = arith.constant 0 : index
      %c10_81 = arith.constant 10 : index
      %c0_82 = arith.constant 0 : index
      %c0_83 = arith.constant 0 : index
      %92 = vector.load %arg4[%c0_80, %c10_81, %c0_82, %c0_83] : memref<1x64x4x4xf32, #tpu.memory_space<vmem>>, vector<1x1x4x4xf32>
      %93 = vector.shape_cast %92 : vector<1x1x4x4xf32> to vector<4x4xf32>
      %94 = vector.broadcast %91 : f32 to vector<4x4xf32>
      %95 = arith.mulf %94, %93 : vector<4x4xf32>
      %96 = arith.addf %90, %95 : vector<4x4xf32>
      %c11 = arith.constant 11 : index
      %97 = memref.load %arg2[%c11] : memref<192xf32, #tpu.memory_space<smem>>
      %c0_84 = arith.constant 0 : index
      %c11_85 = arith.constant 11 : index
      %c0_86 = arith.constant 0 : index
      %c0_87 = arith.constant 0 : index
      %98 = vector.load %arg4[%c0_84, %c11_85, %c0_86, %c0_87] : memref<1x64x4x4xf32, #tpu.memory_space<vmem>>, vector<1x1x4x4xf32>
      %99 = vector.shape_cast %98 : vector<1x1x4x4xf32> to vector<4x4xf32>
      %100 = vector.broadcast %97 : f32 to vector<4x4xf32>
      %101 = arith.mulf %100, %99 : vector<4x4xf32>
      %102 = arith.addf %96, %101 : vector<4x4xf32>
      %c12 = arith.constant 12 : index
      %103 = memref.load %arg2[%c12] : memref<192xf32, #tpu.memory_space<smem>>
      %c0_88 = arith.constant 0 : index
      %c12_89 = arith.constant 12 : index
      %c0_90 = arith.constant 0 : index
      %c0_91 = arith.constant 0 : index
      %104 = vector.load %arg4[%c0_88, %c12_89, %c0_90, %c0_91] : memref<1x64x4x4xf32, #tpu.memory_space<vmem>>, vector<1x1x4x4xf32>
      %105 = vector.shape_cast %104 : vector<1x1x4x4xf32> to vector<4x4xf32>
      %106 = vector.broadcast %103 : f32 to vector<4x4xf32>
      %107 = arith.mulf %106, %105 : vector<4x4xf32>
      %108 = arith.addf %102, %107 : vector<4x4xf32>
      %c13 = arith.constant 13 : index
      %109 = memref.load %arg2[%c13] : memref<192xf32, #tpu.memory_space<smem>>
      %c0_92 = arith.constant 0 : index
      %c13_93 = arith.constant 13 : index
      %c0_94 = arith.constant 0 : index
      %c0_95 = arith.constant 0 : index
      %110 = vector.load %arg4[%c0_92, %c13_93, %c0_94, %c0_95] : memref<1x64x4x4xf32, #tpu.memory_space<vmem>>, vector<1x1x4x4xf32>
      %111 = vector.shape_cast %110 : vector<1x1x4x4xf32> to vector<4x4xf32>
      %112 = vector.broadcast %109 : f32 to vector<4x4xf32>
      %113 = arith.mulf %112, %111 : vector<4x4xf32>
      %114 = arith.addf %108, %113 : vector<4x4xf32>
      %c14 = arith.constant 14 : index
      %115 = memref.load %arg2[%c14] : memref<192xf32, #tpu.memory_space<smem>>
      %c0_96 = arith.constant 0 : index
      %c14_97 = arith.constant 14 : index
      %c0_98 = arith.constant 0 : index
      %c0_99 = arith.constant 0 : index
      %116 = vector.load %arg4[%c0_96, %c14_97, %c0_98, %c0_99] : memref<1x64x4x4xf32, #tpu.memory_space<vmem>>, vector<1x1x4x4xf32>
      %117 = vector.shape_cast %116 : vector<1x1x4x4xf32> to vector<4x4xf32>
      %118 = vector.broadcast %115 : f32 to vector<4x4xf32>
      %119 = arith.mulf %118, %117 : vector<4x4xf32>
      %120 = arith.addf %114, %119 : vector<4x4xf32>
      %c15 = arith.constant 15 : index
      %121 = memref.load %arg2[%c15] : memref<192xf32, #tpu.memory_space<smem>>
      %c0_100 = arith.constant 0 : index
      %c15_101 = arith.constant 15 : index
      %c0_102 = arith.constant 0 : index
      %c0_103 = arith.constant 0 : index
      %122 = vector.load %arg4[%c0_100, %c15_101, %c0_102, %c0_103] : memref<1x64x4x4xf32, #tpu.memory_space<vmem>>, vector<1x1x4x4xf32>
      %123 = vector.shape_cast %122 : vector<1x1x4x4xf32> to vector<4x4xf32>
      %124 = vector.broadcast %121 : f32 to vector<4x4xf32>
      %125 = arith.mulf %124, %123 : vector<4x4xf32>
      %126 = arith.addf %120, %125 : vector<4x4xf32>
      %c16 = arith.constant 16 : index
      %127 = memref.load %arg2[%c16] : memref<192xf32, #tpu.memory_space<smem>>
      %c0_104 = arith.constant 0 : index
      %c16_105 = arith.constant 16 : index
      %c0_106 = arith.constant 0 : index
      %c0_107 = arith.constant 0 : index
      %128 = vector.load %arg4[%c0_104, %c16_105, %c0_106, %c0_107] : memref<1x64x4x4xf32, #tpu.memory_space<vmem>>, vector<1x1x4x4xf32>
      %129 = vector.shape_cast %128 : vector<1x1x4x4xf32> to vector<4x4xf32>
      %130 = vector.broadcast %127 : f32 to vector<4x4xf32>
      %131 = arith.mulf %130, %129 : vector<4x4xf32>
      %132 = arith.addf %126, %131 : vector<4x4xf32>
      %c17 = arith.constant 17 : index
      %133 = memref.load %arg2[%c17] : memref<192xf32, #tpu.memory_space<smem>>
      %c0_108 = arith.constant 0 : index
      %c17_109 = arith.constant 17 : index
      %c0_110 = arith.constant 0 : index
      %c0_111 = arith.constant 0 : index
      %134 = vector.load %arg4[%c0_108, %c17_109, %c0_110, %c0_111] : memref<1x64x4x4xf32, #tpu.memory_space<vmem>>, vector<1x1x4x4xf32>
      %135 = vector.shape_cast %134 : vector<1x1x4x4xf32> to vector<4x4xf32>
      %136 = vector.broadcast %133 : f32 to vector<4x4xf32>
      %137 = arith.mulf %136, %135 : vector<4x4xf32>
      %138 = arith.addf %132, %137 : vector<4x4xf32>
      %c18 = arith.constant 18 : index
      %139 = memref.load %arg2[%c18] : memref<192xf32, #tpu.memory_space<smem>>
      %c0_112 = arith.constant 0 : index
      %c18_113 = arith.constant 18 : index
      %c0_114 = arith.constant 0 : index
      %c0_115 = arith.constant 0 : index
      %140 = vector.load %arg4[%c0_112, %c18_113, %c0_114, %c0_115] : memref<1x64x4x4xf32, #tpu.memory_space<vmem>>, vector<1x1x4x4xf32>
      %141 = vector.shape_cast %140 : vector<1x1x4x4xf32> to vector<4x4xf32>
      %142 = vector.broadcast %139 : f32 to vector<4x4xf32>
      %143 = arith.mulf %142, %141 : vector<4x4xf32>
      %144 = arith.addf %138, %143 : vector<4x4xf32>
      %c19 = arith.constant 19 : index
      %145 = memref.load %arg2[%c19] : memref<192xf32, #tpu.memory_space<smem>>
      %c0_116 = arith.constant 0 : index
      %c19_117 = arith.constant 19 : index
      %c0_118 = arith.constant 0 : index
      %c0_119 = arith.constant 0 : index
      %146 = vector.load %arg4[%c0_116, %c19_117, %c0_118, %c0_119] : memref<1x64x4x4xf32, #tpu.memory_space<vmem>>, vector<1x1x4x4xf32>
      %147 = vector.shape_cast %146 : vector<1x1x4x4xf32> to vector<4x4xf32>
      %148 = vector.broadcast %145 : f32 to vector<4x4xf32>
      %149 = arith.mulf %148, %147 : vector<4x4xf32>
      %150 = arith.addf %144, %149 : vector<4x4xf32>
      %c20 = arith.constant 20 : index
      %151 = memref.load %arg2[%c20] : memref<192xf32, #tpu.memory_space<smem>>
      %c0_120 = arith.constant 0 : index
      %c20_121 = arith.constant 20 : index
      %c0_122 = arith.constant 0 : index
      %c0_123 = arith.constant 0 : index
      %152 = vector.load %arg4[%c0_120, %c20_121, %c0_122, %c0_123] : memref<1x64x4x4xf32, #tpu.memory_space<vmem>>, vector<1x1x4x4xf32>
      %153 = vector.shape_cast %152 : vector<1x1x4x4xf32> to vector<4x4xf32>
      %154 = vector.broadcast %151 : f32 to vector<4x4xf32>
      %155 = arith.mulf %154, %153 : vector<4x4xf32>
      %156 = arith.addf %150, %155 : vector<4x4xf32>
      %c21 = arith.constant 21 : index
      %157 = memref.load %arg2[%c21] : memref<192xf32, #tpu.memory_space<smem>>
      %c0_124 = arith.constant 0 : index
      %c21_125 = arith.constant 21 : index
      %c0_126 = arith.constant 0 : index
      %c0_127 = arith.constant 0 : index
      %158 = vector.load %arg4[%c0_124, %c21_125, %c0_126, %c0_127] : memref<1x64x4x4xf32, #tpu.memory_space<vmem>>, vector<1x1x4x4xf32>
      %159 = vector.shape_cast %158 : vector<1x1x4x4xf32> to vector<4x4xf32>
      %160 = vector.broadcast %157 : f32 to vector<4x4xf32>
      %161 = arith.mulf %160, %159 : vector<4x4xf32>
      %162 = arith.addf %156, %161 : vector<4x4xf32>
      %c22 = arith.constant 22 : index
      %163 = memref.load %arg2[%c22] : memref<192xf32, #tpu.memory_space<smem>>
      %c0_128 = arith.constant 0 : index
      %c22_129 = arith.constant 22 : index
      %c0_130 = arith.constant 0 : index
      %c0_131 = arith.constant 0 : index
      %164 = vector.load %arg4[%c0_128, %c22_129, %c0_130, %c0_131] : memref<1x64x4x4xf32, #tpu.memory_space<vmem>>, vector<1x1x4x4xf32>
      %165 = vector.shape_cast %164 : vector<1x1x4x4xf32> to vector<4x4xf32>
      %166 = vector.broadcast %163 : f32 to vector<4x4xf32>
      %167 = arith.mulf %166, %165 : vector<4x4xf32>
      %168 = arith.addf %162, %167 : vector<4x4xf32>
      %c23 = arith.constant 23 : index
      %169 = memref.load %arg2[%c23] : memref<192xf32, #tpu.memory_space<smem>>
      %c0_132 = arith.constant 0 : index
      %c23_133 = arith.constant 23 : index
      %c0_134 = arith.constant 0 : index
      %c0_135 = arith.constant 0 : index
      %170 = vector.load %arg4[%c0_132, %c23_133, %c0_134, %c0_135] : memref<1x64x4x4xf32, #tpu.memory_space<vmem>>, vector<1x1x4x4xf32>
      %171 = vector.shape_cast %170 : vector<1x1x4x4xf32> to vector<4x4xf32>
      %172 = vector.broadcast %169 : f32 to vector<4x4xf32>
      %173 = arith.mulf %172, %171 : vector<4x4xf32>
      %174 = arith.addf %168, %173 : vector<4x4xf32>
      %c24 = arith.constant 24 : index
      %175 = memref.load %arg2[%c24] : memref<192xf32, #tpu.memory_space<smem>>
      %c0_136 = arith.constant 0 : index
      %c24_137 = arith.constant 24 : index
      %c0_138 = arith.constant 0 : index
      %c0_139 = arith.constant 0 : index
      %176 = vector.load %arg4[%c0_136, %c24_137, %c0_138, %c0_139] : memref<1x64x4x4xf32, #tpu.memory_space<vmem>>, vector<1x1x4x4xf32>
      %177 = vector.shape_cast %176 : vector<1x1x4x4xf32> to vector<4x4xf32>
      %178 = vector.broadcast %175 : f32 to vector<4x4xf32>
      %179 = arith.mulf %178, %177 : vector<4x4xf32>
      %180 = arith.addf %174, %179 : vector<4x4xf32>
      %c25 = arith.constant 25 : index
      %181 = memref.load %arg2[%c25] : memref<192xf32, #tpu.memory_space<smem>>
      %c0_140 = arith.constant 0 : index
      %c25_141 = arith.constant 25 : index
      %c0_142 = arith.constant 0 : index
      %c0_143 = arith.constant 0 : index
      %182 = vector.load %arg4[%c0_140, %c25_141, %c0_142, %c0_143] : memref<1x64x4x4xf32, #tpu.memory_space<vmem>>, vector<1x1x4x4xf32>
      %183 = vector.shape_cast %182 : vector<1x1x4x4xf32> to vector<4x4xf32>
      %184 = vector.broadcast %181 : f32 to vector<4x4xf32>
      %185 = arith.mulf %184, %183 : vector<4x4xf32>
      %186 = arith.addf %180, %185 : vector<4x4xf32>
      %c26 = arith.constant 26 : index
      %187 = memref.load %arg2[%c26] : memref<192xf32, #tpu.memory_space<smem>>
      %c0_144 = arith.constant 0 : index
      %c26_145 = arith.constant 26 : index
      %c0_146 = arith.constant 0 : index
      %c0_147 = arith.constant 0 : index
      %188 = vector.load %arg4[%c0_144, %c26_145, %c0_146, %c0_147] : memref<1x64x4x4xf32, #tpu.memory_space<vmem>>, vector<1x1x4x4xf32>
      %189 = vector.shape_cast %188 : vector<1x1x4x4xf32> to vector<4x4xf32>
      %190 = vector.broadcast %187 : f32 to vector<4x4xf32>
      %191 = arith.mulf %190, %189 : vector<4x4xf32>
      %192 = arith.addf %186, %191 : vector<4x4xf32>
      %c27 = arith.constant 27 : index
      %193 = memref.load %arg2[%c27] : memref<192xf32, #tpu.memory_space<smem>>
      %c0_148 = arith.constant 0 : index
      %c27_149 = arith.constant 27 : index
      %c0_150 = arith.constant 0 : index
      %c0_151 = arith.constant 0 : index
      %194 = vector.load %arg4[%c0_148, %c27_149, %c0_150, %c0_151] : memref<1x64x4x4xf32, #tpu.memory_space<vmem>>, vector<1x1x4x4xf32>
      %195 = vector.shape_cast %194 : vector<1x1x4x4xf32> to vector<4x4xf32>
      %196 = vector.broadcast %193 : f32 to vector<4x4xf32>
      %197 = arith.mulf %196, %195 : vector<4x4xf32>
      %198 = arith.addf %192, %197 : vector<4x4xf32>
      %c28 = arith.constant 28 : index
      %199 = memref.load %arg2[%c28] : memref<192xf32, #tpu.memory_space<smem>>
      %c0_152 = arith.constant 0 : index
      %c28_153 = arith.constant 28 : index
      %c0_154 = arith.constant 0 : index
      %c0_155 = arith.constant 0 : index
      %200 = vector.load %arg4[%c0_152, %c28_153, %c0_154, %c0_155] : memref<1x64x4x4xf32, #tpu.memory_space<vmem>>, vector<1x1x4x4xf32>
      %201 = vector.shape_cast %200 : vector<1x1x4x4xf32> to vector<4x4xf32>
      %202 = vector.broadcast %199 : f32 to vector<4x4xf32>
      %203 = arith.mulf %202, %201 : vector<4x4xf32>
      %204 = arith.addf %198, %203 : vector<4x4xf32>
      %c29 = arith.constant 29 : index
      %205 = memref.load %arg2[%c29] : memref<192xf32, #tpu.memory_space<smem>>
      %c0_156 = arith.constant 0 : index
      %c29_157 = arith.constant 29 : index
      %c0_158 = arith.constant 0 : index
      %c0_159 = arith.constant 0 : index
      %206 = vector.load %arg4[%c0_156, %c29_157, %c0_158, %c0_159] : memref<1x64x4x4xf32, #tpu.memory_space<vmem>>, vector<1x1x4x4xf32>
      %207 = vector.shape_cast %206 : vector<1x1x4x4xf32> to vector<4x4xf32>
      %208 = vector.broadcast %205 : f32 to vector<4x4xf32>
      %209 = arith.mulf %208, %207 : vector<4x4xf32>
      %210 = arith.addf %204, %209 : vector<4x4xf32>
      %c30 = arith.constant 30 : index
      %211 = memref.load %arg2[%c30] : memref<192xf32, #tpu.memory_space<smem>>
      %c0_160 = arith.constant 0 : index
      %c30_161 = arith.constant 30 : index
      %c0_162 = arith.constant 0 : index
      %c0_163 = arith.constant 0 : index
      %212 = vector.load %arg4[%c0_160, %c30_161, %c0_162, %c0_163] : memref<1x64x4x4xf32, #tpu.memory_space<vmem>>, vector<1x1x4x4xf32>
      %213 = vector.shape_cast %212 : vector<1x1x4x4xf32> to vector<4x4xf32>
      %214 = vector.broadcast %211 : f32 to vector<4x4xf32>
      %215 = arith.mulf %214, %213 : vector<4x4xf32>
      %216 = arith.addf %210, %215 : vector<4x4xf32>
      %c31 = arith.constant 31 : index
      %217 = memref.load %arg2[%c31] : memref<192xf32, #tpu.memory_space<smem>>
      %c0_164 = arith.constant 0 : index
      %c31_165 = arith.constant 31 : index
      %c0_166 = arith.constant 0 : index
      %c0_167 = arith.constant 0 : index
      %218 = vector.load %arg4[%c0_164, %c31_165, %c0_166, %c0_167] : memref<1x64x4x4xf32, #tpu.memory_space<vmem>>, vector<1x1x4x4xf32>
      %219 = vector.shape_cast %218 : vector<1x1x4x4xf32> to vector<4x4xf32>
      %220 = vector.broadcast %217 : f32 to vector<4x4xf32>
      %221 = arith.mulf %220, %219 : vector<4x4xf32>
      %222 = arith.addf %216, %221 : vector<4x4xf32>
      %c32 = arith.constant 32 : index
      %223 = memref.load %arg2[%c32] : memref<192xf32, #tpu.memory_space<smem>>
      %c0_168 = arith.constant 0 : index
      %c32_169 = arith.constant 32 : index
      %c0_170 = arith.constant 0 : index
      %c0_171 = arith.constant 0 : index
      %224 = vector.load %arg4[%c0_168, %c32_169, %c0_170, %c0_171] : memref<1x64x4x4xf32, #tpu.memory_space<vmem>>, vector<1x1x4x4xf32>
      %225 = vector.shape_cast %224 : vector<1x1x4x4xf32> to vector<4x4xf32>
      %226 = vector.broadcast %223 : f32 to vector<4x4xf32>
      %227 = arith.mulf %226, %225 : vector<4x4xf32>
      %228 = arith.addf %222, %227 : vector<4x4xf32>
      %c33 = arith.constant 33 : index
      %229 = memref.load %arg2[%c33] : memref<192xf32, #tpu.memory_space<smem>>
      %c0_172 = arith.constant 0 : index
      %c33_173 = arith.constant 33 : index
      %c0_174 = arith.constant 0 : index
      %c0_175 = arith.constant 0 : index
      %230 = vector.load %arg4[%c0_172, %c33_173, %c0_174, %c0_175] : memref<1x64x4x4xf32, #tpu.memory_space<vmem>>, vector<1x1x4x4xf32>
      %231 = vector.shape_cast %230 : vector<1x1x4x4xf32> to vector<4x4xf32>
      %232 = vector.broadcast %229 : f32 to vector<4x4xf32>
      %233 = arith.mulf %232, %231 : vector<4x4xf32>
      %234 = arith.addf %228, %233 : vector<4x4xf32>
      %c34 = arith.constant 34 : index
      %235 = memref.load %arg2[%c34] : memref<192xf32, #tpu.memory_space<smem>>
      %c0_176 = arith.constant 0 : index
      %c34_177 = arith.constant 34 : index
      %c0_178 = arith.constant 0 : index
      %c0_179 = arith.constant 0 : index
      %236 = vector.load %arg4[%c0_176, %c34_177, %c0_178, %c0_179] : memref<1x64x4x4xf32, #tpu.memory_space<vmem>>, vector<1x1x4x4xf32>
      %237 = vector.shape_cast %236 : vector<1x1x4x4xf32> to vector<4x4xf32>
      %238 = vector.broadcast %235 : f32 to vector<4x4xf32>
      %239 = arith.mulf %238, %237 : vector<4x4xf32>
      %240 = arith.addf %234, %239 : vector<4x4xf32>
      %c35 = arith.constant 35 : index
      %241 = memref.load %arg2[%c35] : memref<192xf32, #tpu.memory_space<smem>>
      %c0_180 = arith.constant 0 : index
      %c35_181 = arith.constant 35 : index
      %c0_182 = arith.constant 0 : index
      %c0_183 = arith.constant 0 : index
      %242 = vector.load %arg4[%c0_180, %c35_181, %c0_182, %c0_183] : memref<1x64x4x4xf32, #tpu.memory_space<vmem>>, vector<1x1x4x4xf32>
      %243 = vector.shape_cast %242 : vector<1x1x4x4xf32> to vector<4x4xf32>
      %244 = vector.broadcast %241 : f32 to vector<4x4xf32>
      %245 = arith.mulf %244, %243 : vector<4x4xf32>
      %246 = arith.addf %240, %245 : vector<4x4xf32>
      %c36 = arith.constant 36 : index
      %247 = memref.load %arg2[%c36] : memref<192xf32, #tpu.memory_space<smem>>
      %c0_184 = arith.constant 0 : index
      %c36_185 = arith.constant 36 : index
      %c0_186 = arith.constant 0 : index
      %c0_187 = arith.constant 0 : index
      %248 = vector.load %arg4[%c0_184, %c36_185, %c0_186, %c0_187] : memref<1x64x4x4xf32, #tpu.memory_space<vmem>>, vector<1x1x4x4xf32>
      %249 = vector.shape_cast %248 : vector<1x1x4x4xf32> to vector<4x4xf32>
      %250 = vector.broadcast %247 : f32 to vector<4x4xf32>
      %251 = arith.mulf %250, %249 : vector<4x4xf32>
      %252 = arith.addf %246, %251 : vector<4x4xf32>
      %c37 = arith.constant 37 : index
      %253 = memref.load %arg2[%c37] : memref<192xf32, #tpu.memory_space<smem>>
      %c0_188 = arith.constant 0 : index
      %c37_189 = arith.constant 37 : index
      %c0_190 = arith.constant 0 : index
      %c0_191 = arith.constant 0 : index
      %254 = vector.load %arg4[%c0_188, %c37_189, %c0_190, %c0_191] : memref<1x64x4x4xf32, #tpu.memory_space<vmem>>, vector<1x1x4x4xf32>
      %255 = vector.shape_cast %254 : vector<1x1x4x4xf32> to vector<4x4xf32>
      %256 = vector.broadcast %253 : f32 to vector<4x4xf32>
      %257 = arith.mulf %256, %255 : vector<4x4xf32>
      %258 = arith.addf %252, %257 : vector<4x4xf32>
      %c38 = arith.constant 38 : index
      %259 = memref.load %arg2[%c38] : memref<192xf32, #tpu.memory_space<smem>>
      %c0_192 = arith.constant 0 : index
      %c38_193 = arith.constant 38 : index
      %c0_194 = arith.constant 0 : index
      %c0_195 = arith.constant 0 : index
      %260 = vector.load %arg4[%c0_192, %c38_193, %c0_194, %c0_195] : memref<1x64x4x4xf32, #tpu.memory_space<vmem>>, vector<1x1x4x4xf32>
      %261 = vector.shape_cast %260 : vector<1x1x4x4xf32> to vector<4x4xf32>
      %262 = vector.broadcast %259 : f32 to vector<4x4xf32>
      %263 = arith.mulf %262, %261 : vector<4x4xf32>
      %264 = arith.addf %258, %263 : vector<4x4xf32>
      %c39 = arith.constant 39 : index
      %265 = memref.load %arg2[%c39] : memref<192xf32, #tpu.memory_space<smem>>
      %c0_196 = arith.constant 0 : index
      %c39_197 = arith.constant 39 : index
      %c0_198 = arith.constant 0 : index
      %c0_199 = arith.constant 0 : index
      %266 = vector.load %arg4[%c0_196, %c39_197, %c0_198, %c0_199] : memref<1x64x4x4xf32, #tpu.memory_space<vmem>>, vector<1x1x4x4xf32>
      %267 = vector.shape_cast %266 : vector<1x1x4x4xf32> to vector<4x4xf32>
      %268 = vector.broadcast %265 : f32 to vector<4x4xf32>
      %269 = arith.mulf %268, %267 : vector<4x4xf32>
      %270 = arith.addf %264, %269 : vector<4x4xf32>
      %c40 = arith.constant 40 : index
      %271 = memref.load %arg2[%c40] : memref<192xf32, #tpu.memory_space<smem>>
      %c0_200 = arith.constant 0 : index
      %c40_201 = arith.constant 40 : index
      %c0_202 = arith.constant 0 : index
      %c0_203 = arith.constant 0 : index
      %272 = vector.load %arg4[%c0_200, %c40_201, %c0_202, %c0_203] : memref<1x64x4x4xf32, #tpu.memory_space<vmem>>, vector<1x1x4x4xf32>
      %273 = vector.shape_cast %272 : vector<1x1x4x4xf32> to vector<4x4xf32>
      %274 = vector.broadcast %271 : f32 to vector<4x4xf32>
      %275 = arith.mulf %274, %273 : vector<4x4xf32>
      %276 = arith.addf %270, %275 : vector<4x4xf32>
      %c41 = arith.constant 41 : index
      %277 = memref.load %arg2[%c41] : memref<192xf32, #tpu.memory_space<smem>>
      %c0_204 = arith.constant 0 : index
      %c41_205 = arith.constant 41 : index
      %c0_206 = arith.constant 0 : index
      %c0_207 = arith.constant 0 : index
      %278 = vector.load %arg4[%c0_204, %c41_205, %c0_206, %c0_207] : memref<1x64x4x4xf32, #tpu.memory_space<vmem>>, vector<1x1x4x4xf32>
      %279 = vector.shape_cast %278 : vector<1x1x4x4xf32> to vector<4x4xf32>
      %280 = vector.broadcast %277 : f32 to vector<4x4xf32>
      %281 = arith.mulf %280, %279 : vector<4x4xf32>
      %282 = arith.addf %276, %281 : vector<4x4xf32>
      %c42 = arith.constant 42 : index
      %283 = memref.load %arg2[%c42] : memref<192xf32, #tpu.memory_space<smem>>
      %c0_208 = arith.constant 0 : index
      %c42_209 = arith.constant 42 : index
      %c0_210 = arith.constant 0 : index
      %c0_211 = arith.constant 0 : index
      %284 = vector.load %arg4[%c0_208, %c42_209, %c0_210, %c0_211] : memref<1x64x4x4xf32, #tpu.memory_space<vmem>>, vector<1x1x4x4xf32>
      %285 = vector.shape_cast %284 : vector<1x1x4x4xf32> to vector<4x4xf32>
      %286 = vector.broadcast %283 : f32 to vector<4x4xf32>
      %287 = arith.mulf %286, %285 : vector<4x4xf32>
      %288 = arith.addf %282, %287 : vector<4x4xf32>
      %c43 = arith.constant 43 : index
      %289 = memref.load %arg2[%c43] : memref<192xf32, #tpu.memory_space<smem>>
      %c0_212 = arith.constant 0 : index
      %c43_213 = arith.constant 43 : index
      %c0_214 = arith.constant 0 : index
      %c0_215 = arith.constant 0 : index
      %290 = vector.load %arg4[%c0_212, %c43_213, %c0_214, %c0_215] : memref<1x64x4x4xf32, #tpu.memory_space<vmem>>, vector<1x1x4x4xf32>
      %291 = vector.shape_cast %290 : vector<1x1x4x4xf32> to vector<4x4xf32>
      %292 = vector.broadcast %289 : f32 to vector<4x4xf32>
      %293 = arith.mulf %292, %291 : vector<4x4xf32>
      %294 = arith.addf %288, %293 : vector<4x4xf32>
      %c44 = arith.constant 44 : index
      %295 = memref.load %arg2[%c44] : memref<192xf32, #tpu.memory_space<smem>>
      %c0_216 = arith.constant 0 : index
      %c44_217 = arith.constant 44 : index
      %c0_218 = arith.constant 0 : index
      %c0_219 = arith.constant 0 : index
      %296 = vector.load %arg4[%c0_216, %c44_217, %c0_218, %c0_219] : memref<1x64x4x4xf32, #tpu.memory_space<vmem>>, vector<1x1x4x4xf32>
      %297 = vector.shape_cast %296 : vector<1x1x4x4xf32> to vector<4x4xf32>
      %298 = vector.broadcast %295 : f32 to vector<4x4xf32>
      %299 = arith.mulf %298, %297 : vector<4x4xf32>
      %300 = arith.addf %294, %299 : vector<4x4xf32>
      %c45 = arith.constant 45 : index
      %301 = memref.load %arg2[%c45] : memref<192xf32, #tpu.memory_space<smem>>
      %c0_220 = arith.constant 0 : index
      %c45_221 = arith.constant 45 : index
      %c0_222 = arith.constant 0 : index
      %c0_223 = arith.constant 0 : index
      %302 = vector.load %arg4[%c0_220, %c45_221, %c0_222, %c0_223] : memref<1x64x4x4xf32, #tpu.memory_space<vmem>>, vector<1x1x4x4xf32>
      %303 = vector.shape_cast %302 : vector<1x1x4x4xf32> to vector<4x4xf32>
      %304 = vector.broadcast %301 : f32 to vector<4x4xf32>
      %305 = arith.mulf %304, %303 : vector<4x4xf32>
      %306 = arith.addf %300, %305 : vector<4x4xf32>
      %c46 = arith.constant 46 : index
      %307 = memref.load %arg2[%c46] : memref<192xf32, #tpu.memory_space<smem>>
      %c0_224 = arith.constant 0 : index
      %c46_225 = arith.constant 46 : index
      %c0_226 = arith.constant 0 : index
      %c0_227 = arith.constant 0 : index
      %308 = vector.load %arg4[%c0_224, %c46_225, %c0_226, %c0_227] : memref<1x64x4x4xf32, #tpu.memory_space<vmem>>, vector<1x1x4x4xf32>
      %309 = vector.shape_cast %308 : vector<1x1x4x4xf32> to vector<4x4xf32>
      %310 = vector.broadcast %307 : f32 to vector<4x4xf32>
      %311 = arith.mulf %310, %309 : vector<4x4xf32>
      %312 = arith.addf %306, %311 : vector<4x4xf32>
      %c47 = arith.constant 47 : index
      %313 = memref.load %arg2[%c47] : memref<192xf32, #tpu.memory_space<smem>>
      %c0_228 = arith.constant 0 : index
      %c47_229 = arith.constant 47 : index
      %c0_230 = arith.constant 0 : index
      %c0_231 = arith.constant 0 : index
      %314 = vector.load %arg4[%c0_228, %c47_229, %c0_230, %c0_231] : memref<1x64x4x4xf32, #tpu.memory_space<vmem>>, vector<1x1x4x4xf32>
      %315 = vector.shape_cast %314 : vector<1x1x4x4xf32> to vector<4x4xf32>
      %316 = vector.broadcast %313 : f32 to vector<4x4xf32>
      %317 = arith.mulf %316, %315 : vector<4x4xf32>
      %318 = arith.addf %312, %317 : vector<4x4xf32>
      %c48 = arith.constant 48 : index
      %319 = memref.load %arg2[%c48] : memref<192xf32, #tpu.memory_space<smem>>
      %c0_232 = arith.constant 0 : index
      %c48_233 = arith.constant 48 : index
      %c0_234 = arith.constant 0 : index
      %c0_235 = arith.constant 0 : index
      %320 = vector.load %arg4[%c0_232, %c48_233, %c0_234, %c0_235] : memref<1x64x4x4xf32, #tpu.memory_space<vmem>>, vector<1x1x4x4xf32>
      %321 = vector.shape_cast %320 : vector<1x1x4x4xf32> to vector<4x4xf32>
      %322 = vector.broadcast %319 : f32 to vector<4x4xf32>
      %323 = arith.mulf %322, %321 : vector<4x4xf32>
      %324 = arith.addf %318, %323 : vector<4x4xf32>
      %c49 = arith.constant 49 : index
      %325 = memref.load %arg2[%c49] : memref<192xf32, #tpu.memory_space<smem>>
      %c0_236 = arith.constant 0 : index
      %c49_237 = arith.constant 49 : index
      %c0_238 = arith.constant 0 : index
      %c0_239 = arith.constant 0 : index
      %326 = vector.load %arg4[%c0_236, %c49_237, %c0_238, %c0_239] : memref<1x64x4x4xf32, #tpu.memory_space<vmem>>, vector<1x1x4x4xf32>
      %327 = vector.shape_cast %326 : vector<1x1x4x4xf32> to vector<4x4xf32>
      %328 = vector.broadcast %325 : f32 to vector<4x4xf32>
      %329 = arith.mulf %328, %327 : vector<4x4xf32>
      %330 = arith.addf %324, %329 : vector<4x4xf32>
      %c50 = arith.constant 50 : index
      %331 = memref.load %arg2[%c50] : memref<192xf32, #tpu.memory_space<smem>>
      %c0_240 = arith.constant 0 : index
      %c50_241 = arith.constant 50 : index
      %c0_242 = arith.constant 0 : index
      %c0_243 = arith.constant 0 : index
      %332 = vector.load %arg4[%c0_240, %c50_241, %c0_242, %c0_243] : memref<1x64x4x4xf32, #tpu.memory_space<vmem>>, vector<1x1x4x4xf32>
      %333 = vector.shape_cast %332 : vector<1x1x4x4xf32> to vector<4x4xf32>
      %334 = vector.broadcast %331 : f32 to vector<4x4xf32>
      %335 = arith.mulf %334, %333 : vector<4x4xf32>
      %336 = arith.addf %330, %335 : vector<4x4xf32>
      %c51 = arith.constant 51 : index
      %337 = memref.load %arg2[%c51] : memref<192xf32, #tpu.memory_space<smem>>
      %c0_244 = arith.constant 0 : index
      %c51_245 = arith.constant 51 : index
      %c0_246 = arith.constant 0 : index
      %c0_247 = arith.constant 0 : index
      %338 = vector.load %arg4[%c0_244, %c51_245, %c0_246, %c0_247] : memref<1x64x4x4xf32, #tpu.memory_space<vmem>>, vector<1x1x4x4xf32>
      %339 = vector.shape_cast %338 : vector<1x1x4x4xf32> to vector<4x4xf32>
      %340 = vector.broadcast %337 : f32 to vector<4x4xf32>
      %341 = arith.mulf %340, %339 : vector<4x4xf32>
      %342 = arith.addf %336, %341 : vector<4x4xf32>
      %c52 = arith.constant 52 : index
      %343 = memref.load %arg2[%c52] : memref<192xf32, #tpu.memory_space<smem>>
      %c0_248 = arith.constant 0 : index
      %c52_249 = arith.constant 52 : index
      %c0_250 = arith.constant 0 : index
      %c0_251 = arith.constant 0 : index
      %344 = vector.load %arg4[%c0_248, %c52_249, %c0_250, %c0_251] : memref<1x64x4x4xf32, #tpu.memory_space<vmem>>, vector<1x1x4x4xf32>
      %345 = vector.shape_cast %344 : vector<1x1x4x4xf32> to vector<4x4xf32>
      %346 = vector.broadcast %343 : f32 to vector<4x4xf32>
      %347 = arith.mulf %346, %345 : vector<4x4xf32>
      %348 = arith.addf %342, %347 : vector<4x4xf32>
      %c53 = arith.constant 53 : index
      %349 = memref.load %arg2[%c53] : memref<192xf32, #tpu.memory_space<smem>>
      %c0_252 = arith.constant 0 : index
      %c53_253 = arith.constant 53 : index
      %c0_254 = arith.constant 0 : index
      %c0_255 = arith.constant 0 : index
      %350 = vector.load %arg4[%c0_252, %c53_253, %c0_254, %c0_255] : memref<1x64x4x4xf32, #tpu.memory_space<vmem>>, vector<1x1x4x4xf32>
      %351 = vector.shape_cast %350 : vector<1x1x4x4xf32> to vector<4x4xf32>
      %352 = vector.broadcast %349 : f32 to vector<4x4xf32>
      %353 = arith.mulf %352, %351 : vector<4x4xf32>
      %354 = arith.addf %348, %353 : vector<4x4xf32>
      %c54 = arith.constant 54 : index
      %355 = memref.load %arg2[%c54] : memref<192xf32, #tpu.memory_space<smem>>
      %c0_256 = arith.constant 0 : index
      %c54_257 = arith.constant 54 : index
      %c0_258 = arith.constant 0 : index
      %c0_259 = arith.constant 0 : index
      %356 = vector.load %arg4[%c0_256, %c54_257, %c0_258, %c0_259] : memref<1x64x4x4xf32, #tpu.memory_space<vmem>>, vector<1x1x4x4xf32>
      %357 = vector.shape_cast %356 : vector<1x1x4x4xf32> to vector<4x4xf32>
      %358 = vector.broadcast %355 : f32 to vector<4x4xf32>
      %359 = arith.mulf %358, %357 : vector<4x4xf32>
      %360 = arith.addf %354, %359 : vector<4x4xf32>
      %c55 = arith.constant 55 : index
      %361 = memref.load %arg2[%c55] : memref<192xf32, #tpu.memory_space<smem>>
      %c0_260 = arith.constant 0 : index
      %c55_261 = arith.constant 55 : index
      %c0_262 = arith.constant 0 : index
      %c0_263 = arith.constant 0 : index
      %362 = vector.load %arg4[%c0_260, %c55_261, %c0_262, %c0_263] : memref<1x64x4x4xf32, #tpu.memory_space<vmem>>, vector<1x1x4x4xf32>
      %363 = vector.shape_cast %362 : vector<1x1x4x4xf32> to vector<4x4xf32>
      %364 = vector.broadcast %361 : f32 to vector<4x4xf32>
      %365 = arith.mulf %364, %363 : vector<4x4xf32>
      %366 = arith.addf %360, %365 : vector<4x4xf32>
      %c56 = arith.constant 56 : index
      %367 = memref.load %arg2[%c56] : memref<192xf32, #tpu.memory_space<smem>>
      %c0_264 = arith.constant 0 : index
      %c56_265 = arith.constant 56 : index
      %c0_266 = arith.constant 0 : index
      %c0_267 = arith.constant 0 : index
      %368 = vector.load %arg4[%c0_264, %c56_265, %c0_266, %c0_267] : memref<1x64x4x4xf32, #tpu.memory_space<vmem>>, vector<1x1x4x4xf32>
      %369 = vector.shape_cast %368 : vector<1x1x4x4xf32> to vector<4x4xf32>
      %370 = vector.broadcast %367 : f32 to vector<4x4xf32>
      %371 = arith.mulf %370, %369 : vector<4x4xf32>
      %372 = arith.addf %366, %371 : vector<4x4xf32>
      %c57 = arith.constant 57 : index
      %373 = memref.load %arg2[%c57] : memref<192xf32, #tpu.memory_space<smem>>
      %c0_268 = arith.constant 0 : index
      %c57_269 = arith.constant 57 : index
      %c0_270 = arith.constant 0 : index
      %c0_271 = arith.constant 0 : index
      %374 = vector.load %arg4[%c0_268, %c57_269, %c0_270, %c0_271] : memref<1x64x4x4xf32, #tpu.memory_space<vmem>>, vector<1x1x4x4xf32>
      %375 = vector.shape_cast %374 : vector<1x1x4x4xf32> to vector<4x4xf32>
      %376 = vector.broadcast %373 : f32 to vector<4x4xf32>
      %377 = arith.mulf %376, %375 : vector<4x4xf32>
      %378 = arith.addf %372, %377 : vector<4x4xf32>
      %c58 = arith.constant 58 : index
      %379 = memref.load %arg2[%c58] : memref<192xf32, #tpu.memory_space<smem>>
      %c0_272 = arith.constant 0 : index
      %c58_273 = arith.constant 58 : index
      %c0_274 = arith.constant 0 : index
      %c0_275 = arith.constant 0 : index
      %380 = vector.load %arg4[%c0_272, %c58_273, %c0_274, %c0_275] : memref<1x64x4x4xf32, #tpu.memory_space<vmem>>, vector<1x1x4x4xf32>
      %381 = vector.shape_cast %380 : vector<1x1x4x4xf32> to vector<4x4xf32>
      %382 = vector.broadcast %379 : f32 to vector<4x4xf32>
      %383 = arith.mulf %382, %381 : vector<4x4xf32>
      %384 = arith.addf %378, %383 : vector<4x4xf32>
      %c59 = arith.constant 59 : index
      %385 = memref.load %arg2[%c59] : memref<192xf32, #tpu.memory_space<smem>>
      %c0_276 = arith.constant 0 : index
      %c59_277 = arith.constant 59 : index
      %c0_278 = arith.constant 0 : index
      %c0_279 = arith.constant 0 : index
      %386 = vector.load %arg4[%c0_276, %c59_277, %c0_278, %c0_279] : memref<1x64x4x4xf32, #tpu.memory_space<vmem>>, vector<1x1x4x4xf32>
      %387 = vector.shape_cast %386 : vector<1x1x4x4xf32> to vector<4x4xf32>
      %388 = vector.broadcast %385 : f32 to vector<4x4xf32>
      %389 = arith.mulf %388, %387 : vector<4x4xf32>
      %390 = arith.addf %384, %389 : vector<4x4xf32>
      %c60 = arith.constant 60 : index
      %391 = memref.load %arg2[%c60] : memref<192xf32, #tpu.memory_space<smem>>
      %c0_280 = arith.constant 0 : index
      %c60_281 = arith.constant 60 : index
      %c0_282 = arith.constant 0 : index
      %c0_283 = arith.constant 0 : index
      %392 = vector.load %arg4[%c0_280, %c60_281, %c0_282, %c0_283] : memref<1x64x4x4xf32, #tpu.memory_space<vmem>>, vector<1x1x4x4xf32>
      %393 = vector.shape_cast %392 : vector<1x1x4x4xf32> to vector<4x4xf32>
      %394 = vector.broadcast %391 : f32 to vector<4x4xf32>
      %395 = arith.mulf %394, %393 : vector<4x4xf32>
      %396 = arith.addf %390, %395 : vector<4x4xf32>
      %c61 = arith.constant 61 : index
      %397 = memref.load %arg2[%c61] : memref<192xf32, #tpu.memory_space<smem>>
      %c0_284 = arith.constant 0 : index
      %c61_285 = arith.constant 61 : index
      %c0_286 = arith.constant 0 : index
      %c0_287 = arith.constant 0 : index
      %398 = vector.load %arg4[%c0_284, %c61_285, %c0_286, %c0_287] : memref<1x64x4x4xf32, #tpu.memory_space<vmem>>, vector<1x1x4x4xf32>
      %399 = vector.shape_cast %398 : vector<1x1x4x4xf32> to vector<4x4xf32>
      %400 = vector.broadcast %397 : f32 to vector<4x4xf32>
      %401 = arith.mulf %400, %399 : vector<4x4xf32>
      %402 = arith.addf %396, %401 : vector<4x4xf32>
      %c62 = arith.constant 62 : index
      %403 = memref.load %arg2[%c62] : memref<192xf32, #tpu.memory_space<smem>>
      %c0_288 = arith.constant 0 : index
      %c62_289 = arith.constant 62 : index
      %c0_290 = arith.constant 0 : index
      %c0_291 = arith.constant 0 : index
      %404 = vector.load %arg4[%c0_288, %c62_289, %c0_290, %c0_291] : memref<1x64x4x4xf32, #tpu.memory_space<vmem>>, vector<1x1x4x4xf32>
      %405 = vector.shape_cast %404 : vector<1x1x4x4xf32> to vector<4x4xf32>
      %406 = vector.broadcast %403 : f32 to vector<4x4xf32>
      %407 = arith.mulf %406, %405 : vector<4x4xf32>
      %408 = arith.addf %402, %407 : vector<4x4xf32>
      %c63 = arith.constant 63 : index
      %409 = memref.load %arg2[%c63] : memref<192xf32, #tpu.memory_space<smem>>
      %c0_292 = arith.constant 0 : index
      %c63_293 = arith.constant 63 : index
      %c0_294 = arith.constant 0 : index
      %c0_295 = arith.constant 0 : index
      %410 = vector.load %arg4[%c0_292, %c63_293, %c0_294, %c0_295] : memref<1x64x4x4xf32, #tpu.memory_space<vmem>>, vector<1x1x4x4xf32>
      %411 = vector.shape_cast %410 : vector<1x1x4x4xf32> to vector<4x4xf32>
      %412 = vector.broadcast %409 : f32 to vector<4x4xf32>
      %413 = arith.mulf %412, %411 : vector<4x4xf32>
      %414 = arith.addf %408, %413 : vector<4x4xf32>
      %c0_296 = arith.constant 0 : index
      %415 = memref.load %arg3[%c0_296] : memref<3xf32, #tpu.memory_space<smem>>
      %416 = vector.broadcast %415 : f32 to vector<4x4xf32>
      %417 = arith.addf %414, %416 : vector<4x4xf32>
      %c0_297 = arith.constant 0 : index
      %c0_298 = arith.constant 0 : index
      %c0_299 = arith.constant 0 : index
      %418 = vector.load %arg8[%c0_297, %c0_298, %c0_299] : memref<3x4x4xf32, #tpu.memory_space<vmem>>, vector<1x4x4xf32>
      %419 = vector.shape_cast %418 : vector<1x4x4xf32> to vector<4x4xf32>
      %420 = vector.shape_cast %417 : vector<4x4xf32> to vector<1x4x4xf32>
      tpu.vector_store %arg8[%c0_297, %c0_298, %c0_299], %420 {strides = array<i32>} : memref<3x4x4xf32, #tpu.memory_space<vmem>>, vector<1x4x4xf32>,
      %cst_300 = arith.constant 0.000000e+00 : f32
      %421 = vector.broadcast %cst_300 : f32 to vector<4x4xf32>
      %c64 = arith.constant 64 : index
      %422 = memref.load %arg2[%c64] : memref<192xf32, #tpu.memory_space<smem>>
      %c0_301 = arith.constant 0 : index
      %c0_302 = arith.constant 0 : index
      %c0_303 = arith.constant 0 : index
      %c0_304 = arith.constant 0 : index
      %423 = vector.load %arg4[%c0_301, %c0_302, %c0_303, %c0_304] : memref<1x64x4x4xf32, #tpu.memory_space<vmem>>, vector<1x1x4x4xf32>
      %424 = vector.shape_cast %423 : vector<1x1x4x4xf32> to vector<4x4xf32>
      %425 = vector.broadcast %422 : f32 to vector<4x4xf32>
      %426 = arith.mulf %425, %424 : vector<4x4xf32>
      %427 = arith.addf %421, %426 : vector<4x4xf32>
      %c65 = arith.constant 65 : index
      %428 = memref.load %arg2[%c65] : memref<192xf32, #tpu.memory_space<smem>>
      %c0_305 = arith.constant 0 : index
      %c1_306 = arith.constant 1 : index
      %c0_307 = arith.constant 0 : index
      %c0_308 = arith.constant 0 : index
      %429 = vector.load %arg4[%c0_305, %c1_306, %c0_307, %c0_308] : memref<1x64x4x4xf32, #tpu.memory_space<vmem>>, vector<1x1x4x4xf32>
      %430 = vector.shape_cast %429 : vector<1x1x4x4xf32> to vector<4x4xf32>
      %431 = vector.broadcast %428 : f32 to vector<4x4xf32>
      %432 = arith.mulf %431, %430 : vector<4x4xf32>
      %433 = arith.addf %427, %432 : vector<4x4xf32>
      %c66 = arith.constant 66 : index
      %434 = memref.load %arg2[%c66] : memref<192xf32, #tpu.memory_space<smem>>
      %c0_309 = arith.constant 0 : index
      %c2_310 = arith.constant 2 : index
      %c0_311 = arith.constant 0 : index
      %c0_312 = arith.constant 0 : index
      %435 = vector.load %arg4[%c0_309, %c2_310, %c0_311, %c0_312] : memref<1x64x4x4xf32, #tpu.memory_space<vmem>>, vector<1x1x4x4xf32>
      %436 = vector.shape_cast %435 : vector<1x1x4x4xf32> to vector<4x4xf32>
      %437 = vector.broadcast %434 : f32 to vector<4x4xf32>
      %438 = arith.mulf %437, %436 : vector<4x4xf32>
      %439 = arith.addf %433, %438 : vector<4x4xf32>
      %c67 = arith.constant 67 : index
      %440 = memref.load %arg2[%c67] : memref<192xf32, #tpu.memory_space<smem>>
      %c0_313 = arith.constant 0 : index
      %c3_314 = arith.constant 3 : index
      %c0_315 = arith.constant 0 : index
      %c0_316 = arith.constant 0 : index
      %441 = vector.load %arg4[%c0_313, %c3_314, %c0_315, %c0_316] : memref<1x64x4x4xf32, #tpu.memory_space<vmem>>, vector<1x1x4x4xf32>
      %442 = vector.shape_cast %441 : vector<1x1x4x4xf32> to vector<4x4xf32>
      %443 = vector.broadcast %440 : f32 to vector<4x4xf32>
      %444 = arith.mulf %443, %442 : vector<4x4xf32>
      %445 = arith.addf %439, %444 : vector<4x4xf32>
      %c68 = arith.constant 68 : index
      %446 = memref.load %arg2[%c68] : memref<192xf32, #tpu.memory_space<smem>>
      %c0_317 = arith.constant 0 : index
      %c4_318 = arith.constant 4 : index
      %c0_319 = arith.constant 0 : index
      %c0_320 = arith.constant 0 : index
      %447 = vector.load %arg4[%c0_317, %c4_318, %c0_319, %c0_320] : memref<1x64x4x4xf32, #tpu.memory_space<vmem>>, vector<1x1x4x4xf32>
      %448 = vector.shape_cast %447 : vector<1x1x4x4xf32> to vector<4x4xf32>
      %449 = vector.broadcast %446 : f32 to vector<4x4xf32>
      %450 = arith.mulf %449, %448 : vector<4x4xf32>
      %451 = arith.addf %445, %450 : vector<4x4xf32>
      %c69 = arith.constant 69 : index
      %452 = memref.load %arg2[%c69] : memref<192xf32, #tpu.memory_space<smem>>
      %c0_321 = arith.constant 0 : index
      %c5_322 = arith.constant 5 : index
      %c0_323 = arith.constant 0 : index
      %c0_324 = arith.constant 0 : index
      %453 = vector.load %arg4[%c0_321, %c5_322, %c0_323, %c0_324] : memref<1x64x4x4xf32, #tpu.memory_space<vmem>>, vector<1x1x4x4xf32>
      %454 = vector.shape_cast %453 : vector<1x1x4x4xf32> to vector<4x4xf32>
      %455 = vector.broadcast %452 : f32 to vector<4x4xf32>
      %456 = arith.mulf %455, %454 : vector<4x4xf32>
      %457 = arith.addf %451, %456 : vector<4x4xf32>
      %c70 = arith.constant 70 : index
      %458 = memref.load %arg2[%c70] : memref<192xf32, #tpu.memory_space<smem>>
      %c0_325 = arith.constant 0 : index
      %c6_326 = arith.constant 6 : index
      %c0_327 = arith.constant 0 : index
      %c0_328 = arith.constant 0 : index
      %459 = vector.load %arg4[%c0_325, %c6_326, %c0_327, %c0_328] : memref<1x64x4x4xf32, #tpu.memory_space<vmem>>, vector<1x1x4x4xf32>
      %460 = vector.shape_cast %459 : vector<1x1x4x4xf32> to vector<4x4xf32>
      %461 = vector.broadcast %458 : f32 to vector<4x4xf32>
      %462 = arith.mulf %461, %460 : vector<4x4xf32>
      %463 = arith.addf %457, %462 : vector<4x4xf32>
      %c71 = arith.constant 71 : index
      %464 = memref.load %arg2[%c71] : memref<192xf32, #tpu.memory_space<smem>>
      %c0_329 = arith.constant 0 : index
      %c7_330 = arith.constant 7 : index
      %c0_331 = arith.constant 0 : index
      %c0_332 = arith.constant 0 : index
      %465 = vector.load %arg4[%c0_329, %c7_330, %c0_331, %c0_332] : memref<1x64x4x4xf32, #tpu.memory_space<vmem>>, vector<1x1x4x4xf32>
      %466 = vector.shape_cast %465 : vector<1x1x4x4xf32> to vector<4x4xf32>
      %467 = vector.broadcast %464 : f32 to vector<4x4xf32>
      %468 = arith.mulf %467, %466 : vector<4x4xf32>
      %469 = arith.addf %463, %468 : vector<4x4xf32>
      %c72 = arith.constant 72 : index
      %470 = memref.load %arg2[%c72] : memref<192xf32, #tpu.memory_space<smem>>
      %c0_333 = arith.constant 0 : index
      %c8_334 = arith.constant 8 : index
      %c0_335 = arith.constant 0 : index
      %c0_336 = arith.constant 0 : index
      %471 = vector.load %arg4[%c0_333, %c8_334, %c0_335, %c0_336] : memref<1x64x4x4xf32, #tpu.memory_space<vmem>>, vector<1x1x4x4xf32>
      %472 = vector.shape_cast %471 : vector<1x1x4x4xf32> to vector<4x4xf32>
      %473 = vector.broadcast %470 : f32 to vector<4x4xf32>
      %474 = arith.mulf %473, %472 : vector<4x4xf32>
      %475 = arith.addf %469, %474 : vector<4x4xf32>
      %c73 = arith.constant 73 : index
      %476 = memref.load %arg2[%c73] : memref<192xf32, #tpu.memory_space<smem>>
      %c0_337 = arith.constant 0 : index
      %c9_338 = arith.constant 9 : index
      %c0_339 = arith.constant 0 : index
      %c0_340 = arith.constant 0 : index
      %477 = vector.load %arg4[%c0_337, %c9_338, %c0_339, %c0_340] : memref<1x64x4x4xf32, #tpu.memory_space<vmem>>, vector<1x1x4x4xf32>
      %478 = vector.shape_cast %477 : vector<1x1x4x4xf32> to vector<4x4xf32>
      %479 = vector.broadcast %476 : f32 to vector<4x4xf32>
      %480 = arith.mulf %479, %478 : vector<4x4xf32>
      %481 = arith.addf %475, %480 : vector<4x4xf32>
      %c74 = arith.constant 74 : index
      %482 = memref.load %arg2[%c74] : memref<192xf32, #tpu.memory_space<smem>>
      %c0_341 = arith.constant 0 : index
      %c10_342 = arith.constant 10 : index
      %c0_343 = arith.constant 0 : index
      %c0_344 = arith.constant 0 : index
      %483 = vector.load %arg4[%c0_341, %c10_342, %c0_343, %c0_344] : memref<1x64x4x4xf32, #tpu.memory_space<vmem>>, vector<1x1x4x4xf32>
      %484 = vector.shape_cast %483 : vector<1x1x4x4xf32> to vector<4x4xf32>
      %485 = vector.broadcast %482 : f32 to vector<4x4xf32>
      %486 = arith.mulf %485, %484 : vector<4x4xf32>
      %487 = arith.addf %481, %486 : vector<4x4xf32>
      %c75 = arith.constant 75 : index
      %488 = memref.load %arg2[%c75] : memref<192xf32, #tpu.memory_space<smem>>
      %c0_345 = arith.constant 0 : index
      %c11_346 = arith.constant 11 : index
      %c0_347 = arith.constant 0 : index
      %c0_348 = arith.constant 0 : index
      %489 = vector.load %arg4[%c0_345, %c11_346, %c0_347, %c0_348] : memref<1x64x4x4xf32, #tpu.memory_space<vmem>>, vector<1x1x4x4xf32>
      %490 = vector.shape_cast %489 : vector<1x1x4x4xf32> to vector<4x4xf32>
      %491 = vector.broadcast %488 : f32 to vector<4x4xf32>
      %492 = arith.mulf %491, %490 : vector<4x4xf32>
      %493 = arith.addf %487, %492 : vector<4x4xf32>
      %c76 = arith.constant 76 : index
      %494 = memref.load %arg2[%c76] : memref<192xf32, #tpu.memory_space<smem>>
      %c0_349 = arith.constant 0 : index
      %c12_350 = arith.constant 12 : index
      %c0_351 = arith.constant 0 : index
      %c0_352 = arith.constant 0 : index
      %495 = vector.load %arg4[%c0_349, %c12_350, %c0_351, %c0_352] : memref<1x64x4x4xf32, #tpu.memory_space<vmem>>, vector<1x1x4x4xf32>
      %496 = vector.shape_cast %495 : vector<1x1x4x4xf32> to vector<4x4xf32>
      %497 = vector.broadcast %494 : f32 to vector<4x4xf32>
      %498 = arith.mulf %497, %496 : vector<4x4xf32>
      %499 = arith.addf %493, %498 : vector<4x4xf32>
      %c77 = arith.constant 77 : index
      %500 = memref.load %arg2[%c77] : memref<192xf32, #tpu.memory_space<smem>>
      %c0_353 = arith.constant 0 : index
      %c13_354 = arith.constant 13 : index
      %c0_355 = arith.constant 0 : index
      %c0_356 = arith.constant 0 : index
      %501 = vector.load %arg4[%c0_353, %c13_354, %c0_355, %c0_356] : memref<1x64x4x4xf32, #tpu.memory_space<vmem>>, vector<1x1x4x4xf32>
      %502 = vector.shape_cast %501 : vector<1x1x4x4xf32> to vector<4x4xf32>
      %503 = vector.broadcast %500 : f32 to vector<4x4xf32>
      %504 = arith.mulf %503, %502 : vector<4x4xf32>
      %505 = arith.addf %499, %504 : vector<4x4xf32>
      %c78 = arith.constant 78 : index
      %506 = memref.load %arg2[%c78] : memref<192xf32, #tpu.memory_space<smem>>
      %c0_357 = arith.constant 0 : index
      %c14_358 = arith.constant 14 : index
      %c0_359 = arith.constant 0 : index
      %c0_360 = arith.constant 0 : index
      %507 = vector.load %arg4[%c0_357, %c14_358, %c0_359, %c0_360] : memref<1x64x4x4xf32, #tpu.memory_space<vmem>>, vector<1x1x4x4xf32>
      %508 = vector.shape_cast %507 : vector<1x1x4x4xf32> to vector<4x4xf32>
      %509 = vector.broadcast %506 : f32 to vector<4x4xf32>
      %510 = arith.mulf %509, %508 : vector<4x4xf32>
      %511 = arith.addf %505, %510 : vector<4x4xf32>
      %c79 = arith.constant 79 : index
      %512 = memref.load %arg2[%c79] : memref<192xf32, #tpu.memory_space<smem>>
      %c0_361 = arith.constant 0 : index
      %c15_362 = arith.constant 15 : index
      %c0_363 = arith.constant 0 : index
      %c0_364 = arith.constant 0 : index
      %513 = vector.load %arg4[%c0_361, %c15_362, %c0_363, %c0_364] : memref<1x64x4x4xf32, #tpu.memory_space<vmem>>, vector<1x1x4x4xf32>
      %514 = vector.shape_cast %513 : vector<1x1x4x4xf32> to vector<4x4xf32>
      %515 = vector.broadcast %512 : f32 to vector<4x4xf32>
      %516 = arith.mulf %515, %514 : vector<4x4xf32>
      %517 = arith.addf %511, %516 : vector<4x4xf32>
      %c80 = arith.constant 80 : index
      %518 = memref.load %arg2[%c80] : memref<192xf32, #tpu.memory_space<smem>>
      %c0_365 = arith.constant 0 : index
      %c16_366 = arith.constant 16 : index
      %c0_367 = arith.constant 0 : index
      %c0_368 = arith.constant 0 : index
      %519 = vector.load %arg4[%c0_365, %c16_366, %c0_367, %c0_368] : memref<1x64x4x4xf32, #tpu.memory_space<vmem>>, vector<1x1x4x4xf32>
      %520 = vector.shape_cast %519 : vector<1x1x4x4xf32> to vector<4x4xf32>
      %521 = vector.broadcast %518 : f32 to vector<4x4xf32>
      %522 = arith.mulf %521, %520 : vector<4x4xf32>
      %523 = arith.addf %517, %522 : vector<4x4xf32>
      %c81 = arith.constant 81 : index
      %524 = memref.load %arg2[%c81] : memref<192xf32, #tpu.memory_space<smem>>
      %c0_369 = arith.constant 0 : index
      %c17_370 = arith.constant 17 : index
      %c0_371 = arith.constant 0 : index
      %c0_372 = arith.constant 0 : index
      %525 = vector.load %arg4[%c0_369, %c17_370, %c0_371, %c0_372] : memref<1x64x4x4xf32, #tpu.memory_space<vmem>>, vector<1x1x4x4xf32>
      %526 = vector.shape_cast %525 : vector<1x1x4x4xf32> to vector<4x4xf32>
      %527 = vector.broadcast %524 : f32 to vector<4x4xf32>
      %528 = arith.mulf %527, %526 : vector<4x4xf32>
      %529 = arith.addf %523, %528 : vector<4x4xf32>
      %c82 = arith.constant 82 : index
      %530 = memref.load %arg2[%c82] : memref<192xf32, #tpu.memory_space<smem>>
      %c0_373 = arith.constant 0 : index
      %c18_374 = arith.constant 18 : index
      %c0_375 = arith.constant 0 : index
      %c0_376 = arith.constant 0 : index
      %531 = vector.load %arg4[%c0_373, %c18_374, %c0_375, %c0_376] : memref<1x64x4x4xf32, #tpu.memory_space<vmem>>, vector<1x1x4x4xf32>
      %532 = vector.shape_cast %531 : vector<1x1x4x4xf32> to vector<4x4xf32>
      %533 = vector.broadcast %530 : f32 to vector<4x4xf32>
      %534 = arith.mulf %533, %532 : vector<4x4xf32>
      %535 = arith.addf %529, %534 : vector<4x4xf32>
      %c83 = arith.constant 83 : index
      %536 = memref.load %arg2[%c83] : memref<192xf32, #tpu.memory_space<smem>>
      %c0_377 = arith.constant 0 : index
      %c19_378 = arith.constant 19 : index
      %c0_379 = arith.constant 0 : index
      %c0_380 = arith.constant 0 : index
      %537 = vector.load %arg4[%c0_377, %c19_378, %c0_379, %c0_380] : memref<1x64x4x4xf32, #tpu.memory_space<vmem>>, vector<1x1x4x4xf32>
      %538 = vector.shape_cast %537 : vector<1x1x4x4xf32> to vector<4x4xf32>
      %539 = vector.broadcast %536 : f32 to vector<4x4xf32>
      %540 = arith.mulf %539, %538 : vector<4x4xf32>
      %541 = arith.addf %535, %540 : vector<4x4xf32>
      %c84 = arith.constant 84 : index
      %542 = memref.load %arg2[%c84] : memref<192xf32, #tpu.memory_space<smem>>
      %c0_381 = arith.constant 0 : index
      %c20_382 = arith.constant 20 : index
      %c0_383 = arith.constant 0 : index
      %c0_384 = arith.constant 0 : index
      %543 = vector.load %arg4[%c0_381, %c20_382, %c0_383, %c0_384] : memref<1x64x4x4xf32, #tpu.memory_space<vmem>>, vector<1x1x4x4xf32>
      %544 = vector.shape_cast %543 : vector<1x1x4x4xf32> to vector<4x4xf32>
      %545 = vector.broadcast %542 : f32 to vector<4x4xf32>
      %546 = arith.mulf %545, %544 : vector<4x4xf32>
      %547 = arith.addf %541, %546 : vector<4x4xf32>
      %c85 = arith.constant 85 : index
      %548 = memref.load %arg2[%c85] : memref<192xf32, #tpu.memory_space<smem>>
      %c0_385 = arith.constant 0 : index
      %c21_386 = arith.constant 21 : index
      %c0_387 = arith.constant 0 : index
      %c0_388 = arith.constant 0 : index
      %549 = vector.load %arg4[%c0_385, %c21_386, %c0_387, %c0_388] : memref<1x64x4x4xf32, #tpu.memory_space<vmem>>, vector<1x1x4x4xf32>
      %550 = vector.shape_cast %549 : vector<1x1x4x4xf32> to vector<4x4xf32>
      %551 = vector.broadcast %548 : f32 to vector<4x4xf32>
      %552 = arith.mulf %551, %550 : vector<4x4xf32>
      %553 = arith.addf %547, %552 : vector<4x4xf32>
      %c86 = arith.constant 86 : index
      %554 = memref.load %arg2[%c86] : memref<192xf32, #tpu.memory_space<smem>>
      %c0_389 = arith.constant 0 : index
      %c22_390 = arith.constant 22 : index
      %c0_391 = arith.constant 0 : index
      %c0_392 = arith.constant 0 : index
      %555 = vector.load %arg4[%c0_389, %c22_390, %c0_391, %c0_392] : memref<1x64x4x4xf32, #tpu.memory_space<vmem>>, vector<1x1x4x4xf32>
      %556 = vector.shape_cast %555 : vector<1x1x4x4xf32> to vector<4x4xf32>
      %557 = vector.broadcast %554 : f32 to vector<4x4xf32>
      %558 = arith.mulf %557, %556 : vector<4x4xf32>
      %559 = arith.addf %553, %558 : vector<4x4xf32>
      %c87 = arith.constant 87 : index
      %560 = memref.load %arg2[%c87] : memref<192xf32, #tpu.memory_space<smem>>
      %c0_393 = arith.constant 0 : index
      %c23_394 = arith.constant 23 : index
      %c0_395 = arith.constant 0 : index
      %c0_396 = arith.constant 0 : index
      %561 = vector.load %arg4[%c0_393, %c23_394, %c0_395, %c0_396] : memref<1x64x4x4xf32, #tpu.memory_space<vmem>>, vector<1x1x4x4xf32>
      %562 = vector.shape_cast %561 : vector<1x1x4x4xf32> to vector<4x4xf32>
      %563 = vector.broadcast %560 : f32 to vector<4x4xf32>
      %564 = arith.mulf %563, %562 : vector<4x4xf32>
      %565 = arith.addf %559, %564 : vector<4x4xf32>
      %c88 = arith.constant 88 : index
      %566 = memref.load %arg2[%c88] : memref<192xf32, #tpu.memory_space<smem>>
      %c0_397 = arith.constant 0 : index
      %c24_398 = arith.constant 24 : index
      %c0_399 = arith.constant 0 : index
      %c0_400 = arith.constant 0 : index
      %567 = vector.load %arg4[%c0_397, %c24_398, %c0_399, %c0_400] : memref<1x64x4x4xf32, #tpu.memory_space<vmem>>, vector<1x1x4x4xf32>
      %568 = vector.shape_cast %567 : vector<1x1x4x4xf32> to vector<4x4xf32>
      %569 = vector.broadcast %566 : f32 to vector<4x4xf32>
      %570 = arith.mulf %569, %568 : vector<4x4xf32>
      %571 = arith.addf %565, %570 : vector<4x4xf32>
      %c89 = arith.constant 89 : index
      %572 = memref.load %arg2[%c89] : memref<192xf32, #tpu.memory_space<smem>>
      %c0_401 = arith.constant 0 : index
      %c25_402 = arith.constant 25 : index
      %c0_403 = arith.constant 0 : index
      %c0_404 = arith.constant 0 : index
      %573 = vector.load %arg4[%c0_401, %c25_402, %c0_403, %c0_404] : memref<1x64x4x4xf32, #tpu.memory_space<vmem>>, vector<1x1x4x4xf32>
      %574 = vector.shape_cast %573 : vector<1x1x4x4xf32> to vector<4x4xf32>
      %575 = vector.broadcast %572 : f32 to vector<4x4xf32>
      %576 = arith.mulf %575, %574 : vector<4x4xf32>
      %577 = arith.addf %571, %576 : vector<4x4xf32>
      %c90 = arith.constant 90 : index
      %578 = memref.load %arg2[%c90] : memref<192xf32, #tpu.memory_space<smem>>
      %c0_405 = arith.constant 0 : index
      %c26_406 = arith.constant 26 : index
      %c0_407 = arith.constant 0 : index
      %c0_408 = arith.constant 0 : index
      %579 = vector.load %arg4[%c0_405, %c26_406, %c0_407, %c0_408] : memref<1x64x4x4xf32, #tpu.memory_space<vmem>>, vector<1x1x4x4xf32>
      %580 = vector.shape_cast %579 : vector<1x1x4x4xf32> to vector<4x4xf32>
      %581 = vector.broadcast %578 : f32 to vector<4x4xf32>
      %582 = arith.mulf %581, %580 : vector<4x4xf32>
      %583 = arith.addf %577, %582 : vector<4x4xf32>
      %c91 = arith.constant 91 : index
      %584 = memref.load %arg2[%c91] : memref<192xf32, #tpu.memory_space<smem>>
      %c0_409 = arith.constant 0 : index
      %c27_410 = arith.constant 27 : index
      %c0_411 = arith.constant 0 : index
      %c0_412 = arith.constant 0 : index
      %585 = vector.load %arg4[%c0_409, %c27_410, %c0_411, %c0_412] : memref<1x64x4x4xf32, #tpu.memory_space<vmem>>, vector<1x1x4x4xf32>
      %586 = vector.shape_cast %585 : vector<1x1x4x4xf32> to vector<4x4xf32>
      %587 = vector.broadcast %584 : f32 to vector<4x4xf32>
      %588 = arith.mulf %587, %586 : vector<4x4xf32>
      %589 = arith.addf %583, %588 : vector<4x4xf32>
      %c92 = arith.constant 92 : index
      %590 = memref.load %arg2[%c92] : memref<192xf32, #tpu.memory_space<smem>>
      %c0_413 = arith.constant 0 : index
      %c28_414 = arith.constant 28 : index
      %c0_415 = arith.constant 0 : index
      %c0_416 = arith.constant 0 : index
      %591 = vector.load %arg4[%c0_413, %c28_414, %c0_415, %c0_416] : memref<1x64x4x4xf32, #tpu.memory_space<vmem>>, vector<1x1x4x4xf32>
      %592 = vector.shape_cast %591 : vector<1x1x4x4xf32> to vector<4x4xf32>
      %593 = vector.broadcast %590 : f32 to vector<4x4xf32>
      %594 = arith.mulf %593, %592 : vector<4x4xf32>
      %595 = arith.addf %589, %594 : vector<4x4xf32>
      %c93 = arith.constant 93 : index
      %596 = memref.load %arg2[%c93] : memref<192xf32, #tpu.memory_space<smem>>
      %c0_417 = arith.constant 0 : index
      %c29_418 = arith.constant 29 : index
      %c0_419 = arith.constant 0 : index
      %c0_420 = arith.constant 0 : index
      %597 = vector.load %arg4[%c0_417, %c29_418, %c0_419, %c0_420] : memref<1x64x4x4xf32, #tpu.memory_space<vmem>>, vector<1x1x4x4xf32>
      %598 = vector.shape_cast %597 : vector<1x1x4x4xf32> to vector<4x4xf32>
      %599 = vector.broadcast %596 : f32 to vector<4x4xf32>
      %600 = arith.mulf %599, %598 : vector<4x4xf32>
      %601 = arith.addf %595, %600 : vector<4x4xf32>
      %c94 = arith.constant 94 : index
      %602 = memref.load %arg2[%c94] : memref<192xf32, #tpu.memory_space<smem>>
      %c0_421 = arith.constant 0 : index
      %c30_422 = arith.constant 30 : index
      %c0_423 = arith.constant 0 : index
      %c0_424 = arith.constant 0 : index
      %603 = vector.load %arg4[%c0_421, %c30_422, %c0_423, %c0_424] : memref<1x64x4x4xf32, #tpu.memory_space<vmem>>, vector<1x1x4x4xf32>
      %604 = vector.shape_cast %603 : vector<1x1x4x4xf32> to vector<4x4xf32>
      %605 = vector.broadcast %602 : f32 to vector<4x4xf32>
      %606 = arith.mulf %605, %604 : vector<4x4xf32>
      %607 = arith.addf %601, %606 : vector<4x4xf32>
      %c95 = arith.constant 95 : index
      %608 = memref.load %arg2[%c95] : memref<192xf32, #tpu.memory_space<smem>>
      %c0_425 = arith.constant 0 : index
      %c31_426 = arith.constant 31 : index
      %c0_427 = arith.constant 0 : index
      %c0_428 = arith.constant 0 : index
      %609 = vector.load %arg4[%c0_425, %c31_426, %c0_427, %c0_428] : memref<1x64x4x4xf32, #tpu.memory_space<vmem>>, vector<1x1x4x4xf32>
      %610 = vector.shape_cast %609 : vector<1x1x4x4xf32> to vector<4x4xf32>
      %611 = vector.broadcast %608 : f32 to vector<4x4xf32>
      %612 = arith.mulf %611, %610 : vector<4x4xf32>
      %613 = arith.addf %607, %612 : vector<4x4xf32>
      %c96 = arith.constant 96 : index
      %614 = memref.load %arg2[%c96] : memref<192xf32, #tpu.memory_space<smem>>
      %c0_429 = arith.constant 0 : index
      %c32_430 = arith.constant 32 : index
      %c0_431 = arith.constant 0 : index
      %c0_432 = arith.constant 0 : index
      %615 = vector.load %arg4[%c0_429, %c32_430, %c0_431, %c0_432] : memref<1x64x4x4xf32, #tpu.memory_space<vmem>>, vector<1x1x4x4xf32>
      %616 = vector.shape_cast %615 : vector<1x1x4x4xf32> to vector<4x4xf32>
      %617 = vector.broadcast %614 : f32 to vector<4x4xf32>
      %618 = arith.mulf %617, %616 : vector<4x4xf32>
      %619 = arith.addf %613, %618 : vector<4x4xf32>
      %c97 = arith.constant 97 : index
      %620 = memref.load %arg2[%c97] : memref<192xf32, #tpu.memory_space<smem>>
      %c0_433 = arith.constant 0 : index
      %c33_434 = arith.constant 33 : index
      %c0_435 = arith.constant 0 : index
      %c0_436 = arith.constant 0 : index
      %621 = vector.load %arg4[%c0_433, %c33_434, %c0_435, %c0_436] : memref<1x64x4x4xf32, #tpu.memory_space<vmem>>, vector<1x1x4x4xf32>
      %622 = vector.shape_cast %621 : vector<1x1x4x4xf32> to vector<4x4xf32>
      %623 = vector.broadcast %620 : f32 to vector<4x4xf32>
      %624 = arith.mulf %623, %622 : vector<4x4xf32>
      %625 = arith.addf %619, %624 : vector<4x4xf32>
      %c98 = arith.constant 98 : index
      %626 = memref.load %arg2[%c98] : memref<192xf32, #tpu.memory_space<smem>>
      %c0_437 = arith.constant 0 : index
      %c34_438 = arith.constant 34 : index
      %c0_439 = arith.constant 0 : index
      %c0_440 = arith.constant 0 : index
      %627 = vector.load %arg4[%c0_437, %c34_438, %c0_439, %c0_440] : memref<1x64x4x4xf32, #tpu.memory_space<vmem>>, vector<1x1x4x4xf32>
      %628 = vector.shape_cast %627 : vector<1x1x4x4xf32> to vector<4x4xf32>
      %629 = vector.broadcast %626 : f32 to vector<4x4xf32>
      %630 = arith.mulf %629, %628 : vector<4x4xf32>
      %631 = arith.addf %625, %630 : vector<4x4xf32>
      %c99 = arith.constant 99 : index
      %632 = memref.load %arg2[%c99] : memref<192xf32, #tpu.memory_space<smem>>
      %c0_441 = arith.constant 0 : index
      %c35_442 = arith.constant 35 : index
      %c0_443 = arith.constant 0 : index
      %c0_444 = arith.constant 0 : index
      %633 = vector.load %arg4[%c0_441, %c35_442, %c0_443, %c0_444] : memref<1x64x4x4xf32, #tpu.memory_space<vmem>>, vector<1x1x4x4xf32>
      %634 = vector.shape_cast %633 : vector<1x1x4x4xf32> to vector<4x4xf32>
      %635 = vector.broadcast %632 : f32 to vector<4x4xf32>
      %636 = arith.mulf %635, %634 : vector<4x4xf32>
      %637 = arith.addf %631, %636 : vector<4x4xf32>
      %c100 = arith.constant 100 : index
      %638 = memref.load %arg2[%c100] : memref<192xf32, #tpu.memory_space<smem>>
      %c0_445 = arith.constant 0 : index
      %c36_446 = arith.constant 36 : index
      %c0_447 = arith.constant 0 : index
      %c0_448 = arith.constant 0 : index
      %639 = vector.load %arg4[%c0_445, %c36_446, %c0_447, %c0_448] : memref<1x64x4x4xf32, #tpu.memory_space<vmem>>, vector<1x1x4x4xf32>
      %640 = vector.shape_cast %639 : vector<1x1x4x4xf32> to vector<4x4xf32>
      %641 = vector.broadcast %638 : f32 to vector<4x4xf32>
      %642 = arith.mulf %641, %640 : vector<4x4xf32>
      %643 = arith.addf %637, %642 : vector<4x4xf32>
      %c101 = arith.constant 101 : index
      %644 = memref.load %arg2[%c101] : memref<192xf32, #tpu.memory_space<smem>>
      %c0_449 = arith.constant 0 : index
      %c37_450 = arith.constant 37 : index
      %c0_451 = arith.constant 0 : index
      %c0_452 = arith.constant 0 : index
      %645 = vector.load %arg4[%c0_449, %c37_450, %c0_451, %c0_452] : memref<1x64x4x4xf32, #tpu.memory_space<vmem>>, vector<1x1x4x4xf32>
      %646 = vector.shape_cast %645 : vector<1x1x4x4xf32> to vector<4x4xf32>
      %647 = vector.broadcast %644 : f32 to vector<4x4xf32>
      %648 = arith.mulf %647, %646 : vector<4x4xf32>
      %649 = arith.addf %643, %648 : vector<4x4xf32>
      %c102 = arith.constant 102 : index
      %650 = memref.load %arg2[%c102] : memref<192xf32, #tpu.memory_space<smem>>
      %c0_453 = arith.constant 0 : index
      %c38_454 = arith.constant 38 : index
      %c0_455 = arith.constant 0 : index
      %c0_456 = arith.constant 0 : index
      %651 = vector.load %arg4[%c0_453, %c38_454, %c0_455, %c0_456] : memref<1x64x4x4xf32, #tpu.memory_space<vmem>>, vector<1x1x4x4xf32>
      %652 = vector.shape_cast %651 : vector<1x1x4x4xf32> to vector<4x4xf32>
      %653 = vector.broadcast %650 : f32 to vector<4x4xf32>
      %654 = arith.mulf %653, %652 : vector<4x4xf32>
      %655 = arith.addf %649, %654 : vector<4x4xf32>
      %c103 = arith.constant 103 : index
      %656 = memref.load %arg2[%c103] : memref<192xf32, #tpu.memory_space<smem>>
      %c0_457 = arith.constant 0 : index
      %c39_458 = arith.constant 39 : index
      %c0_459 = arith.constant 0 : index
      %c0_460 = arith.constant 0 : index
      %657 = vector.load %arg4[%c0_457, %c39_458, %c0_459, %c0_460] : memref<1x64x4x4xf32, #tpu.memory_space<vmem>>, vector<1x1x4x4xf32>
      %658 = vector.shape_cast %657 : vector<1x1x4x4xf32> to vector<4x4xf32>
      %659 = vector.broadcast %656 : f32 to vector<4x4xf32>
      %660 = arith.mulf %659, %658 : vector<4x4xf32>
      %661 = arith.addf %655, %660 : vector<4x4xf32>
      %c104 = arith.constant 104 : index
      %662 = memref.load %arg2[%c104] : memref<192xf32, #tpu.memory_space<smem>>
      %c0_461 = arith.constant 0 : index
      %c40_462 = arith.constant 40 : index
      %c0_463 = arith.constant 0 : index
      %c0_464 = arith.constant 0 : index
      %663 = vector.load %arg4[%c0_461, %c40_462, %c0_463, %c0_464] : memref<1x64x4x4xf32, #tpu.memory_space<vmem>>, vector<1x1x4x4xf32>
      %664 = vector.shape_cast %663 : vector<1x1x4x4xf32> to vector<4x4xf32>
      %665 = vector.broadcast %662 : f32 to vector<4x4xf32>
      %666 = arith.mulf %665, %664 : vector<4x4xf32>
      %667 = arith.addf %661, %666 : vector<4x4xf32>
      %c105 = arith.constant 105 : index
      %668 = memref.load %arg2[%c105] : memref<192xf32, #tpu.memory_space<smem>>
      %c0_465 = arith.constant 0 : index
      %c41_466 = arith.constant 41 : index
      %c0_467 = arith.constant 0 : index
      %c0_468 = arith.constant 0 : index
      %669 = vector.load %arg4[%c0_465, %c41_466, %c0_467, %c0_468] : memref<1x64x4x4xf32, #tpu.memory_space<vmem>>, vector<1x1x4x4xf32>
      %670 = vector.shape_cast %669 : vector<1x1x4x4xf32> to vector<4x4xf32>
      %671 = vector.broadcast %668 : f32 to vector<4x4xf32>
      %672 = arith.mulf %671, %670 : vector<4x4xf32>
      %673 = arith.addf %667, %672 : vector<4x4xf32>
      %c106 = arith.constant 106 : index
      %674 = memref.load %arg2[%c106] : memref<192xf32, #tpu.memory_space<smem>>
      %c0_469 = arith.constant 0 : index
      %c42_470 = arith.constant 42 : index
      %c0_471 = arith.constant 0 : index
      %c0_472 = arith.constant 0 : index
      %675 = vector.load %arg4[%c0_469, %c42_470, %c0_471, %c0_472] : memref<1x64x4x4xf32, #tpu.memory_space<vmem>>, vector<1x1x4x4xf32>
      %676 = vector.shape_cast %675 : vector<1x1x4x4xf32> to vector<4x4xf32>
      %677 = vector.broadcast %674 : f32 to vector<4x4xf32>
      %678 = arith.mulf %677, %676 : vector<4x4xf32>
      %679 = arith.addf %673, %678 : vector<4x4xf32>
      %c107 = arith.constant 107 : index
      %680 = memref.load %arg2[%c107] : memref<192xf32, #tpu.memory_space<smem>>
      %c0_473 = arith.constant 0 : index
      %c43_474 = arith.constant 43 : index
      %c0_475 = arith.constant 0 : index
      %c0_476 = arith.constant 0 : index
      %681 = vector.load %arg4[%c0_473, %c43_474, %c0_475, %c0_476] : memref<1x64x4x4xf32, #tpu.memory_space<vmem>>, vector<1x1x4x4xf32>
      %682 = vector.shape_cast %681 : vector<1x1x4x4xf32> to vector<4x4xf32>
      %683 = vector.broadcast %680 : f32 to vector<4x4xf32>
      %684 = arith.mulf %683, %682 : vector<4x4xf32>
      %685 = arith.addf %679, %684 : vector<4x4xf32>
      %c108 = arith.constant 108 : index
      %686 = memref.load %arg2[%c108] : memref<192xf32, #tpu.memory_space<smem>>
      %c0_477 = arith.constant 0 : index
      %c44_478 = arith.constant 44 : index
      %c0_479 = arith.constant 0 : index
      %c0_480 = arith.constant 0 : index
      %687 = vector.load %arg4[%c0_477, %c44_478, %c0_479, %c0_480] : memref<1x64x4x4xf32, #tpu.memory_space<vmem>>, vector<1x1x4x4xf32>
      %688 = vector.shape_cast %687 : vector<1x1x4x4xf32> to vector<4x4xf32>
      %689 = vector.broadcast %686 : f32 to vector<4x4xf32>
      %690 = arith.mulf %689, %688 : vector<4x4xf32>
      %691 = arith.addf %685, %690 : vector<4x4xf32>
      %c109 = arith.constant 109 : index
      %692 = memref.load %arg2[%c109] : memref<192xf32, #tpu.memory_space<smem>>
      %c0_481 = arith.constant 0 : index
      %c45_482 = arith.constant 45 : index
      %c0_483 = arith.constant 0 : index
      %c0_484 = arith.constant 0 : index
      %693 = vector.load %arg4[%c0_481, %c45_482, %c0_483, %c0_484] : memref<1x64x4x4xf32, #tpu.memory_space<vmem>>, vector<1x1x4x4xf32>
      %694 = vector.shape_cast %693 : vector<1x1x4x4xf32> to vector<4x4xf32>
      %695 = vector.broadcast %692 : f32 to vector<4x4xf32>
      %696 = arith.mulf %695, %694 : vector<4x4xf32>
      %697 = arith.addf %691, %696 : vector<4x4xf32>
      %c110 = arith.constant 110 : index
      %698 = memref.load %arg2[%c110] : memref<192xf32, #tpu.memory_space<smem>>
      %c0_485 = arith.constant 0 : index
      %c46_486 = arith.constant 46 : index
      %c0_487 = arith.constant 0 : index
      %c0_488 = arith.constant 0 : index
      %699 = vector.load %arg4[%c0_485, %c46_486, %c0_487, %c0_488] : memref<1x64x4x4xf32, #tpu.memory_space<vmem>>, vector<1x1x4x4xf32>
      %700 = vector.shape_cast %699 : vector<1x1x4x4xf32> to vector<4x4xf32>
      %701 = vector.broadcast %698 : f32 to vector<4x4xf32>
      %702 = arith.mulf %701, %700 : vector<4x4xf32>
      %703 = arith.addf %697, %702 : vector<4x4xf32>
      %c111 = arith.constant 111 : index
      %704 = memref.load %arg2[%c111] : memref<192xf32, #tpu.memory_space<smem>>
      %c0_489 = arith.constant 0 : index
      %c47_490 = arith.constant 47 : index
      %c0_491 = arith.constant 0 : index
      %c0_492 = arith.constant 0 : index
      %705 = vector.load %arg4[%c0_489, %c47_490, %c0_491, %c0_492] : memref<1x64x4x4xf32, #tpu.memory_space<vmem>>, vector<1x1x4x4xf32>
      %706 = vector.shape_cast %705 : vector<1x1x4x4xf32> to vector<4x4xf32>
      %707 = vector.broadcast %704 : f32 to vector<4x4xf32>
      %708 = arith.mulf %707, %706 : vector<4x4xf32>
      %709 = arith.addf %703, %708 : vector<4x4xf32>
      %c112 = arith.constant 112 : index
      %710 = memref.load %arg2[%c112] : memref<192xf32, #tpu.memory_space<smem>>
      %c0_493 = arith.constant 0 : index
      %c48_494 = arith.constant 48 : index
      %c0_495 = arith.constant 0 : index
      %c0_496 = arith.constant 0 : index
      %711 = vector.load %arg4[%c0_493, %c48_494, %c0_495, %c0_496] : memref<1x64x4x4xf32, #tpu.memory_space<vmem>>, vector<1x1x4x4xf32>
      %712 = vector.shape_cast %711 : vector<1x1x4x4xf32> to vector<4x4xf32>
      %713 = vector.broadcast %710 : f32 to vector<4x4xf32>
      %714 = arith.mulf %713, %712 : vector<4x4xf32>
      %715 = arith.addf %709, %714 : vector<4x4xf32>
      %c113 = arith.constant 113 : index
      %716 = memref.load %arg2[%c113] : memref<192xf32, #tpu.memory_space<smem>>
      %c0_497 = arith.constant 0 : index
      %c49_498 = arith.constant 49 : index
      %c0_499 = arith.constant 0 : index
      %c0_500 = arith.constant 0 : index
      %717 = vector.load %arg4[%c0_497, %c49_498, %c0_499, %c0_500] : memref<1x64x4x4xf32, #tpu.memory_space<vmem>>, vector<1x1x4x4xf32>
      %718 = vector.shape_cast %717 : vector<1x1x4x4xf32> to vector<4x4xf32>
      %719 = vector.broadcast %716 : f32 to vector<4x4xf32>
      %720 = arith.mulf %719, %718 : vector<4x4xf32>
      %721 = arith.addf %715, %720 : vector<4x4xf32>
      %c114 = arith.constant 114 : index
      %722 = memref.load %arg2[%c114] : memref<192xf32, #tpu.memory_space<smem>>
      %c0_501 = arith.constant 0 : index
      %c50_502 = arith.constant 50 : index
      %c0_503 = arith.constant 0 : index
      %c0_504 = arith.constant 0 : index
      %723 = vector.load %arg4[%c0_501, %c50_502, %c0_503, %c0_504] : memref<1x64x4x4xf32, #tpu.memory_space<vmem>>, vector<1x1x4x4xf32>
      %724 = vector.shape_cast %723 : vector<1x1x4x4xf32> to vector<4x4xf32>
      %725 = vector.broadcast %722 : f32 to vector<4x4xf32>
      %726 = arith.mulf %725, %724 : vector<4x4xf32>
      %727 = arith.addf %721, %726 : vector<4x4xf32>
      %c115 = arith.constant 115 : index
      %728 = memref.load %arg2[%c115] : memref<192xf32, #tpu.memory_space<smem>>
      %c0_505 = arith.constant 0 : index
      %c51_506 = arith.constant 51 : index
      %c0_507 = arith.constant 0 : index
      %c0_508 = arith.constant 0 : index
      %729 = vector.load %arg4[%c0_505, %c51_506, %c0_507, %c0_508] : memref<1x64x4x4xf32, #tpu.memory_space<vmem>>, vector<1x1x4x4xf32>
      %730 = vector.shape_cast %729 : vector<1x1x4x4xf32> to vector<4x4xf32>
      %731 = vector.broadcast %728 : f32 to vector<4x4xf32>
      %732 = arith.mulf %731, %730 : vector<4x4xf32>
      %733 = arith.addf %727, %732 : vector<4x4xf32>
      %c116 = arith.constant 116 : index
      %734 = memref.load %arg2[%c116] : memref<192xf32, #tpu.memory_space<smem>>
      %c0_509 = arith.constant 0 : index
      %c52_510 = arith.constant 52 : index
      %c0_511 = arith.constant 0 : index
      %c0_512 = arith.constant 0 : index
      %735 = vector.load %arg4[%c0_509, %c52_510, %c0_511, %c0_512] : memref<1x64x4x4xf32, #tpu.memory_space<vmem>>, vector<1x1x4x4xf32>
      %736 = vector.shape_cast %735 : vector<1x1x4x4xf32> to vector<4x4xf32>
      %737 = vector.broadcast %734 : f32 to vector<4x4xf32>
      %738 = arith.mulf %737, %736 : vector<4x4xf32>
      %739 = arith.addf %733, %738 : vector<4x4xf32>
      %c117 = arith.constant 117 : index
      %740 = memref.load %arg2[%c117] : memref<192xf32, #tpu.memory_space<smem>>
      %c0_513 = arith.constant 0 : index
      %c53_514 = arith.constant 53 : index
      %c0_515 = arith.constant 0 : index
      %c0_516 = arith.constant 0 : index
      %741 = vector.load %arg4[%c0_513, %c53_514, %c0_515, %c0_516] : memref<1x64x4x4xf32, #tpu.memory_space<vmem>>, vector<1x1x4x4xf32>
      %742 = vector.shape_cast %741 : vector<1x1x4x4xf32> to vector<4x4xf32>
      %743 = vector.broadcast %740 : f32 to vector<4x4xf32>
      %744 = arith.mulf %743, %742 : vector<4x4xf32>
      %745 = arith.addf %739, %744 : vector<4x4xf32>
      %c118 = arith.constant 118 : index
      %746 = memref.load %arg2[%c118] : memref<192xf32, #tpu.memory_space<smem>>
      %c0_517 = arith.constant 0 : index
      %c54_518 = arith.constant 54 : index
      %c0_519 = arith.constant 0 : index
      %c0_520 = arith.constant 0 : index
      %747 = vector.load %arg4[%c0_517, %c54_518, %c0_519, %c0_520] : memref<1x64x4x4xf32, #tpu.memory_space<vmem>>, vector<1x1x4x4xf32>
      %748 = vector.shape_cast %747 : vector<1x1x4x4xf32> to vector<4x4xf32>
      %749 = vector.broadcast %746 : f32 to vector<4x4xf32>
      %750 = arith.mulf %749, %748 : vector<4x4xf32>
      %751 = arith.addf %745, %750 : vector<4x4xf32>
      %c119 = arith.constant 119 : index
      %752 = memref.load %arg2[%c119] : memref<192xf32, #tpu.memory_space<smem>>
      %c0_521 = arith.constant 0 : index
      %c55_522 = arith.constant 55 : index
      %c0_523 = arith.constant 0 : index
      %c0_524 = arith.constant 0 : index
      %753 = vector.load %arg4[%c0_521, %c55_522, %c0_523, %c0_524] : memref<1x64x4x4xf32, #tpu.memory_space<vmem>>, vector<1x1x4x4xf32>
      %754 = vector.shape_cast %753 : vector<1x1x4x4xf32> to vector<4x4xf32>
      %755 = vector.broadcast %752 : f32 to vector<4x4xf32>
      %756 = arith.mulf %755, %754 : vector<4x4xf32>
      %757 = arith.addf %751, %756 : vector<4x4xf32>
      %c120 = arith.constant 120 : index
      %758 = memref.load %arg2[%c120] : memref<192xf32, #tpu.memory_space<smem>>
      %c0_525 = arith.constant 0 : index
      %c56_526 = arith.constant 56 : index
      %c0_527 = arith.constant 0 : index
      %c0_528 = arith.constant 0 : index
      %759 = vector.load %arg4[%c0_525, %c56_526, %c0_527, %c0_528] : memref<1x64x4x4xf32, #tpu.memory_space<vmem>>, vector<1x1x4x4xf32>
      %760 = vector.shape_cast %759 : vector<1x1x4x4xf32> to vector<4x4xf32>
      %761 = vector.broadcast %758 : f32 to vector<4x4xf32>
      %762 = arith.mulf %761, %760 : vector<4x4xf32>
      %763 = arith.addf %757, %762 : vector<4x4xf32>
      %c121 = arith.constant 121 : index
      %764 = memref.load %arg2[%c121] : memref<192xf32, #tpu.memory_space<smem>>
      %c0_529 = arith.constant 0 : index
      %c57_530 = arith.constant 57 : index
      %c0_531 = arith.constant 0 : index
      %c0_532 = arith.constant 0 : index
      %765 = vector.load %arg4[%c0_529, %c57_530, %c0_531, %c0_532] : memref<1x64x4x4xf32, #tpu.memory_space<vmem>>, vector<1x1x4x4xf32>
      %766 = vector.shape_cast %765 : vector<1x1x4x4xf32> to vector<4x4xf32>
      %767 = vector.broadcast %764 : f32 to vector<4x4xf32>
      %768 = arith.mulf %767, %766 : vector<4x4xf32>
      %769 = arith.addf %763, %768 : vector<4x4xf32>
      %c122 = arith.constant 122 : index
      %770 = memref.load %arg2[%c122] : memref<192xf32, #tpu.memory_space<smem>>
      %c0_533 = arith.constant 0 : index
      %c58_534 = arith.constant 58 : index
      %c0_535 = arith.constant 0 : index
      %c0_536 = arith.constant 0 : index
      %771 = vector.load %arg4[%c0_533, %c58_534, %c0_535, %c0_536] : memref<1x64x4x4xf32, #tpu.memory_space<vmem>>, vector<1x1x4x4xf32>
      %772 = vector.shape_cast %771 : vector<1x1x4x4xf32> to vector<4x4xf32>
      %773 = vector.broadcast %770 : f32 to vector<4x4xf32>
      %774 = arith.mulf %773, %772 : vector<4x4xf32>
      %775 = arith.addf %769, %774 : vector<4x4xf32>
      %c123 = arith.constant 123 : index
      %776 = memref.load %arg2[%c123] : memref<192xf32, #tpu.memory_space<smem>>
      %c0_537 = arith.constant 0 : index
      %c59_538 = arith.constant 59 : index
      %c0_539 = arith.constant 0 : index
      %c0_540 = arith.constant 0 : index
      %777 = vector.load %arg4[%c0_537, %c59_538, %c0_539, %c0_540] : memref<1x64x4x4xf32, #tpu.memory_space<vmem>>, vector<1x1x4x4xf32>
      %778 = vector.shape_cast %777 : vector<1x1x4x4xf32> to vector<4x4xf32>
      %779 = vector.broadcast %776 : f32 to vector<4x4xf32>
      %780 = arith.mulf %779, %778 : vector<4x4xf32>
      %781 = arith.addf %775, %780 : vector<4x4xf32>
      %c124 = arith.constant 124 : index
      %782 = memref.load %arg2[%c124] : memref<192xf32, #tpu.memory_space<smem>>
      %c0_541 = arith.constant 0 : index
      %c60_542 = arith.constant 60 : index
      %c0_543 = arith.constant 0 : index
      %c0_544 = arith.constant 0 : index
      %783 = vector.load %arg4[%c0_541, %c60_542, %c0_543, %c0_544] : memref<1x64x4x4xf32, #tpu.memory_space<vmem>>, vector<1x1x4x4xf32>
      %784 = vector.shape_cast %783 : vector<1x1x4x4xf32> to vector<4x4xf32>
      %785 = vector.broadcast %782 : f32 to vector<4x4xf32>
      %786 = arith.mulf %785, %784 : vector<4x4xf32>
      %787 = arith.addf %781, %786 : vector<4x4xf32>
      %c125 = arith.constant 125 : index
      %788 = memref.load %arg2[%c125] : memref<192xf32, #tpu.memory_space<smem>>
      %c0_545 = arith.constant 0 : index
      %c61_546 = arith.constant 61 : index
      %c0_547 = arith.constant 0 : index
      %c0_548 = arith.constant 0 : index
      %789 = vector.load %arg4[%c0_545, %c61_546, %c0_547, %c0_548] : memref<1x64x4x4xf32, #tpu.memory_space<vmem>>, vector<1x1x4x4xf32>
      %790 = vector.shape_cast %789 : vector<1x1x4x4xf32> to vector<4x4xf32>
      %791 = vector.broadcast %788 : f32 to vector<4x4xf32>
      %792 = arith.mulf %791, %790 : vector<4x4xf32>
      %793 = arith.addf %787, %792 : vector<4x4xf32>
      %c126 = arith.constant 126 : index
      %794 = memref.load %arg2[%c126] : memref<192xf32, #tpu.memory_space<smem>>
      %c0_549 = arith.constant 0 : index
      %c62_550 = arith.constant 62 : index
      %c0_551 = arith.constant 0 : index
      %c0_552 = arith.constant 0 : index
      %795 = vector.load %arg4[%c0_549, %c62_550, %c0_551, %c0_552] : memref<1x64x4x4xf32, #tpu.memory_space<vmem>>, vector<1x1x4x4xf32>
      %796 = vector.shape_cast %795 : vector<1x1x4x4xf32> to vector<4x4xf32>
      %797 = vector.broadcast %794 : f32 to vector<4x4xf32>
      %798 = arith.mulf %797, %796 : vector<4x4xf32>
      %799 = arith.addf %793, %798 : vector<4x4xf32>
      %c127 = arith.constant 127 : index
      %800 = memref.load %arg2[%c127] : memref<192xf32, #tpu.memory_space<smem>>
      %c0_553 = arith.constant 0 : index
      %c63_554 = arith.constant 63 : index
      %c0_555 = arith.constant 0 : index
      %c0_556 = arith.constant 0 : index
      %801 = vector.load %arg4[%c0_553, %c63_554, %c0_555, %c0_556] : memref<1x64x4x4xf32, #tpu.memory_space<vmem>>, vector<1x1x4x4xf32>
      %802 = vector.shape_cast %801 : vector<1x1x4x4xf32> to vector<4x4xf32>
      %803 = vector.broadcast %800 : f32 to vector<4x4xf32>
      %804 = arith.mulf %803, %802 : vector<4x4xf32>
      %805 = arith.addf %799, %804 : vector<4x4xf32>
      %c1_557 = arith.constant 1 : index
      %806 = memref.load %arg3[%c1_557] : memref<3xf32, #tpu.memory_space<smem>>
      %807 = vector.broadcast %806 : f32 to vector<4x4xf32>
      %808 = arith.addf %805, %807 : vector<4x4xf32>
      %c1_558 = arith.constant 1 : index
      %c0_559 = arith.constant 0 : index
      %c0_560 = arith.constant 0 : index
      %809 = vector.load %arg8[%c1_558, %c0_559, %c0_560] : memref<3x4x4xf32, #tpu.memory_space<vmem>>, vector<1x4x4xf32>
      %810 = vector.shape_cast %809 : vector<1x4x4xf32> to vector<4x4xf32>
      %811 = vector.shape_cast %808 : vector<4x4xf32> to vector<1x4x4xf32>
      tpu.vector_store %arg8[%c1_558, %c0_559, %c0_560], %811 {strides = array<i32>} : memref<3x4x4xf32, #tpu.memory_space<vmem>>, vector<1x4x4xf32>,
      %cst_561 = arith.constant 0.000000e+00 : f32
      %812 = vector.broadcast %cst_561 : f32 to vector<4x4xf32>
      %c128 = arith.constant 128 : index
      %813 = memref.load %arg2[%c128] : memref<192xf32, #tpu.memory_space<smem>>
      %c0_562 = arith.constant 0 : index
      %c0_563 = arith.constant 0 : index
      %c0_564 = arith.constant 0 : index
      %c0_565 = arith.constant 0 : index
      %814 = vector.load %arg4[%c0_562, %c0_563, %c0_564, %c0_565] : memref<1x64x4x4xf32, #tpu.memory_space<vmem>>, vector<1x1x4x4xf32>
      %815 = vector.shape_cast %814 : vector<1x1x4x4xf32> to vector<4x4xf32>
      %816 = vector.broadcast %813 : f32 to vector<4x4xf32>
      %817 = arith.mulf %816, %815 : vector<4x4xf32>
      %818 = arith.addf %812, %817 : vector<4x4xf32>
      %c129 = arith.constant 129 : index
      %819 = memref.load %arg2[%c129] : memref<192xf32, #tpu.memory_space<smem>>
      %c0_566 = arith.constant 0 : index
      %c1_567 = arith.constant 1 : index
      %c0_568 = arith.constant 0 : index
      %c0_569 = arith.constant 0 : index
      %820 = vector.load %arg4[%c0_566, %c1_567, %c0_568, %c0_569] : memref<1x64x4x4xf32, #tpu.memory_space<vmem>>, vector<1x1x4x4xf32>
      %821 = vector.shape_cast %820 : vector<1x1x4x4xf32> to vector<4x4xf32>
      %822 = vector.broadcast %819 : f32 to vector<4x4xf32>
      %823 = arith.mulf %822, %821 : vector<4x4xf32>
      %824 = arith.addf %818, %823 : vector<4x4xf32>
      %c130 = arith.constant 130 : index
      %825 = memref.load %arg2[%c130] : memref<192xf32, #tpu.memory_space<smem>>
      %c0_570 = arith.constant 0 : index
      %c2_571 = arith.constant 2 : index
      %c0_572 = arith.constant 0 : index
      %c0_573 = arith.constant 0 : index
      %826 = vector.load %arg4[%c0_570, %c2_571, %c0_572, %c0_573] : memref<1x64x4x4xf32, #tpu.memory_space<vmem>>, vector<1x1x4x4xf32>
      %827 = vector.shape_cast %826 : vector<1x1x4x4xf32> to vector<4x4xf32>
      %828 = vector.broadcast %825 : f32 to vector<4x4xf32>
      %829 = arith.mulf %828, %827 : vector<4x4xf32>
      %830 = arith.addf %824, %829 : vector<4x4xf32>
      %c131 = arith.constant 131 : index
      %831 = memref.load %arg2[%c131] : memref<192xf32, #tpu.memory_space<smem>>
      %c0_574 = arith.constant 0 : index
      %c3_575 = arith.constant 3 : index
      %c0_576 = arith.constant 0 : index
      %c0_577 = arith.constant 0 : index
      %832 = vector.load %arg4[%c0_574, %c3_575, %c0_576, %c0_577] : memref<1x64x4x4xf32, #tpu.memory_space<vmem>>, vector<1x1x4x4xf32>
      %833 = vector.shape_cast %832 : vector<1x1x4x4xf32> to vector<4x4xf32>
      %834 = vector.broadcast %831 : f32 to vector<4x4xf32>
      %835 = arith.mulf %834, %833 : vector<4x4xf32>
      %836 = arith.addf %830, %835 : vector<4x4xf32>
      %c132 = arith.constant 132 : index
      %837 = memref.load %arg2[%c132] : memref<192xf32, #tpu.memory_space<smem>>
      %c0_578 = arith.constant 0 : index
      %c4_579 = arith.constant 4 : index
      %c0_580 = arith.constant 0 : index
      %c0_581 = arith.constant 0 : index
      %838 = vector.load %arg4[%c0_578, %c4_579, %c0_580, %c0_581] : memref<1x64x4x4xf32, #tpu.memory_space<vmem>>, vector<1x1x4x4xf32>
      %839 = vector.shape_cast %838 : vector<1x1x4x4xf32> to vector<4x4xf32>
      %840 = vector.broadcast %837 : f32 to vector<4x4xf32>
      %841 = arith.mulf %840, %839 : vector<4x4xf32>
      %842 = arith.addf %836, %841 : vector<4x4xf32>
      %c133 = arith.constant 133 : index
      %843 = memref.load %arg2[%c133] : memref<192xf32, #tpu.memory_space<smem>>
      %c0_582 = arith.constant 0 : index
      %c5_583 = arith.constant 5 : index
      %c0_584 = arith.constant 0 : index
      %c0_585 = arith.constant 0 : index
      %844 = vector.load %arg4[%c0_582, %c5_583, %c0_584, %c0_585] : memref<1x64x4x4xf32, #tpu.memory_space<vmem>>, vector<1x1x4x4xf32>
      %845 = vector.shape_cast %844 : vector<1x1x4x4xf32> to vector<4x4xf32>
      %846 = vector.broadcast %843 : f32 to vector<4x4xf32>
      %847 = arith.mulf %846, %845 : vector<4x4xf32>
      %848 = arith.addf %842, %847 : vector<4x4xf32>
      %c134 = arith.constant 134 : index
      %849 = memref.load %arg2[%c134] : memref<192xf32, #tpu.memory_space<smem>>
      %c0_586 = arith.constant 0 : index
      %c6_587 = arith.constant 6 : index
      %c0_588 = arith.constant 0 : index
      %c0_589 = arith.constant 0 : index
      %850 = vector.load %arg4[%c0_586, %c6_587, %c0_588, %c0_589] : memref<1x64x4x4xf32, #tpu.memory_space<vmem>>, vector<1x1x4x4xf32>
      %851 = vector.shape_cast %850 : vector<1x1x4x4xf32> to vector<4x4xf32>
      %852 = vector.broadcast %849 : f32 to vector<4x4xf32>
      %853 = arith.mulf %852, %851 : vector<4x4xf32>
      %854 = arith.addf %848, %853 : vector<4x4xf32>
      %c135 = arith.constant 135 : index
      %855 = memref.load %arg2[%c135] : memref<192xf32, #tpu.memory_space<smem>>
      %c0_590 = arith.constant 0 : index
      %c7_591 = arith.constant 7 : index
      %c0_592 = arith.constant 0 : index
      %c0_593 = arith.constant 0 : index
      %856 = vector.load %arg4[%c0_590, %c7_591, %c0_592, %c0_593] : memref<1x64x4x4xf32, #tpu.memory_space<vmem>>, vector<1x1x4x4xf32>
      %857 = vector.shape_cast %856 : vector<1x1x4x4xf32> to vector<4x4xf32>
      %858 = vector.broadcast %855 : f32 to vector<4x4xf32>
      %859 = arith.mulf %858, %857 : vector<4x4xf32>
      %860 = arith.addf %854, %859 : vector<4x4xf32>
      %c136 = arith.constant 136 : index
      %861 = memref.load %arg2[%c136] : memref<192xf32, #tpu.memory_space<smem>>
      %c0_594 = arith.constant 0 : index
      %c8_595 = arith.constant 8 : index
      %c0_596 = arith.constant 0 : index
      %c0_597 = arith.constant 0 : index
      %862 = vector.load %arg4[%c0_594, %c8_595, %c0_596, %c0_597] : memref<1x64x4x4xf32, #tpu.memory_space<vmem>>, vector<1x1x4x4xf32>
      %863 = vector.shape_cast %862 : vector<1x1x4x4xf32> to vector<4x4xf32>
      %864 = vector.broadcast %861 : f32 to vector<4x4xf32>
      %865 = arith.mulf %864, %863 : vector<4x4xf32>
      %866 = arith.addf %860, %865 : vector<4x4xf32>
      %c137 = arith.constant 137 : index
      %867 = memref.load %arg2[%c137] : memref<192xf32, #tpu.memory_space<smem>>
      %c0_598 = arith.constant 0 : index
      %c9_599 = arith.constant 9 : index
      %c0_600 = arith.constant 0 : index
      %c0_601 = arith.constant 0 : index
      %868 = vector.load %arg4[%c0_598, %c9_599, %c0_600, %c0_601] : memref<1x64x4x4xf32, #tpu.memory_space<vmem>>, vector<1x1x4x4xf32>
      %869 = vector.shape_cast %868 : vector<1x1x4x4xf32> to vector<4x4xf32>
      %870 = vector.broadcast %867 : f32 to vector<4x4xf32>
      %871 = arith.mulf %870, %869 : vector<4x4xf32>
      %872 = arith.addf %866, %871 : vector<4x4xf32>
      %c138 = arith.constant 138 : index
      %873 = memref.load %arg2[%c138] : memref<192xf32, #tpu.memory_space<smem>>
      %c0_602 = arith.constant 0 : index
      %c10_603 = arith.constant 10 : index
      %c0_604 = arith.constant 0 : index
      %c0_605 = arith.constant 0 : index
      %874 = vector.load %arg4[%c0_602, %c10_603, %c0_604, %c0_605] : memref<1x64x4x4xf32, #tpu.memory_space<vmem>>, vector<1x1x4x4xf32>
      %875 = vector.shape_cast %874 : vector<1x1x4x4xf32> to vector<4x4xf32>
      %876 = vector.broadcast %873 : f32 to vector<4x4xf32>
      %877 = arith.mulf %876, %875 : vector<4x4xf32>
      %878 = arith.addf %872, %877 : vector<4x4xf32>
      %c139 = arith.constant 139 : index
      %879 = memref.load %arg2[%c139] : memref<192xf32, #tpu.memory_space<smem>>
      %c0_606 = arith.constant 0 : index
      %c11_607 = arith.constant 11 : index
      %c0_608 = arith.constant 0 : index
      %c0_609 = arith.constant 0 : index
      %880 = vector.load %arg4[%c0_606, %c11_607, %c0_608, %c0_609] : memref<1x64x4x4xf32, #tpu.memory_space<vmem>>, vector<1x1x4x4xf32>
      %881 = vector.shape_cast %880 : vector<1x1x4x4xf32> to vector<4x4xf32>
      %882 = vector.broadcast %879 : f32 to vector<4x4xf32>
      %883 = arith.mulf %882, %881 : vector<4x4xf32>
      %884 = arith.addf %878, %883 : vector<4x4xf32>
      %c140 = arith.constant 140 : index
      %885 = memref.load %arg2[%c140] : memref<192xf32, #tpu.memory_space<smem>>
      %c0_610 = arith.constant 0 : index
      %c12_611 = arith.constant 12 : index
      %c0_612 = arith.constant 0 : index
      %c0_613 = arith.constant 0 : index
      %886 = vector.load %arg4[%c0_610, %c12_611, %c0_612, %c0_613] : memref<1x64x4x4xf32, #tpu.memory_space<vmem>>, vector<1x1x4x4xf32>
      %887 = vector.shape_cast %886 : vector<1x1x4x4xf32> to vector<4x4xf32>
      %888 = vector.broadcast %885 : f32 to vector<4x4xf32>
      %889 = arith.mulf %888, %887 : vector<4x4xf32>
      %890 = arith.addf %884, %889 : vector<4x4xf32>
      %c141 = arith.constant 141 : index
      %891 = memref.load %arg2[%c141] : memref<192xf32, #tpu.memory_space<smem>>
      %c0_614 = arith.constant 0 : index
      %c13_615 = arith.constant 13 : index
      %c0_616 = arith.constant 0 : index
      %c0_617 = arith.constant 0 : index
      %892 = vector.load %arg4[%c0_614, %c13_615, %c0_616, %c0_617] : memref<1x64x4x4xf32, #tpu.memory_space<vmem>>, vector<1x1x4x4xf32>
      %893 = vector.shape_cast %892 : vector<1x1x4x4xf32> to vector<4x4xf32>
      %894 = vector.broadcast %891 : f32 to vector<4x4xf32>
      %895 = arith.mulf %894, %893 : vector<4x4xf32>
      %896 = arith.addf %890, %895 : vector<4x4xf32>
      %c142 = arith.constant 142 : index
      %897 = memref.load %arg2[%c142] : memref<192xf32, #tpu.memory_space<smem>>
      %c0_618 = arith.constant 0 : index
      %c14_619 = arith.constant 14 : index
      %c0_620 = arith.constant 0 : index
      %c0_621 = arith.constant 0 : index
      %898 = vector.load %arg4[%c0_618, %c14_619, %c0_620, %c0_621] : memref<1x64x4x4xf32, #tpu.memory_space<vmem>>, vector<1x1x4x4xf32>
      %899 = vector.shape_cast %898 : vector<1x1x4x4xf32> to vector<4x4xf32>
      %900 = vector.broadcast %897 : f32 to vector<4x4xf32>
      %901 = arith.mulf %900, %899 : vector<4x4xf32>
      %902 = arith.addf %896, %901 : vector<4x4xf32>
      %c143 = arith.constant 143 : index
      %903 = memref.load %arg2[%c143] : memref<192xf32, #tpu.memory_space<smem>>
      %c0_622 = arith.constant 0 : index
      %c15_623 = arith.constant 15 : index
      %c0_624 = arith.constant 0 : index
      %c0_625 = arith.constant 0 : index
      %904 = vector.load %arg4[%c0_622, %c15_623, %c0_624, %c0_625] : memref<1x64x4x4xf32, #tpu.memory_space<vmem>>, vector<1x1x4x4xf32>
      %905 = vector.shape_cast %904 : vector<1x1x4x4xf32> to vector<4x4xf32>
      %906 = vector.broadcast %903 : f32 to vector<4x4xf32>
      %907 = arith.mulf %906, %905 : vector<4x4xf32>
      %908 = arith.addf %902, %907 : vector<4x4xf32>
      %c144 = arith.constant 144 : index
      %909 = memref.load %arg2[%c144] : memref<192xf32, #tpu.memory_space<smem>>
      %c0_626 = arith.constant 0 : index
      %c16_627 = arith.constant 16 : index
      %c0_628 = arith.constant 0 : index
      %c0_629 = arith.constant 0 : index
      %910 = vector.load %arg4[%c0_626, %c16_627, %c0_628, %c0_629] : memref<1x64x4x4xf32, #tpu.memory_space<vmem>>, vector<1x1x4x4xf32>
      %911 = vector.shape_cast %910 : vector<1x1x4x4xf32> to vector<4x4xf32>
      %912 = vector.broadcast %909 : f32 to vector<4x4xf32>
      %913 = arith.mulf %912, %911 : vector<4x4xf32>
      %914 = arith.addf %908, %913 : vector<4x4xf32>
      %c145 = arith.constant 145 : index
      %915 = memref.load %arg2[%c145] : memref<192xf32, #tpu.memory_space<smem>>
      %c0_630 = arith.constant 0 : index
      %c17_631 = arith.constant 17 : index
      %c0_632 = arith.constant 0 : index
      %c0_633 = arith.constant 0 : index
      %916 = vector.load %arg4[%c0_630, %c17_631, %c0_632, %c0_633] : memref<1x64x4x4xf32, #tpu.memory_space<vmem>>, vector<1x1x4x4xf32>
      %917 = vector.shape_cast %916 : vector<1x1x4x4xf32> to vector<4x4xf32>
      %918 = vector.broadcast %915 : f32 to vector<4x4xf32>
      %919 = arith.mulf %918, %917 : vector<4x4xf32>
      %920 = arith.addf %914, %919 : vector<4x4xf32>
      %c146 = arith.constant 146 : index
      %921 = memref.load %arg2[%c146] : memref<192xf32, #tpu.memory_space<smem>>
      %c0_634 = arith.constant 0 : index
      %c18_635 = arith.constant 18 : index
      %c0_636 = arith.constant 0 : index
      %c0_637 = arith.constant 0 : index
      %922 = vector.load %arg4[%c0_634, %c18_635, %c0_636, %c0_637] : memref<1x64x4x4xf32, #tpu.memory_space<vmem>>, vector<1x1x4x4xf32>
      %923 = vector.shape_cast %922 : vector<1x1x4x4xf32> to vector<4x4xf32>
      %924 = vector.broadcast %921 : f32 to vector<4x4xf32>
      %925 = arith.mulf %924, %923 : vector<4x4xf32>
      %926 = arith.addf %920, %925 : vector<4x4xf32>
      %c147 = arith.constant 147 : index
      %927 = memref.load %arg2[%c147] : memref<192xf32, #tpu.memory_space<smem>>
      %c0_638 = arith.constant 0 : index
      %c19_639 = arith.constant 19 : index
      %c0_640 = arith.constant 0 : index
      %c0_641 = arith.constant 0 : index
      %928 = vector.load %arg4[%c0_638, %c19_639, %c0_640, %c0_641] : memref<1x64x4x4xf32, #tpu.memory_space<vmem>>, vector<1x1x4x4xf32>
      %929 = vector.shape_cast %928 : vector<1x1x4x4xf32> to vector<4x4xf32>
      %930 = vector.broadcast %927 : f32 to vector<4x4xf32>
      %931 = arith.mulf %930, %929 : vector<4x4xf32>
      %932 = arith.addf %926, %931 : vector<4x4xf32>
      %c148 = arith.constant 148 : index
      %933 = memref.load %arg2[%c148] : memref<192xf32, #tpu.memory_space<smem>>
      %c0_642 = arith.constant 0 : index
      %c20_643 = arith.constant 20 : index
      %c0_644 = arith.constant 0 : index
      %c0_645 = arith.constant 0 : index
      %934 = vector.load %arg4[%c0_642, %c20_643, %c0_644, %c0_645] : memref<1x64x4x4xf32, #tpu.memory_space<vmem>>, vector<1x1x4x4xf32>
      %935 = vector.shape_cast %934 : vector<1x1x4x4xf32> to vector<4x4xf32>
      %936 = vector.broadcast %933 : f32 to vector<4x4xf32>
      %937 = arith.mulf %936, %935 : vector<4x4xf32>
      %938 = arith.addf %932, %937 : vector<4x4xf32>
      %c149 = arith.constant 149 : index
      %939 = memref.load %arg2[%c149] : memref<192xf32, #tpu.memory_space<smem>>
      %c0_646 = arith.constant 0 : index
      %c21_647 = arith.constant 21 : index
      %c0_648 = arith.constant 0 : index
      %c0_649 = arith.constant 0 : index
      %940 = vector.load %arg4[%c0_646, %c21_647, %c0_648, %c0_649] : memref<1x64x4x4xf32, #tpu.memory_space<vmem>>, vector<1x1x4x4xf32>
      %941 = vector.shape_cast %940 : vector<1x1x4x4xf32> to vector<4x4xf32>
      %942 = vector.broadcast %939 : f32 to vector<4x4xf32>
      %943 = arith.mulf %942, %941 : vector<4x4xf32>
      %944 = arith.addf %938, %943 : vector<4x4xf32>
      %c150 = arith.constant 150 : index
      %945 = memref.load %arg2[%c150] : memref<192xf32, #tpu.memory_space<smem>>
      %c0_650 = arith.constant 0 : index
      %c22_651 = arith.constant 22 : index
      %c0_652 = arith.constant 0 : index
      %c0_653 = arith.constant 0 : index
      %946 = vector.load %arg4[%c0_650, %c22_651, %c0_652, %c0_653] : memref<1x64x4x4xf32, #tpu.memory_space<vmem>>, vector<1x1x4x4xf32>
      %947 = vector.shape_cast %946 : vector<1x1x4x4xf32> to vector<4x4xf32>
      %948 = vector.broadcast %945 : f32 to vector<4x4xf32>
      %949 = arith.mulf %948, %947 : vector<4x4xf32>
      %950 = arith.addf %944, %949 : vector<4x4xf32>
      %c151 = arith.constant 151 : index
      %951 = memref.load %arg2[%c151] : memref<192xf32, #tpu.memory_space<smem>>
      %c0_654 = arith.constant 0 : index
      %c23_655 = arith.constant 23 : index
      %c0_656 = arith.constant 0 : index
      %c0_657 = arith.constant 0 : index
      %952 = vector.load %arg4[%c0_654, %c23_655, %c0_656, %c0_657] : memref<1x64x4x4xf32, #tpu.memory_space<vmem>>, vector<1x1x4x4xf32>
      %953 = vector.shape_cast %952 : vector<1x1x4x4xf32> to vector<4x4xf32>
      %954 = vector.broadcast %951 : f32 to vector<4x4xf32>
      %955 = arith.mulf %954, %953 : vector<4x4xf32>
      %956 = arith.addf %950, %955 : vector<4x4xf32>
      %c152 = arith.constant 152 : index
      %957 = memref.load %arg2[%c152] : memref<192xf32, #tpu.memory_space<smem>>
      %c0_658 = arith.constant 0 : index
      %c24_659 = arith.constant 24 : index
      %c0_660 = arith.constant 0 : index
      %c0_661 = arith.constant 0 : index
      %958 = vector.load %arg4[%c0_658, %c24_659, %c0_660, %c0_661] : memref<1x64x4x4xf32, #tpu.memory_space<vmem>>, vector<1x1x4x4xf32>
      %959 = vector.shape_cast %958 : vector<1x1x4x4xf32> to vector<4x4xf32>
      %960 = vector.broadcast %957 : f32 to vector<4x4xf32>
      %961 = arith.mulf %960, %959 : vector<4x4xf32>
      %962 = arith.addf %956, %961 : vector<4x4xf32>
      %c153 = arith.constant 153 : index
      %963 = memref.load %arg2[%c153] : memref<192xf32, #tpu.memory_space<smem>>
      %c0_662 = arith.constant 0 : index
      %c25_663 = arith.constant 25 : index
      %c0_664 = arith.constant 0 : index
      %c0_665 = arith.constant 0 : index
      %964 = vector.load %arg4[%c0_662, %c25_663, %c0_664, %c0_665] : memref<1x64x4x4xf32, #tpu.memory_space<vmem>>, vector<1x1x4x4xf32>
      %965 = vector.shape_cast %964 : vector<1x1x4x4xf32> to vector<4x4xf32>
      %966 = vector.broadcast %963 : f32 to vector<4x4xf32>
      %967 = arith.mulf %966, %965 : vector<4x4xf32>
      %968 = arith.addf %962, %967 : vector<4x4xf32>
      %c154 = arith.constant 154 : index
      %969 = memref.load %arg2[%c154] : memref<192xf32, #tpu.memory_space<smem>>
      %c0_666 = arith.constant 0 : index
      %c26_667 = arith.constant 26 : index
      %c0_668 = arith.constant 0 : index
      %c0_669 = arith.constant 0 : index
      %970 = vector.load %arg4[%c0_666, %c26_667, %c0_668, %c0_669] : memref<1x64x4x4xf32, #tpu.memory_space<vmem>>, vector<1x1x4x4xf32>
      %971 = vector.shape_cast %970 : vector<1x1x4x4xf32> to vector<4x4xf32>
      %972 = vector.broadcast %969 : f32 to vector<4x4xf32>
      %973 = arith.mulf %972, %971 : vector<4x4xf32>
      %974 = arith.addf %968, %973 : vector<4x4xf32>
      %c155 = arith.constant 155 : index
      %975 = memref.load %arg2[%c155] : memref<192xf32, #tpu.memory_space<smem>>
      %c0_670 = arith.constant 0 : index
      %c27_671 = arith.constant 27 : index
      %c0_672 = arith.constant 0 : index
      %c0_673 = arith.constant 0 : index
      %976 = vector.load %arg4[%c0_670, %c27_671, %c0_672, %c0_673] : memref<1x64x4x4xf32, #tpu.memory_space<vmem>>, vector<1x1x4x4xf32>
      %977 = vector.shape_cast %976 : vector<1x1x4x4xf32> to vector<4x4xf32>
      %978 = vector.broadcast %975 : f32 to vector<4x4xf32>
      %979 = arith.mulf %978, %977 : vector<4x4xf32>
      %980 = arith.addf %974, %979 : vector<4x4xf32>
      %c156 = arith.constant 156 : index
      %981 = memref.load %arg2[%c156] : memref<192xf32, #tpu.memory_space<smem>>
      %c0_674 = arith.constant 0 : index
      %c28_675 = arith.constant 28 : index
      %c0_676 = arith.constant 0 : index
      %c0_677 = arith.constant 0 : index
      %982 = vector.load %arg4[%c0_674, %c28_675, %c0_676, %c0_677] : memref<1x64x4x4xf32, #tpu.memory_space<vmem>>, vector<1x1x4x4xf32>
      %983 = vector.shape_cast %982 : vector<1x1x4x4xf32> to vector<4x4xf32>
      %984 = vector.broadcast %981 : f32 to vector<4x4xf32>
      %985 = arith.mulf %984, %983 : vector<4x4xf32>
      %986 = arith.addf %980, %985 : vector<4x4xf32>
      %c157 = arith.constant 157 : index
      %987 = memref.load %arg2[%c157] : memref<192xf32, #tpu.memory_space<smem>>
      %c0_678 = arith.constant 0 : index
      %c29_679 = arith.constant 29 : index
      %c0_680 = arith.constant 0 : index
      %c0_681 = arith.constant 0 : index
      %988 = vector.load %arg4[%c0_678, %c29_679, %c0_680, %c0_681] : memref<1x64x4x4xf32, #tpu.memory_space<vmem>>, vector<1x1x4x4xf32>
      %989 = vector.shape_cast %988 : vector<1x1x4x4xf32> to vector<4x4xf32>
      %990 = vector.broadcast %987 : f32 to vector<4x4xf32>
      %991 = arith.mulf %990, %989 : vector<4x4xf32>
      %992 = arith.addf %986, %991 : vector<4x4xf32>
      %c158 = arith.constant 158 : index
      %993 = memref.load %arg2[%c158] : memref<192xf32, #tpu.memory_space<smem>>
      %c0_682 = arith.constant 0 : index
      %c30_683 = arith.constant 30 : index
      %c0_684 = arith.constant 0 : index
      %c0_685 = arith.constant 0 : index
      %994 = vector.load %arg4[%c0_682, %c30_683, %c0_684, %c0_685] : memref<1x64x4x4xf32, #tpu.memory_space<vmem>>, vector<1x1x4x4xf32>
      %995 = vector.shape_cast %994 : vector<1x1x4x4xf32> to vector<4x4xf32>
      %996 = vector.broadcast %993 : f32 to vector<4x4xf32>
      %997 = arith.mulf %996, %995 : vector<4x4xf32>
      %998 = arith.addf %992, %997 : vector<4x4xf32>
      %c159 = arith.constant 159 : index
      %999 = memref.load %arg2[%c159] : memref<192xf32, #tpu.memory_space<smem>>
      %c0_686 = arith.constant 0 : index
      %c31_687 = arith.constant 31 : index
      %c0_688 = arith.constant 0 : index
      %c0_689 = arith.constant 0 : index
      %1000 = vector.load %arg4[%c0_686, %c31_687, %c0_688, %c0_689] : memref<1x64x4x4xf32, #tpu.memory_space<vmem>>, vector<1x1x4x4xf32>
      %1001 = vector.shape_cast %1000 : vector<1x1x4x4xf32> to vector<4x4xf32>
      %1002 = vector.broadcast %999 : f32 to vector<4x4xf32>
      %1003 = arith.mulf %1002, %1001 : vector<4x4xf32>
      %1004 = arith.addf %998, %1003 : vector<4x4xf32>
      %c160 = arith.constant 160 : index
      %1005 = memref.load %arg2[%c160] : memref<192xf32, #tpu.memory_space<smem>>
      %c0_690 = arith.constant 0 : index
      %c32_691 = arith.constant 32 : index
      %c0_692 = arith.constant 0 : index
      %c0_693 = arith.constant 0 : index
      %1006 = vector.load %arg4[%c0_690, %c32_691, %c0_692, %c0_693] : memref<1x64x4x4xf32, #tpu.memory_space<vmem>>, vector<1x1x4x4xf32>
      %1007 = vector.shape_cast %1006 : vector<1x1x4x4xf32> to vector<4x4xf32>
      %1008 = vector.broadcast %1005 : f32 to vector<4x4xf32>
      %1009 = arith.mulf %1008, %1007 : vector<4x4xf32>
      %1010 = arith.addf %1004, %1009 : vector<4x4xf32>
      %c161 = arith.constant 161 : index
      %1011 = memref.load %arg2[%c161] : memref<192xf32, #tpu.memory_space<smem>>
      %c0_694 = arith.constant 0 : index
      %c33_695 = arith.constant 33 : index
      %c0_696 = arith.constant 0 : index
      %c0_697 = arith.constant 0 : index
      %1012 = vector.load %arg4[%c0_694, %c33_695, %c0_696, %c0_697] : memref<1x64x4x4xf32, #tpu.memory_space<vmem>>, vector<1x1x4x4xf32>
      %1013 = vector.shape_cast %1012 : vector<1x1x4x4xf32> to vector<4x4xf32>
      %1014 = vector.broadcast %1011 : f32 to vector<4x4xf32>
      %1015 = arith.mulf %1014, %1013 : vector<4x4xf32>
      %1016 = arith.addf %1010, %1015 : vector<4x4xf32>
      %c162 = arith.constant 162 : index
      %1017 = memref.load %arg2[%c162] : memref<192xf32, #tpu.memory_space<smem>>
      %c0_698 = arith.constant 0 : index
      %c34_699 = arith.constant 34 : index
      %c0_700 = arith.constant 0 : index
      %c0_701 = arith.constant 0 : index
      %1018 = vector.load %arg4[%c0_698, %c34_699, %c0_700, %c0_701] : memref<1x64x4x4xf32, #tpu.memory_space<vmem>>, vector<1x1x4x4xf32>
      %1019 = vector.shape_cast %1018 : vector<1x1x4x4xf32> to vector<4x4xf32>
      %1020 = vector.broadcast %1017 : f32 to vector<4x4xf32>
      %1021 = arith.mulf %1020, %1019 : vector<4x4xf32>
      %1022 = arith.addf %1016, %1021 : vector<4x4xf32>
      %c163 = arith.constant 163 : index
      %1023 = memref.load %arg2[%c163] : memref<192xf32, #tpu.memory_space<smem>>
      %c0_702 = arith.constant 0 : index
      %c35_703 = arith.constant 35 : index
      %c0_704 = arith.constant 0 : index
      %c0_705 = arith.constant 0 : index
      %1024 = vector.load %arg4[%c0_702, %c35_703, %c0_704, %c0_705] : memref<1x64x4x4xf32, #tpu.memory_space<vmem>>, vector<1x1x4x4xf32>
      %1025 = vector.shape_cast %1024 : vector<1x1x4x4xf32> to vector<4x4xf32>
      %1026 = vector.broadcast %1023 : f32 to vector<4x4xf32>
      %1027 = arith.mulf %1026, %1025 : vector<4x4xf32>
      %1028 = arith.addf %1022, %1027 : vector<4x4xf32>
      %c164 = arith.constant 164 : index
      %1029 = memref.load %arg2[%c164] : memref<192xf32, #tpu.memory_space<smem>>
      %c0_706 = arith.constant 0 : index
      %c36_707 = arith.constant 36 : index
      %c0_708 = arith.constant 0 : index
      %c0_709 = arith.constant 0 : index
      %1030 = vector.load %arg4[%c0_706, %c36_707, %c0_708, %c0_709] : memref<1x64x4x4xf32, #tpu.memory_space<vmem>>, vector<1x1x4x4xf32>
      %1031 = vector.shape_cast %1030 : vector<1x1x4x4xf32> to vector<4x4xf32>
      %1032 = vector.broadcast %1029 : f32 to vector<4x4xf32>
      %1033 = arith.mulf %1032, %1031 : vector<4x4xf32>
      %1034 = arith.addf %1028, %1033 : vector<4x4xf32>
      %c165 = arith.constant 165 : index
      %1035 = memref.load %arg2[%c165] : memref<192xf32, #tpu.memory_space<smem>>
      %c0_710 = arith.constant 0 : index
      %c37_711 = arith.constant 37 : index
      %c0_712 = arith.constant 0 : index
      %c0_713 = arith.constant 0 : index
      %1036 = vector.load %arg4[%c0_710, %c37_711, %c0_712, %c0_713] : memref<1x64x4x4xf32, #tpu.memory_space<vmem>>, vector<1x1x4x4xf32>
      %1037 = vector.shape_cast %1036 : vector<1x1x4x4xf32> to vector<4x4xf32>
      %1038 = vector.broadcast %1035 : f32 to vector<4x4xf32>
      %1039 = arith.mulf %1038, %1037 : vector<4x4xf32>
      %1040 = arith.addf %1034, %1039 : vector<4x4xf32>
      %c166 = arith.constant 166 : index
      %1041 = memref.load %arg2[%c166] : memref<192xf32, #tpu.memory_space<smem>>
      %c0_714 = arith.constant 0 : index
      %c38_715 = arith.constant 38 : index
      %c0_716 = arith.constant 0 : index
      %c0_717 = arith.constant 0 : index
      %1042 = vector.load %arg4[%c0_714, %c38_715, %c0_716, %c0_717] : memref<1x64x4x4xf32, #tpu.memory_space<vmem>>, vector<1x1x4x4xf32>
      %1043 = vector.shape_cast %1042 : vector<1x1x4x4xf32> to vector<4x4xf32>
      %1044 = vector.broadcast %1041 : f32 to vector<4x4xf32>
      %1045 = arith.mulf %1044, %1043 : vector<4x4xf32>
      %1046 = arith.addf %1040, %1045 : vector<4x4xf32>
      %c167 = arith.constant 167 : index
      %1047 = memref.load %arg2[%c167] : memref<192xf32, #tpu.memory_space<smem>>
      %c0_718 = arith.constant 0 : index
      %c39_719 = arith.constant 39 : index
      %c0_720 = arith.constant 0 : index
      %c0_721 = arith.constant 0 : index
      %1048 = vector.load %arg4[%c0_718, %c39_719, %c0_720, %c0_721] : memref<1x64x4x4xf32, #tpu.memory_space<vmem>>, vector<1x1x4x4xf32>
      %1049 = vector.shape_cast %1048 : vector<1x1x4x4xf32> to vector<4x4xf32>
      %1050 = vector.broadcast %1047 : f32 to vector<4x4xf32>
      %1051 = arith.mulf %1050, %1049 : vector<4x4xf32>
      %1052 = arith.addf %1046, %1051 : vector<4x4xf32>
      %c168 = arith.constant 168 : index
      %1053 = memref.load %arg2[%c168] : memref<192xf32, #tpu.memory_space<smem>>
      %c0_722 = arith.constant 0 : index
      %c40_723 = arith.constant 40 : index
      %c0_724 = arith.constant 0 : index
      %c0_725 = arith.constant 0 : index
      %1054 = vector.load %arg4[%c0_722, %c40_723, %c0_724, %c0_725] : memref<1x64x4x4xf32, #tpu.memory_space<vmem>>, vector<1x1x4x4xf32>
      %1055 = vector.shape_cast %1054 : vector<1x1x4x4xf32> to vector<4x4xf32>
      %1056 = vector.broadcast %1053 : f32 to vector<4x4xf32>
      %1057 = arith.mulf %1056, %1055 : vector<4x4xf32>
      %1058 = arith.addf %1052, %1057 : vector<4x4xf32>
      %c169 = arith.constant 169 : index
      %1059 = memref.load %arg2[%c169] : memref<192xf32, #tpu.memory_space<smem>>
      %c0_726 = arith.constant 0 : index
      %c41_727 = arith.constant 41 : index
      %c0_728 = arith.constant 0 : index
      %c0_729 = arith.constant 0 : index
      %1060 = vector.load %arg4[%c0_726, %c41_727, %c0_728, %c0_729] : memref<1x64x4x4xf32, #tpu.memory_space<vmem>>, vector<1x1x4x4xf32>
      %1061 = vector.shape_cast %1060 : vector<1x1x4x4xf32> to vector<4x4xf32>
      %1062 = vector.broadcast %1059 : f32 to vector<4x4xf32>
      %1063 = arith.mulf %1062, %1061 : vector<4x4xf32>
      %1064 = arith.addf %1058, %1063 : vector<4x4xf32>
      %c170 = arith.constant 170 : index
      %1065 = memref.load %arg2[%c170] : memref<192xf32, #tpu.memory_space<smem>>
      %c0_730 = arith.constant 0 : index
      %c42_731 = arith.constant 42 : index
      %c0_732 = arith.constant 0 : index
      %c0_733 = arith.constant 0 : index
      %1066 = vector.load %arg4[%c0_730, %c42_731, %c0_732, %c0_733] : memref<1x64x4x4xf32, #tpu.memory_space<vmem>>, vector<1x1x4x4xf32>
      %1067 = vector.shape_cast %1066 : vector<1x1x4x4xf32> to vector<4x4xf32>
      %1068 = vector.broadcast %1065 : f32 to vector<4x4xf32>
      %1069 = arith.mulf %1068, %1067 : vector<4x4xf32>
      %1070 = arith.addf %1064, %1069 : vector<4x4xf32>
      %c171 = arith.constant 171 : index
      %1071 = memref.load %arg2[%c171] : memref<192xf32, #tpu.memory_space<smem>>
      %c0_734 = arith.constant 0 : index
      %c43_735 = arith.constant 43 : index
      %c0_736 = arith.constant 0 : index
      %c0_737 = arith.constant 0 : index
      %1072 = vector.load %arg4[%c0_734, %c43_735, %c0_736, %c0_737] : memref<1x64x4x4xf32, #tpu.memory_space<vmem>>, vector<1x1x4x4xf32>
      %1073 = vector.shape_cast %1072 : vector<1x1x4x4xf32> to vector<4x4xf32>
      %1074 = vector.broadcast %1071 : f32 to vector<4x4xf32>
      %1075 = arith.mulf %1074, %1073 : vector<4x4xf32>
      %1076 = arith.addf %1070, %1075 : vector<4x4xf32>
      %c172 = arith.constant 172 : index
      %1077 = memref.load %arg2[%c172] : memref<192xf32, #tpu.memory_space<smem>>
      %c0_738 = arith.constant 0 : index
      %c44_739 = arith.constant 44 : index
      %c0_740 = arith.constant 0 : index
      %c0_741 = arith.constant 0 : index
      %1078 = vector.load %arg4[%c0_738, %c44_739, %c0_740, %c0_741] : memref<1x64x4x4xf32, #tpu.memory_space<vmem>>, vector<1x1x4x4xf32>
      %1079 = vector.shape_cast %1078 : vector<1x1x4x4xf32> to vector<4x4xf32>
      %1080 = vector.broadcast %1077 : f32 to vector<4x4xf32>
      %1081 = arith.mulf %1080, %1079 : vector<4x4xf32>
      %1082 = arith.addf %1076, %1081 : vector<4x4xf32>
      %c173 = arith.constant 173 : index
      %1083 = memref.load %arg2[%c173] : memref<192xf32, #tpu.memory_space<smem>>
      %c0_742 = arith.constant 0 : index
      %c45_743 = arith.constant 45 : index
      %c0_744 = arith.constant 0 : index
      %c0_745 = arith.constant 0 : index
      %1084 = vector.load %arg4[%c0_742, %c45_743, %c0_744, %c0_745] : memref<1x64x4x4xf32, #tpu.memory_space<vmem>>, vector<1x1x4x4xf32>
      %1085 = vector.shape_cast %1084 : vector<1x1x4x4xf32> to vector<4x4xf32>
      %1086 = vector.broadcast %1083 : f32 to vector<4x4xf32>
      %1087 = arith.mulf %1086, %1085 : vector<4x4xf32>
      %1088 = arith.addf %1082, %1087 : vector<4x4xf32>
      %c174 = arith.constant 174 : index
      %1089 = memref.load %arg2[%c174] : memref<192xf32, #tpu.memory_space<smem>>
      %c0_746 = arith.constant 0 : index
      %c46_747 = arith.constant 46 : index
      %c0_748 = arith.constant 0 : index
      %c0_749 = arith.constant 0 : index
      %1090 = vector.load %arg4[%c0_746, %c46_747, %c0_748, %c0_749] : memref<1x64x4x4xf32, #tpu.memory_space<vmem>>, vector<1x1x4x4xf32>
      %1091 = vector.shape_cast %1090 : vector<1x1x4x4xf32> to vector<4x4xf32>
      %1092 = vector.broadcast %1089 : f32 to vector<4x4xf32>
      %1093 = arith.mulf %1092, %1091 : vector<4x4xf32>
      %1094 = arith.addf %1088, %1093 : vector<4x4xf32>
      %c175 = arith.constant 175 : index
      %1095 = memref.load %arg2[%c175] : memref<192xf32, #tpu.memory_space<smem>>
      %c0_750 = arith.constant 0 : index
      %c47_751 = arith.constant 47 : index
      %c0_752 = arith.constant 0 : index
      %c0_753 = arith.constant 0 : index
      %1096 = vector.load %arg4[%c0_750, %c47_751, %c0_752, %c0_753] : memref<1x64x4x4xf32, #tpu.memory_space<vmem>>, vector<1x1x4x4xf32>
      %1097 = vector.shape_cast %1096 : vector<1x1x4x4xf32> to vector<4x4xf32>
      %1098 = vector.broadcast %1095 : f32 to vector<4x4xf32>
      %1099 = arith.mulf %1098, %1097 : vector<4x4xf32>
      %1100 = arith.addf %1094, %1099 : vector<4x4xf32>
      %c176 = arith.constant 176 : index
      %1101 = memref.load %arg2[%c176] : memref<192xf32, #tpu.memory_space<smem>>
      %c0_754 = arith.constant 0 : index
      %c48_755 = arith.constant 48 : index
      %c0_756 = arith.constant 0 : index
      %c0_757 = arith.constant 0 : index
      %1102 = vector.load %arg4[%c0_754, %c48_755, %c0_756, %c0_757] : memref<1x64x4x4xf32, #tpu.memory_space<vmem>>, vector<1x1x4x4xf32>
      %1103 = vector.shape_cast %1102 : vector<1x1x4x4xf32> to vector<4x4xf32>
      %1104 = vector.broadcast %1101 : f32 to vector<4x4xf32>
      %1105 = arith.mulf %1104, %1103 : vector<4x4xf32>
      %1106 = arith.addf %1100, %1105 : vector<4x4xf32>
      %c177 = arith.constant 177 : index
      %1107 = memref.load %arg2[%c177] : memref<192xf32, #tpu.memory_space<smem>>
      %c0_758 = arith.constant 0 : index
      %c49_759 = arith.constant 49 : index
      %c0_760 = arith.constant 0 : index
      %c0_761 = arith.constant 0 : index
      %1108 = vector.load %arg4[%c0_758, %c49_759, %c0_760, %c0_761] : memref<1x64x4x4xf32, #tpu.memory_space<vmem>>, vector<1x1x4x4xf32>
      %1109 = vector.shape_cast %1108 : vector<1x1x4x4xf32> to vector<4x4xf32>
      %1110 = vector.broadcast %1107 : f32 to vector<4x4xf32>
      %1111 = arith.mulf %1110, %1109 : vector<4x4xf32>
      %1112 = arith.addf %1106, %1111 : vector<4x4xf32>
      %c178 = arith.constant 178 : index
      %1113 = memref.load %arg2[%c178] : memref<192xf32, #tpu.memory_space<smem>>
      %c0_762 = arith.constant 0 : index
      %c50_763 = arith.constant 50 : index
      %c0_764 = arith.constant 0 : index
      %c0_765 = arith.constant 0 : index
      %1114 = vector.load %arg4[%c0_762, %c50_763, %c0_764, %c0_765] : memref<1x64x4x4xf32, #tpu.memory_space<vmem>>, vector<1x1x4x4xf32>
      %1115 = vector.shape_cast %1114 : vector<1x1x4x4xf32> to vector<4x4xf32>
      %1116 = vector.broadcast %1113 : f32 to vector<4x4xf32>
      %1117 = arith.mulf %1116, %1115 : vector<4x4xf32>
      %1118 = arith.addf %1112, %1117 : vector<4x4xf32>
      %c179 = arith.constant 179 : index
      %1119 = memref.load %arg2[%c179] : memref<192xf32, #tpu.memory_space<smem>>
      %c0_766 = arith.constant 0 : index
      %c51_767 = arith.constant 51 : index
      %c0_768 = arith.constant 0 : index
      %c0_769 = arith.constant 0 : index
      %1120 = vector.load %arg4[%c0_766, %c51_767, %c0_768, %c0_769] : memref<1x64x4x4xf32, #tpu.memory_space<vmem>>, vector<1x1x4x4xf32>
      %1121 = vector.shape_cast %1120 : vector<1x1x4x4xf32> to vector<4x4xf32>
      %1122 = vector.broadcast %1119 : f32 to vector<4x4xf32>
      %1123 = arith.mulf %1122, %1121 : vector<4x4xf32>
      %1124 = arith.addf %1118, %1123 : vector<4x4xf32>
      %c180 = arith.constant 180 : index
      %1125 = memref.load %arg2[%c180] : memref<192xf32, #tpu.memory_space<smem>>
      %c0_770 = arith.constant 0 : index
      %c52_771 = arith.constant 52 : index
      %c0_772 = arith.constant 0 : index
      %c0_773 = arith.constant 0 : index
      %1126 = vector.load %arg4[%c0_770, %c52_771, %c0_772, %c0_773] : memref<1x64x4x4xf32, #tpu.memory_space<vmem>>, vector<1x1x4x4xf32>
      %1127 = vector.shape_cast %1126 : vector<1x1x4x4xf32> to vector<4x4xf32>
      %1128 = vector.broadcast %1125 : f32 to vector<4x4xf32>
      %1129 = arith.mulf %1128, %1127 : vector<4x4xf32>
      %1130 = arith.addf %1124, %1129 : vector<4x4xf32>
      %c181 = arith.constant 181 : index
      %1131 = memref.load %arg2[%c181] : memref<192xf32, #tpu.memory_space<smem>>
      %c0_774 = arith.constant 0 : index
      %c53_775 = arith.constant 53 : index
      %c0_776 = arith.constant 0 : index
      %c0_777 = arith.constant 0 : index
      %1132 = vector.load %arg4[%c0_774, %c53_775, %c0_776, %c0_777] : memref<1x64x4x4xf32, #tpu.memory_space<vmem>>, vector<1x1x4x4xf32>
      %1133 = vector.shape_cast %1132 : vector<1x1x4x4xf32> to vector<4x4xf32>
      %1134 = vector.broadcast %1131 : f32 to vector<4x4xf32>
      %1135 = arith.mulf %1134, %1133 : vector<4x4xf32>
      %1136 = arith.addf %1130, %1135 : vector<4x4xf32>
      %c182 = arith.constant 182 : index
      %1137 = memref.load %arg2[%c182] : memref<192xf32, #tpu.memory_space<smem>>
      %c0_778 = arith.constant 0 : index
      %c54_779 = arith.constant 54 : index
      %c0_780 = arith.constant 0 : index
      %c0_781 = arith.constant 0 : index
      %1138 = vector.load %arg4[%c0_778, %c54_779, %c0_780, %c0_781] : memref<1x64x4x4xf32, #tpu.memory_space<vmem>>, vector<1x1x4x4xf32>
      %1139 = vector.shape_cast %1138 : vector<1x1x4x4xf32> to vector<4x4xf32>
      %1140 = vector.broadcast %1137 : f32 to vector<4x4xf32>
      %1141 = arith.mulf %1140, %1139 : vector<4x4xf32>
      %1142 = arith.addf %1136, %1141 : vector<4x4xf32>
      %c183 = arith.constant 183 : index
      %1143 = memref.load %arg2[%c183] : memref<192xf32, #tpu.memory_space<smem>>
      %c0_782 = arith.constant 0 : index
      %c55_783 = arith.constant 55 : index
      %c0_784 = arith.constant 0 : index
      %c0_785 = arith.constant 0 : index
      %1144 = vector.load %arg4[%c0_782, %c55_783, %c0_784, %c0_785] : memref<1x64x4x4xf32, #tpu.memory_space<vmem>>, vector<1x1x4x4xf32>
      %1145 = vector.shape_cast %1144 : vector<1x1x4x4xf32> to vector<4x4xf32>
      %1146 = vector.broadcast %1143 : f32 to vector<4x4xf32>
      %1147 = arith.mulf %1146, %1145 : vector<4x4xf32>
      %1148 = arith.addf %1142, %1147 : vector<4x4xf32>
      %c184 = arith.constant 184 : index
      %1149 = memref.load %arg2[%c184] : memref<192xf32, #tpu.memory_space<smem>>
      %c0_786 = arith.constant 0 : index
      %c56_787 = arith.constant 56 : index
      %c0_788 = arith.constant 0 : index
      %c0_789 = arith.constant 0 : index
      %1150 = vector.load %arg4[%c0_786, %c56_787, %c0_788, %c0_789] : memref<1x64x4x4xf32, #tpu.memory_space<vmem>>, vector<1x1x4x4xf32>
      %1151 = vector.shape_cast %1150 : vector<1x1x4x4xf32> to vector<4x4xf32>
      %1152 = vector.broadcast %1149 : f32 to vector<4x4xf32>
      %1153 = arith.mulf %1152, %1151 : vector<4x4xf32>
      %1154 = arith.addf %1148, %1153 : vector<4x4xf32>
      %c185 = arith.constant 185 : index
      %1155 = memref.load %arg2[%c185] : memref<192xf32, #tpu.memory_space<smem>>
      %c0_790 = arith.constant 0 : index
      %c57_791 = arith.constant 57 : index
      %c0_792 = arith.constant 0 : index
      %c0_793 = arith.constant 0 : index
      %1156 = vector.load %arg4[%c0_790, %c57_791, %c0_792, %c0_793] : memref<1x64x4x4xf32, #tpu.memory_space<vmem>>, vector<1x1x4x4xf32>
      %1157 = vector.shape_cast %1156 : vector<1x1x4x4xf32> to vector<4x4xf32>
      %1158 = vector.broadcast %1155 : f32 to vector<4x4xf32>
      %1159 = arith.mulf %1158, %1157 : vector<4x4xf32>
      %1160 = arith.addf %1154, %1159 : vector<4x4xf32>
      %c186 = arith.constant 186 : index
      %1161 = memref.load %arg2[%c186] : memref<192xf32, #tpu.memory_space<smem>>
      %c0_794 = arith.constant 0 : index
      %c58_795 = arith.constant 58 : index
      %c0_796 = arith.constant 0 : index
      %c0_797 = arith.constant 0 : index
      %1162 = vector.load %arg4[%c0_794, %c58_795, %c0_796, %c0_797] : memref<1x64x4x4xf32, #tpu.memory_space<vmem>>, vector<1x1x4x4xf32>
      %1163 = vector.shape_cast %1162 : vector<1x1x4x4xf32> to vector<4x4xf32>
      %1164 = vector.broadcast %1161 : f32 to vector<4x4xf32>
      %1165 = arith.mulf %1164, %1163 : vector<4x4xf32>
      %1166 = arith.addf %1160, %1165 : vector<4x4xf32>
      %c187 = arith.constant 187 : index
      %1167 = memref.load %arg2[%c187] : memref<192xf32, #tpu.memory_space<smem>>
      %c0_798 = arith.constant 0 : index
      %c59_799 = arith.constant 59 : index
      %c0_800 = arith.constant 0 : index
      %c0_801 = arith.constant 0 : index
      %1168 = vector.load %arg4[%c0_798, %c59_799, %c0_800, %c0_801] : memref<1x64x4x4xf32, #tpu.memory_space<vmem>>, vector<1x1x4x4xf32>
      %1169 = vector.shape_cast %1168 : vector<1x1x4x4xf32> to vector<4x4xf32>
      %1170 = vector.broadcast %1167 : f32 to vector<4x4xf32>
      %1171 = arith.mulf %1170, %1169 : vector<4x4xf32>
      %1172 = arith.addf %1166, %1171 : vector<4x4xf32>
      %c188 = arith.constant 188 : index
      %1173 = memref.load %arg2[%c188] : memref<192xf32, #tpu.memory_space<smem>>
      %c0_802 = arith.constant 0 : index
      %c60_803 = arith.constant 60 : index
      %c0_804 = arith.constant 0 : index
      %c0_805 = arith.constant 0 : index
      %1174 = vector.load %arg4[%c0_802, %c60_803, %c0_804, %c0_805] : memref<1x64x4x4xf32, #tpu.memory_space<vmem>>, vector<1x1x4x4xf32>
      %1175 = vector.shape_cast %1174 : vector<1x1x4x4xf32> to vector<4x4xf32>
      %1176 = vector.broadcast %1173 : f32 to vector<4x4xf32>
      %1177 = arith.mulf %1176, %1175 : vector<4x4xf32>
      %1178 = arith.addf %1172, %1177 : vector<4x4xf32>
      %c189 = arith.constant 189 : index
      %1179 = memref.load %arg2[%c189] : memref<192xf32, #tpu.memory_space<smem>>
      %c0_806 = arith.constant 0 : index
      %c61_807 = arith.constant 61 : index
      %c0_808 = arith.constant 0 : index
      %c0_809 = arith.constant 0 : index
      %1180 = vector.load %arg4[%c0_806, %c61_807, %c0_808, %c0_809] : memref<1x64x4x4xf32, #tpu.memory_space<vmem>>, vector<1x1x4x4xf32>
      %1181 = vector.shape_cast %1180 : vector<1x1x4x4xf32> to vector<4x4xf32>
      %1182 = vector.broadcast %1179 : f32 to vector<4x4xf32>
      %1183 = arith.mulf %1182, %1181 : vector<4x4xf32>
      %1184 = arith.addf %1178, %1183 : vector<4x4xf32>
      %c190 = arith.constant 190 : index
      %1185 = memref.load %arg2[%c190] : memref<192xf32, #tpu.memory_space<smem>>
      %c0_810 = arith.constant 0 : index
      %c62_811 = arith.constant 62 : index
      %c0_812 = arith.constant 0 : index
      %c0_813 = arith.constant 0 : index
      %1186 = vector.load %arg4[%c0_810, %c62_811, %c0_812, %c0_813] : memref<1x64x4x4xf32, #tpu.memory_space<vmem>>, vector<1x1x4x4xf32>
      %1187 = vector.shape_cast %1186 : vector<1x1x4x4xf32> to vector<4x4xf32>
      %1188 = vector.broadcast %1185 : f32 to vector<4x4xf32>
      %1189 = arith.mulf %1188, %1187 : vector<4x4xf32>
      %1190 = arith.addf %1184, %1189 : vector<4x4xf32>
      %c191 = arith.constant 191 : index
      %1191 = memref.load %arg2[%c191] : memref<192xf32, #tpu.memory_space<smem>>
      %c0_814 = arith.constant 0 : index
      %c63_815 = arith.constant 63 : index
      %c0_816 = arith.constant 0 : index
      %c0_817 = arith.constant 0 : index
      %1192 = vector.load %arg4[%c0_814, %c63_815, %c0_816, %c0_817] : memref<1x64x4x4xf32, #tpu.memory_space<vmem>>, vector<1x1x4x4xf32>
      %1193 = vector.shape_cast %1192 : vector<1x1x4x4xf32> to vector<4x4xf32>
      %1194 = vector.broadcast %1191 : f32 to vector<4x4xf32>
      %1195 = arith.mulf %1194, %1193 : vector<4x4xf32>
      %1196 = arith.addf %1190, %1195 : vector<4x4xf32>
      %c2_818 = arith.constant 2 : index
      %1197 = memref.load %arg3[%c2_818] : memref<3xf32, #tpu.memory_space<smem>>
      %1198 = vector.broadcast %1197 : f32 to vector<4x4xf32>
      %1199 = arith.addf %1196, %1198 : vector<4x4xf32>
      %c2_819 = arith.constant 2 : index
      %c0_820 = arith.constant 0 : index
      %c0_821 = arith.constant 0 : index
      %1200 = vector.load %arg8[%c2_819, %c0_820, %c0_821] : memref<3x4x4xf32, #tpu.memory_space<vmem>>, vector<1x4x4xf32>
      %1201 = vector.shape_cast %1200 : vector<1x4x4xf32> to vector<4x4xf32>
      %1202 = vector.shape_cast %1199 : vector<4x4xf32> to vector<1x4x4xf32>
      tpu.vector_store %arg8[%c2_819, %c0_820, %c0_821], %1202 {strides = array<i32>} : memref<3x4x4xf32, #tpu.memory_space<vmem>>, vector<1x4x4xf32>,
    } else {
    }
    %c0 = arith.constant 0 : index
    %c0_1 = arith.constant 0 : index
    %3 = vector.load %arg5[%c0, %c0_1] : memref<16x4xf32, #tpu.memory_space<vmem>>, vector<16x4xf32>
    %c0_2 = arith.constant 0 : index
    %c0_3 = arith.constant 0 : index
    %c0_4 = arith.constant 0 : index
    %4 = vector.load %arg8[%c0_2, %c0_3, %c0_4] : memref<3x4x4xf32, #tpu.memory_space<vmem>>, vector<1x4x4xf32>
    %5 = vector.shape_cast %4 : vector<1x4x4xf32> to vector<4x4xf32>
    %cst = arith.constant dense<0.000000e+00> : vector<16x4xf32>
    %6 = tpu.matmul %3, %5, %cst {dimension_numbers = #tpu.dot_dimension_numbers<[1], [0], [0], [1], [0, 0, 1, 1], [], []>} : vector<16x4xf32>, vector<4x4xf32>, vector<16x4xf32> -> vector<16x4xf32>
    %c0_5 = arith.constant 0 : index
    %c0_6 = arith.constant 0 : index
    %7 = vector.load %arg6[%c0_5, %c0_6] : memref<4x16xf32, #tpu.memory_space<vmem>>, vector<4x16xf32>
    %cst_7 = arith.constant dense<0.000000e+00> : vector<16x16xf32>
    %8 = tpu.matmul %6, %7, %cst_7 {dimension_numbers = #tpu.dot_dimension_numbers<[1], [0], [0], [1], [0, 0, 1, 1], [], []>} : vector<16x4xf32>, vector<4x16xf32>, vector<16x16xf32> -> vector<16x16xf32>
    %c0_8 = arith.constant 0 : index
    %c0_9 = arith.constant 0 : index
    %c0_10 = arith.constant 0 : index
    %c0_11 = arith.constant 0 : index
    %9 = vector.load %arg7[%c0_8, %c0_9, %c0_10, %c0_11] : memref<1x3x16x16xf32, #tpu.memory_space<vmem>>, vector<1x1x16x16xf32>
    %10 = vector.shape_cast %9 : vector<1x1x16x16xf32> to vector<16x16xf32>
    %11 = vector.shape_cast %8 : vector<16x16xf32> to vector<1x1x16x16xf32>
    tpu.vector_store %arg7[%c0_8, %c0_9, %c0_10, %c0_11], %11 {strides = array<i32>} : memref<1x3x16x16xf32, #tpu.memory_space<vmem>>, vector<1x1x16x16xf32>,
    %c0_12 = arith.constant 0 : index
    %c0_13 = arith.constant 0 : index
    %12 = vector.load %arg5[%c0_12, %c0_13] : memref<16x4xf32, #tpu.memory_space<vmem>>, vector<16x4xf32>
    %c1 = arith.constant 1 : index
    %c0_14 = arith.constant 0 : index
    %c0_15 = arith.constant 0 : index
    %13 = vector.load %arg8[%c1, %c0_14, %c0_15] : memref<3x4x4xf32, #tpu.memory_space<vmem>>, vector<1x4x4xf32>
    %14 = vector.shape_cast %13 : vector<1x4x4xf32> to vector<4x4xf32>
    %cst_16 = arith.constant dense<0.000000e+00> : vector<16x4xf32>
    %15 = tpu.matmul %12, %14, %cst_16 {dimension_numbers = #tpu.dot_dimension_numbers<[1], [0], [0], [1], [0, 0, 1, 1], [], []>} : vector<16x4xf32>, vector<4x4xf32>, vector<16x4xf32> -> vector<16x4xf32>
    %c0_17 = arith.constant 0 : index
    %c0_18 = arith.constant 0 : index
    %16 = vector.load %arg6[%c0_17, %c0_18] : memref<4x16xf32, #tpu.memory_space<vmem>>, vector<4x16xf32>
    %cst_19 = arith.constant dense<0.000000e+00> : vector<16x16xf32>
    %17 = tpu.matmul %15, %16, %cst_19 {dimension_numbers = #tpu.dot_dimension_numbers<[1], [0], [0], [1], [0, 0, 1, 1], [], []>} : vector<16x4xf32>, vector<4x16xf32>, vector<16x16xf32> -> vector<16x16xf32>
    %c0_20 = arith.constant 0 : index
    %c1_21 = arith.constant 1 : index
    %c0_22 = arith.constant 0 : index
    %c0_23 = arith.constant 0 : index
    %18 = vector.load %arg7[%c0_20, %c1_21, %c0_22, %c0_23] : memref<1x3x16x16xf32, #tpu.memory_space<vmem>>, vector<1x1x16x16xf32>
    %19 = vector.shape_cast %18 : vector<1x1x16x16xf32> to vector<16x16xf32>
    %20 = vector.shape_cast %17 : vector<16x16xf32> to vector<1x1x16x16xf32>
    tpu.vector_store %arg7[%c0_20, %c1_21, %c0_22, %c0_23], %20 {strides = array<i32>} : memref<1x3x16x16xf32, #tpu.memory_space<vmem>>, vector<1x1x16x16xf32>,
    %c0_24 = arith.constant 0 : index
    %c0_25 = arith.constant 0 : index
    %21 = vector.load %arg5[%c0_24, %c0_25] : memref<16x4xf32, #tpu.memory_space<vmem>>, vector<16x4xf32>
    %c2 = arith.constant 2 : index
    %c0_26 = arith.constant 0 : index
    %c0_27 = arith.constant 0 : index
    %22 = vector.load %arg8[%c2, %c0_26, %c0_27] : memref<3x4x4xf32, #tpu.memory_space<vmem>>, vector<1x4x4xf32>
    %23 = vector.shape_cast %22 : vector<1x4x4xf32> to vector<4x4xf32>
    %cst_28 = arith.constant dense<0.000000e+00> : vector<16x4xf32>
    %24 = tpu.matmul %21, %23, %cst_28 {dimension_numbers = #tpu.dot_dimension_numbers<[1], [0], [0], [1], [0, 0, 1, 1], [], []>} : vector<16x4xf32>, vector<4x4xf32>, vector<16x4xf32> -> vector<16x4xf32>
    %c0_29 = arith.constant 0 : index
    %c0_30 = arith.constant 0 : index
    %25 = vector.load %arg6[%c0_29, %c0_30] : memref<4x16xf32, #tpu.memory_space<vmem>>, vector<4x16xf32>
    %cst_31 = arith.constant dense<0.000000e+00> : vector<16x16xf32>
    %26 = tpu.matmul %24, %25, %cst_31 {dimension_numbers = #tpu.dot_dimension_numbers<[1], [0], [0], [1], [0, 0, 1, 1], [], []>} : vector<16x4xf32>, vector<4x16xf32>, vector<16x16xf32> -> vector<16x16xf32>
    %c0_32 = arith.constant 0 : index
    %c2_33 = arith.constant 2 : index
    %c0_34 = arith.constant 0 : index
    %c0_35 = arith.constant 0 : index
    %27 = vector.load %arg7[%c0_32, %c2_33, %c0_34, %c0_35] : memref<1x3x16x16xf32, #tpu.memory_space<vmem>>, vector<1x1x16x16xf32>
    %28 = vector.shape_cast %27 : vector<1x1x16x16xf32> to vector<16x16xf32>
    %29 = vector.shape_cast %26 : vector<16x16xf32> to vector<1x1x16x16xf32>
    tpu.vector_store %arg7[%c0_32, %c2_33, %c0_34, %c0_35], %29 {strides = array<i32>} : memref<1x3x16x16xf32, #tpu.memory_space<vmem>>, vector<1x1x16x16xf32>,
    return
  }
  func.func @transform_0(%arg0: i32, %arg1: i32) -> i32 {
    %c0_i32 = arith.constant 0 : i32
    %c0_i32_0 = arith.constant 0 : i32
    return %c0_i32 : i32
  }
  func.func @transform_1(%arg0: i32, %arg1: i32) -> i32 {
    %c0_i32 = arith.constant 0 : i32
    %c0_i32_0 = arith.constant 0 : i32
    return %c0_i32 : i32
  }
  func.func @transform_2(%arg0: i32, %arg1: i32) -> (i32, i32, i32, i32) {
    %c0_i32 = arith.constant 0 : i32
    %c0_i32_0 = arith.constant 0 : i32
    %c0_i32_1 = arith.constant 0 : i32
    %c0_i32_2 = arith.constant 0 : i32
    return %arg0, %c0_i32, %c0_i32_0, %c0_i32_1 : i32, i32, i32, i32
  }
  func.func @transform_3(%arg0: i32, %arg1: i32) -> (i32, i32) {
    %c0_i32 = arith.constant 0 : i32
    %c0_i32_0 = arith.constant 0 : i32
    return %arg1, %c0_i32 : i32, i32
  }
  func.func @transform_4(%arg0: i32, %arg1: i32) -> (i32, i32) {
    %c0_i32 = arith.constant 0 : i32
    %c0_i32_0 = arith.constant 0 : i32
    %c0_i32_1 = arith.constant 0 : i32
    return %c0_i32, %c0_i32_0 : i32, i32
  }
  func.func @transform_5(%arg0: i32, %arg1: i32) -> (i32, i32, i32, i32) {
    %c0_i32 = arith.constant 0 : i32
    %c0_i32_0 = arith.constant 0 : i32
    %c0_i32_1 = arith.constant 0 : i32
    return %arg0, %c0_i32, %arg1, %c0_i32_0 : i32, i32, i32, i32
  }
}

</mosaic_0001>

<llo_original>
// kernel: huggingface_wrapper_forward.1
$region0: #{huggingface_wrapper_forward.1}
  #allocation0 [shape = 'u32[]', space=smem, size = 0x4, offset = 0x4, fixed_abs, tag = 'smem constant byte address 0x4 - core index']
  #allocation1 [shape = 'u32[144,128]{1,0:T(1,128)}', space=vmem, size = 0x12000, scoped, tag = 'internal scratch']
  #allocation2 [shape = 'f32[3,4,4]{2,1,0:T(4,128)}', space=vmem, size = 0x1800, scoped, tag = 'scratch operand']
  %s0 = inlined_call_operand.vmem [shape: f32[192], index: 0, kind: input, shape index: {}]
  %s1 = inlined_call_operand.vmem [shape: f32[3], index: 1, kind: input, shape index: {}]
  %s2 = inlined_call_operand.vmem [shape: f32[2,64,4,4], index: 2, kind: input, shape index: {}]
  %s3 = inlined_call_operand.vmem [shape: f32[16,4], index: 3, kind: input, shape index: {}]
  %s4 = inlined_call_operand.vmem [shape: f32[4,16], index: 4, kind: input, shape index: {}]
  %s5 = inlined_call_operand.hbm [shape: f32[2,3,16,16], index: 5, kind: output, shape index: {}]
  %s6 = sld [smem:[#allocation0]]
  $region65: #{huggingface_wrapper_forward.1} parent=0
    _
  %s8 = ssub.s32 1, %s6
  %s9 = scalar_select 0, %s8, %s6
  $region1: #{huggingface_wrapper_forward.1} parent=0
    #allocation3 [shape = 'u8[1024]{0}', space=smem, size = 0x400, scoped, tag = 'input window, operand 0, single buffered']
    #allocation4 [shape = 's32[2]{0}', space=sflag, size = 0x8, scoped, tag = 'scoped memory for huggingface_wrapper_forward.1']
    #allocation5 [shape = 's32[2]{0}', space=sflag, size = 0x8, scoped, tag = 'scoped memory for huggingface_wrapper_forward.1']
    #allocation6 [shape = 'u8[512]{0}', space=smem, size = 0x200, scoped, tag = 'input window, operand 1, single buffered']
    #allocation7 [shape = 's32[1]{0}', space=sflag, size = 0x4, scoped, tag = 'scoped memory for huggingface_wrapper_forward.1']
    #allocation8 [shape = 'u8[49152]{0}', space=vmem, size = 0xc000, scoped, tag = 'output window, operand 0']
    %10 = vsyncpa [#allocation5], 0
    %11 = vsyncpa [#allocation7], 0
    %12 = vsyncpa [#allocation4], 0
    %s13 = scalar_lea.sflag [#allocation4], 1
    %14 = vsyncpa %s13, 0
    loop: start=0, step=1, limit=4
    $region2: #{huggingface_wrapper_forward.1} parent=1 // loop_pre_header
      _
    $region3: #{huggingface_wrapper_forward.1} parent=1 // loop_header
      %s16 = sphi 0, %s20
      %p17 = scmp.ge.s32.totalorder %s16, 4
      %s23 = sphi 0, %s35
      %s24 = sphi 0, %s31
      %s25 = sphi 0, %s23
      %s26 = sphi 0, %s24
      %s27 = sphi 0, %s25
      %s28 = sphi 0, %s26
      %s36 = sphi 0, %s36
      %s38 = sphi 0, %s36
      %s39 = sphi 0, %s38
      %s53 = sphi 0, %s39
      %s57 = sphi 0, %s57
      %s59 = sphi 0, %s57
      %s60 = sphi 0, %s59
      %s74 = sphi 0, %s60
      %s80 = sphi 0, %s82
      %s83 = sphi 0, %s80
      %s84 = sphi 0, %s83
      %s100 = sphi 0, %s84
      %s106 = sphi 0, %s108
      %s109 = sphi 0, %s106
      %s110 = sphi 0, %s109
      %s126 = sphi 0, %s110
      %s130 = sphi 0, %s130
      %s132 = sphi 0, %s130
      %s133 = sphi 0, %s132
      %s147 = sphi 0, %s133
      %s155 = sphi 0, %s157
      %s158 = sphi 0, %s155
      %s159 = sphi 0, %s158
      %s175 = sphi 0, %s159
    $region4: #{huggingface_wrapper_forward.1} parent=1 // loop_header_branch
      %19 = sbr.rel (%p17) target = $region8
    $region5: #{huggingface_wrapper_forward.1} parent=1 // loop_body
      %s21 = ssub.s32 %s16, 1
      %s22 = ssub.s32 %s16, 2
      %s29 = sadd.s32 1, %s24
      %p30 = scmp.ge.s32.totalorder %s29, 1
      %s31 = scalar_select %p30, 0, %s29
      %s32 = sadd.s32 1, %s23
      %s33 = scalar_select %p30, %s32, %s23
      %p34 = scmp.ge.s32.totalorder %s33, 2
      %s35 = scalar_select %p34, 0, %s33
      %s37 = sadd.s32 %s36, 1
      %p40 = scmp.eq.s32.totalorder %s16, 1
      %p41 = scmp.ne.s32.totalorder %s36, %s38
      %p42 = scmp.eq.s32.totalorder %s16, 0
      %p43 = por %p41, %p42
      %p44 = scmp.ne.s32.totalorder %s36, %s38
      %p45 = scmp.eq.s32.totalorder %s21, 1
      %p46 = por %p44, %p45
      %p47 = scmp.ne.s32.totalorder %s38, %s39
      %p48 = scmp.eq.s32.totalorder %s21, 0
      %p49 = por %p47, %p48
      %p50 = scmp.ne.s32.totalorder %s38, %s39
      %p51 = scmp.eq.s32.totalorder %s22, 1
      %p52 = por %p50, %p51
      %p54 = scmp.ne.s32.totalorder %s39, %s53
      %p55 = scmp.eq.s32.totalorder %s22, 0
      %p56 = por %p54, %p55
      %s58 = sadd.s32 %s57, 1
      %p61 = scmp.eq.s32.totalorder %s16, 1
      %p62 = scmp.ne.s32.totalorder %s57, %s59
      %p63 = scmp.eq.s32.totalorder %s16, 0
      %p64 = por %p62, %p63
      %p65 = scmp.ne.s32.totalorder %s57, %s59
      %p66 = scmp.eq.s32.totalorder %s21, 1
      %p67 = por %p65, %p66
      %p68 = scmp.ne.s32.totalorder %s59, %s60
      %p69 = scmp.eq.s32.totalorder %s21, 0
      %p70 = por %p68, %p69
      %p71 = scmp.ne.s32.totalorder %s59, %s60
      %p72 = scmp.eq.s32.totalorder %s22, 1
      %p73 = por %p71, %p72
      %p75 = scmp.ne.s32.totalorder %s60, %s74
      %p76 = scmp.eq.s32.totalorder %s22, 0
      %p77 = por %p75, %p76
      %s78 = ssub.s32 %s23, %s35
      %p79 = scmp.eq.s32.totalorder %s78, 0
      %s81 = sadd.s32 %s80, 1
      %s82 = scalar_select %p79, %s80, %s81
      %p85 = pneg %p79
      %p86 = scmp.eq.s32.totalorder %s16, 1
      %p87 = por %p85, %p86
      %p88 = scmp.ne.s32.totalorder %s80, %s83
      %p89 = scmp.eq.s32.totalorder %s16, 0
      %p90 = por %p88, %p89
      %p91 = scmp.ne.s32.totalorder %s80, %s83
      %p92 = scmp.eq.s32.totalorder %s21, 1
      %p93 = por %p91, %p92
      %p94 = scmp.ne.s32.totalorder %s83, %s84
      %p95 = scmp.eq.s32.totalorder %s21, 0
      %p96 = por %p94, %p95
      %p97 = scmp.ne.s32.totalorder %s83, %s84
      %p98 = scmp.eq.s32.totalorder %s22, 1
      %p99 = por %p97, %p98
      %p101 = scmp.ne.s32.totalorder %s84, %s100
      %p102 = scmp.eq.s32.totalorder %s22, 0
      %p103 = por %p101, %p102
      %s104 = ssub.s32 %s24, %s31
      %p105 = scmp.eq.s32.totalorder %s104, 0
      %s107 = sadd.s32 %s106, 1
      %s108 = scalar_select %p105, %s106, %s107
      %p111 = pneg %p105
      %p112 = scmp.eq.s32.totalorder %s16, 1
      %p113 = por %p111, %p112
      %p114 = scmp.ne.s32.totalorder %s106, %s109
      %p115 = scmp.eq.s32.totalorder %s16, 0
      %p116 = por %p114, %p115
      %p117 = scmp.ne.s32.totalorder %s106, %s109
      %p118 = scmp.eq.s32.totalorder %s21, 1
      %p119 = por %p117, %p118
      %p120 = scmp.ne.s32.totalorder %s109, %s110
      %p121 = scmp.eq.s32.totalorder %s21, 0
      %p122 = por %p120, %p121
      %p123 = scmp.ne.s32.totalorder %s109, %s110
      %p124 = scmp.eq.s32.totalorder %s22, 1
      %p125 = por %p123, %p124
      %p127 = scmp.ne.s32.totalorder %s110, %s126
      %p128 = scmp.eq.s32.totalorder %s22, 0
      %p129 = por %p127, %p128
      %s131 = sadd.s32 %s130, 1
      %p134 = scmp.eq.s32.totalorder %s16, 1
      %p135 = scmp.ne.s32.totalorder %s130, %s132
      %p136 = scmp.eq.s32.totalorder %s16, 0
      %p137 = por %p135, %p136
      %p138 = scmp.ne.s32.totalorder %s130, %s132
      %p139 = scmp.eq.s32.totalorder %s21, 1
      %p140 = por %p138, %p139
      %p141 = scmp.ne.s32.totalorder %s132, %s133
      %p142 = scmp.eq.s32.totalorder %s21, 0
      %p143 = por %p141, %p142
      %p144 = scmp.ne.s32.totalorder %s132, %s133
      %p145 = scmp.eq.s32.totalorder %s22, 1
      %p146 = por %p144, %p145
      %p148 = scmp.ne.s32.totalorder %s133, %s147
      %p149 = scmp.eq.s32.totalorder %s22, 0
      %p150 = por %p148, %p149
      %s151 = ssub.s32 %s23, %s35
      %s152 = ssub.s32 %s24, %s31
      %s153 = sor.u32 %s151, %s152
      %p154 = scmp.eq.s32.totalorder %s153, 0
      %s156 = sadd.s32 %s155, 1
      %s157 = scalar_select %p154, %s155, %s156
      %p160 = pneg %p154
      %p161 = scmp.eq.s32.totalorder %s16, 1
      %p162 = por %p160, %p161
      %p163 = scmp.ne.s32.totalorder %s155, %s158
      %p164 = scmp.eq.s32.totalorder %s16, 0
      %p165 = por %p163, %p164
      %p166 = scmp.ne.s32.totalorder %s155, %s158
      %p167 = scmp.eq.s32.totalorder %s21, 1
      %p168 = por %p166, %p167
      %p169 = scmp.ne.s32.totalorder %s158, %s159
      %p170 = scmp.eq.s32.totalorder %s21, 0
      %p171 = por %p169, %p170
      %p172 = scmp.ne.s32.totalorder %s158, %s159
      %p173 = scmp.eq.s32.totalorder %s22, 1
      %p174 = por %p172, %p173
      %p176 = scmp.ne.s32.totalorder %s159, %s175
      %p177 = scmp.eq.s32.totalorder %s22, 0
      %p178 = por %p176, %p177
      %p179 = scmp.le.s32.totalorder 1, %s16
      %p180 = scmp.lt.s32.totalorder %s16, 3
      %p181 = pnand %p179, %p180
      %p182 = pneg %p181
      // Predicated region
      $region9: #{huggingface_wrapper_forward.1} parent=5 // pred_check
        _
      $region10: #{huggingface_wrapper_forward.1} parent=5 // pred_check_branch
        %184 = sbr.rel (%p181) target = $region12
      $region11: #{huggingface_wrapper_forward.1} parent=5 // pred_region
        %s185 = ssub.s32 %s16, 1
        // Predicated region
        $region13: #{huggingface_wrapper_forward.1} parent=11 // pred_check
          %p186 = pneg %p49
        $region14: #{huggingface_wrapper_forward.1} parent=11 // pred_check_branch
          %188 = sbr.rel (%p186) target = $region16
        $region15: #{huggingface_wrapper_forward.1} parent=11 // pred_region
          %s190 = ssub.s32 32, 32
          %191 = vsyncadd [#allocation5], %s190
          %s193 = sshll.u32 %s0, 4
          %s194 = int_to_ptr.vmem [resolvable:$true] %s193
          %196 = dma.vmem_to_smem %s194, 32, [#allocation3], [#allocation5]
        $region16: #{huggingface_wrapper_forward.1} parent=11 // pred_fallthru
          _
        // Predicated region
        $region17: #{huggingface_wrapper_forward.1} parent=11 // pred_check
          %p197 = pneg %p70
        $region18: #{huggingface_wrapper_forward.1} parent=11 // pred_check_branch
          %199 = sbr.rel (%p197) target = $region20
        $region19: #{huggingface_wrapper_forward.1} parent=11 // pred_region
          %s201 = ssub.s32 16, 16
          %202 = vsyncadd [#allocation7], %s201
          %s204 = sshll.u32 %s1, 4
          %s205 = int_to_ptr.vmem [resolvable:$true] %s204
          %207 = dma.vmem_to_smem %s205, 16, [#allocation6], [#allocation7]
        $region20: #{huggingface_wrapper_forward.1} parent=11 // pred_fallthru
          _
        // Predicated region
        $region21: #{huggingface_wrapper_forward.1} parent=11 // pred_check
          %p208 = pneg %p122
        $region22: #{huggingface_wrapper_forward.1} parent=11 // pred_check_branch
          %210 = sbr.rel (%p208) target = $region24
        $region23: #{huggingface_wrapper_forward.1} parent=11 // pred_region
          %s211 = smul.u32 2, %s26
          %p212 = scmp.lt.s32.totalorder %s211, 1
          %s213 = scalar_select %p212, %s211, 1
          %s214 = smul.addr %s213, 8
          %s215 = scalar_lea.vmem %s3, %s214
          %s216 = smul.u32 2, %s26
        $region24: #{huggingface_wrapper_forward.1} parent=11 // pred_fallthru
          _
        // Predicated region
        $region25: #{huggingface_wrapper_forward.1} parent=11 // pred_check
          %p217 = pneg %p143
        $region26: #{huggingface_wrapper_forward.1} parent=11 // pred_check_branch
          %219 = sbr.rel (%p217) target = $region28
        $region27: #{huggingface_wrapper_forward.1} parent=11 // pred_region
          _
        $region28: #{huggingface_wrapper_forward.1} parent=11 // pred_fallthru
          _
      $region12: #{huggingface_wrapper_forward.1} parent=5 // pred_fallthru
        _
      %p220 = scmp.lt.s32.totalorder %s16, 2
      // Predicated region
      $region29: #{huggingface_wrapper_forward.1} parent=5 // pred_check
        %p221 = pneg %p220
      $region30: #{huggingface_wrapper_forward.1} parent=5 // pred_check_branch
        %223 = sbr.rel (%p221) target = $region32
      $region31: #{huggingface_wrapper_forward.1} parent=5 // pred_region
        // Predicated region
        $region33: #{huggingface_wrapper_forward.1} parent=31 // pred_check
          %p224 = pneg %p90
        $region34: #{huggingface_wrapper_forward.1} parent=31 // pred_check_branch
          %226 = sbr.rel (%p224) target = $region36
        $region35: #{huggingface_wrapper_forward.1} parent=31 // pred_region
          %p227 = scmp.lt.s32.totalorder %s23, 1
          %s228 = scalar_select %p227, %s23, 1
          %s229 = smul.addr %s228, 64
          %s230 = smul.addr %s229, 4
          %s231 = scalar_lea.vmem %s2, %s230
        $region36: #{huggingface_wrapper_forward.1} parent=31 // pred_fallthru
          _
      $region32: #{huggingface_wrapper_forward.1} parent=5 // pred_fallthru
        _
      %p232 = scmp.le.s32.totalorder 1, %s16
      %p233 = scmp.lt.s32.totalorder %s16, 3
      %p234 = pnand %p232, %p233
      %p235 = pneg %p234
      // Predicated region
      $region37: #{huggingface_wrapper_forward.1} parent=5 // pred_check
        _
      $region38: #{huggingface_wrapper_forward.1} parent=5 // pred_check_branch
        %237 = sbr.rel (%p234) target = $region40
      $region39: #{huggingface_wrapper_forward.1} parent=5 // pred_region
        %s238 = ssub.s32 %s16, 1
        // Predicated region
        $region41: #{huggingface_wrapper_forward.1} parent=39 // pred_check
          %p239 = pneg %p49
        $region42: #{huggingface_wrapper_forward.1} parent=39 // pred_check_branch
          %241 = sbr.rel (%p239) target = $region44
        $region43: #{huggingface_wrapper_forward.1} parent=39 // pred_region
          %242 = dma.done [#allocation5], 32
        $region44: #{huggingface_wrapper_forward.1} parent=39 // pred_fallthru
          _
        // Predicated region
        $region45: #{huggingface_wrapper_forward.1} parent=39 // pred_check
          %p243 = pneg %p70
        $region46: #{huggingface_wrapper_forward.1} parent=39 // pred_check_branch
          %245 = sbr.rel (%p243) target = $region48
        $region47: #{huggingface_wrapper_forward.1} parent=39 // pred_region
          %246 = dma.done [#allocation7], 16
        $region48: #{huggingface_wrapper_forward.1} parent=39 // pred_fallthru
          _
        %247 = sfence
        %p248 = pneg %p49
        %p249 = pneg %p46
        %p250 = pneg %p70
        %p251 = pneg %p67
        %p252 = scmp.lt.s32.totalorder %s25, 1
        %s253 = scalar_select %p252, %s25, 1
        %s254 = smul.addr %s253, 64
        %s255 = smul.addr %s254, 4
        %s256 = scalar_lea.vmem %s2, %s255
        %p257 = pneg %p96
        %p258 = pneg %p93
        %s259 = smul.u32 2, %s26
        %p260 = scmp.lt.s32.totalorder %s259, 1
        %s261 = scalar_select %p260, %s259, 1
        %s262 = smul.addr %s261, 8
        %s263 = scalar_lea.vmem %s3, %s262
        %p264 = pneg %p122
        %p265 = pneg %p119
        %p266 = pneg %p143
        %p267 = pneg %p140
        %p268 = pneg %p171
        %p269 = pneg %p168
        %s270 = sand.u32 %s158, 1
        %s271 = scalar_lea.sflag [#allocation4], %s270
        %s272 = sand.u32 %s158, 1
        %s273 = smul.addr %s272, 48
        %s274 = scalar_lea.vmem [#allocation8], %s273
        %p275 = scmp.lt.s32.totalorder %s25, 1
        %s276 = scalar_select %p275, %s25, 1
        %s277 = smul.addr %s276, 64
        %s278 = smul.addr %s277, 4
        %s279 = scalar_lea.vmem %s2, %s278
        %s280 = smul.u32 2, %s26
        %p281 = scmp.lt.s32.totalorder %s280, 1
        %s282 = scalar_select %p281, %s280, 1
        %s283 = smul.addr %s282, 8
        %s284 = scalar_lea.vmem %s3, %s283
        %s285 = smul.u32 2, %s26
        %s286 = smul.u32 2, %s26
        %p287 = scmp.eq.s32.totalorder %s26, 0
        // Predicated region
        $region49: #{huggingface_wrapper_forward.1} parent=39 // pred_check
          %p288 = pneg %p287
        $region50: #{huggingface_wrapper_forward.1} parent=39 // pred_check_branch
          %290 = sbr.rel (%p288) target = $region52
        $region51: #{huggingface_wrapper_forward.1} parent=39 // pred_region
          %s291 = sld [smem:[#allocation3]]
          %v292 = vld [vmem:[%s279] sm:$0xf]
          %v293 = vstv %s291
          %v294 = vmul.f32 %v293, %v292
          %v295 = vadd.f32 %v294, 0.0
          %s296 = sld [smem:[#allocation3 + $0x1]]
          %s297 = scalar_lea.vmem %s279, 4
          %v298 = vld [vmem:[%s297] sm:$0xf]
          %v299 = vstv %s296
          %v300 = vmul.f32 %v299, %v298
          %v301 = vadd.f32 %v295, %v300
          %s302 = sld [smem:[#allocation3 + $0x2]]
          %s303 = scalar_lea.vmem %s279, 8
          %v304 = vld [vmem:[%s303] sm:$0xf]
          %v305 = vstv %s302
          %v306 = vmul.f32 %v305, %v304
          %v307 = vadd.f32 %v301, %v306
          %s308 = sld [smem:[#allocation3 + $0x3]]
          %s309 = scalar_lea.vmem %s279, 12
          %v310 = vld [vmem:[%s309] sm:$0xf]
          %v311 = vstv %s308
          %v312 = vmul.f32 %v311, %v310
          %v313 = vadd.f32 %v307, %v312
          %s314 = sld [smem:[#allocation3 + $0x4]]
          %s315 = scalar_lea.vmem %s279, 16
          %v316 = vld [vmem:[%s315] sm:$0xf]
          %v317 = vstv %s314
          %v318 = vmul.f32 %v317, %v316
          %v319 = vadd.f32 %v313, %v318
          %s320 = sld [smem:[#allocation3 + $0x5]]
          %s321 = scalar_lea.vmem %s279, 20
          %v322 = vld [vmem:[%s321] sm:$0xf]
          %v323 = vstv %s320
          %v324 = vmul.f32 %v323, %v322
          %v325 = vadd.f32 %v319, %v324
          %s326 = sld [smem:[#allocation3 + $0x6]]
          %s327 = scalar_lea.vmem %s279, 24
          %v328 = vld [vmem:[%s327] sm:$0xf]
          %v329 = vstv %s326
          %v330 = vmul.f32 %v329, %v328
          %v331 = vadd.f32 %v325, %v330
          %s332 = sld [smem:[#allocation3 + $0x7]]
          %s333 = scalar_lea.vmem %s279, 28
          %v334 = vld [vmem:[%s333] sm:$0xf]
          %v335 = vstv %s332
          %v336 = vmul.f32 %v335, %v334
          %v337 = vadd.f32 %v331, %v336
          %s338 = sld [smem:[#allocation3 + $0x8]]
          %s339 = scalar_lea.vmem %s279, 32
          %v340 = vld [vmem:[%s339] sm:$0xf]
          %v341 = vstv %s338
          %v342 = vmul.f32 %v341, %v340
          %v343 = vadd.f32 %v337, %v342
          %s344 = sld [smem:[#allocation3 + $0x9]]
          %s345 = scalar_lea.vmem %s279, 36
          %v346 = vld [vmem:[%s345] sm:$0xf]
          %v347 = vstv %s344
          %v348 = vmul.f32 %v347, %v346
          %v349 = vadd.f32 %v343, %v348
          %s350 = sld [smem:[#allocation3 + $0xa]]
          %s351 = scalar_lea.vmem %s279, 40
          %v352 = vld [vmem:[%s351] sm:$0xf]
          %v353 = vstv %s350
          %v354 = vmul.f32 %v353, %v352
          %v355 = vadd.f32 %v349, %v354
          %s356 = sld [smem:[#allocation3 + $0xb]]
          %s357 = scalar_lea.vmem %s279, 44
          %v358 = vld [vmem:[%s357] sm:$0xf]
          %v359 = vstv %s356
          %v360 = vmul.f32 %v359, %v358
          %v361 = vadd.f32 %v355, %v360
          %s362 = sld [smem:[#allocation3 + $0xc]]
          %s363 = scalar_lea.vmem %s279, 48
          %v364 = vld [vmem:[%s363] sm:$0xf]
          %v365 = vstv %s362
          %v366 = vmul.f32 %v365, %v364
          %v367 = vadd.f32 %v361, %v366
          %s368 = sld [smem:[#allocation3 + $0xd]]
          %s369 = scalar_lea.vmem %s279, 52
          %v370 = vld [vmem:[%s369] sm:$0xf]
          %v371 = vstv %s368
          %v372 = vmul.f32 %v371, %v370
          %v373 = vadd.f32 %v367, %v372
          %s374 = sld [smem:[#allocation3 + $0xe]]
          %s375 = scalar_lea.vmem %s279, 56
          %v376 = vld [vmem:[%s375] sm:$0xf]
          %v377 = vstv %s374
          %v378 = vmul.f32 %v377, %v376
          %v379 = vadd.f32 %v373, %v378
          %s380 = sld [smem:[#allocation3 + $0xf]]
          %s381 = scalar_lea.vmem %s279, 60
          %v382 = vld [vmem:[%s381] sm:$0xf]
          %v383 = vstv %s380
          %v384 = vmul.f32 %v383, %v382
          %v385 = vadd.f32 %v379, %v384
          %s386 = sld [smem:[#allocation3 + $0x10]]
          %s387 = scalar_lea.vmem %s279, 64
          %v388 = vld [vmem:[%s387] sm:$0xf]
          %v389 = vstv %s386
          %v390 = vmul.f32 %v389, %v388
          %v391 = vadd.f32 %v385, %v390
          %s392 = sld [smem:[#allocation3 + $0x11]]
          %s393 = scalar_lea.vmem %s279, 68
          %v394 = vld [vmem:[%s393] sm:$0xf]
          %v395 = vstv %s392
          %v396 = vmul.f32 %v395, %v394
          %v397 = vadd.f32 %v391, %v396
          %s398 = sld [smem:[#allocation3 + $0x12]]
          %s399 = scalar_lea.vmem %s279, 72
          %v400 = vld [vmem:[%s399] sm:$0xf]
          %v401 = vstv %s398
          %v402 = vmul.f32 %v401, %v400
          %v403 = vadd.f32 %v397, %v402
          %s404 = sld [smem:[#allocation3 + $0x13]]
          %s405 = scalar_lea.vmem %s279, 76
          %v406 = vld [vmem:[%s405] sm:$0xf]
          %v407 = vstv %s404
          %v408 = vmul.f32 %v407, %v406
          %v409 = vadd.f32 %v403, %v408
          %s410 = sld [smem:[#allocation3 + $0x14]]
          %s411 = scalar_lea.vmem %s279, 80
          %v412 = vld [vmem:[%s411] sm:$0xf]
          %v413 = vstv %s410
          %v414 = vmul.f32 %v413, %v412
          %v415 = vadd.f32 %v409, %v414
          %s416 = sld [smem:[#allocation3 + $0x15]]
          %s417 = scalar_lea.vmem %s279, 84
          %v418 = vld [vmem:[%s417] sm:$0xf]
          %v419 = vstv %s416
          %v420 = vmul.f32 %v419, %v418
          %v421 = vadd.f32 %v415, %v420
          %s422 = sld [smem:[#allocation3 + $0x16]]
          %s423 = scalar_lea.vmem %s279, 88
          %v424 = vld [vmem:[%s423] sm:$0xf]
          %v425 = vstv %s422
          %v426 = vmul.f32 %v425, %v424
          %v427 = vadd.f32 %v421, %v426
          %s428 = sld [smem:[#allocation3 + $0x17]]
          %s429 = scalar_lea.vmem %s279, 92
          %v430 = vld [vmem:[%s429] sm:$0xf]
          %v431 = vstv %s428
          %v432 = vmul.f32 %v431, %v430
          %v433 = vadd.f32 %v427, %v432
          %s434 = sld [smem:[#allocation3 + $0x18]]
          %s435 = scalar_lea.vmem %s279, 96
          %v436 = vld [vmem:[%s435] sm:$0xf]
          %v437 = vstv %s434
          %v438 = vmul.f32 %v437, %v436
          %v439 = vadd.f32 %v433, %v438
          %s440 = sld [smem:[#allocation3 + $0x19]]
          %s441 = scalar_lea.vmem %s279, 100
          %v442 = vld [vmem:[%s441] sm:$0xf]
          %v443 = vstv %s440
          %v444 = vmul.f32 %v443, %v442
          %v445 = vadd.f32 %v439, %v444
          %s446 = sld [smem:[#allocation3 + $0x1a]]
          %s447 = scalar_lea.vmem %s279, 104
          %v448 = vld [vmem:[%s447] sm:$0xf]
          %v449 = vstv %s446
          %v450 = vmul.f32 %v449, %v448
          %v451 = vadd.f32 %v445, %v450
          %s452 = sld [smem:[#allocation3 + $0x1b]]
          %s453 = scalar_lea.vmem %s279, 108
          %v454 = vld [vmem:[%s453] sm:$0xf]
          %v455 = vstv %s452
          %v456 = vmul.f32 %v455, %v454
          %v457 = vadd.f32 %v451, %v456
          %s458 = sld [smem:[#allocation3 + $0x1c]]
          %s459 = scalar_lea.vmem %s279, 112
          %v460 = vld [vmem:[%s459] sm:$0xf]
          %v461 = vstv %s458
          %v462 = vmul.f32 %v461, %v460
          %v463 = vadd.f32 %v457, %v462
          %s464 = sld [smem:[#allocation3 + $0x1d]]
          %s465 = scalar_lea.vmem %s279, 116
          %v466 = vld [vmem:[%s465] sm:$0xf]
          %v467 = vstv %s464
          %v468 = vmul.f32 %v467, %v466
          %v469 = vadd.f32 %v463, %v468
          %s470 = sld [smem:[#allocation3 + $0x1e]]
          %s471 = scalar_lea.vmem %s279, 120
          %v472 = vld [vmem:[%s471] sm:$0xf]
          %v473 = vstv %s470
          %v474 = vmul.f32 %v473, %v472
          %v475 = vadd.f32 %v469, %v474
          %s476 = sld [smem:[#allocation3 + $0x1f]]
          %s477 = scalar_lea.vmem %s279, 124
          %v478 = vld [vmem:[%s477] sm:$0xf]
          %v479 = vstv %s476
          %v480 = vmul.f32 %v479, %v478
          %v481 = vadd.f32 %v475, %v480
          %s482 = sld [smem:[#allocation3 + $0x20]]
          %s483 = scalar_lea.vmem %s279, 128
          %v484 = vld [vmem:[%s483] sm:$0xf]
          %v485 = vstv %s482
          %v486 = vmul.f32 %v485, %v484
          %v487 = vadd.f32 %v481, %v486
          %s488 = sld [smem:[#allocation3 + $0x21]]
          %s489 = scalar_lea.vmem %s279, 132
          %v490 = vld [vmem:[%s489] sm:$0xf]
          %v491 = vstv %s488
          %v492 = vmul.f32 %v491, %v490
          %v493 = vadd.f32 %v487, %v492
          %s494 = sld [smem:[#allocation3 + $0x22]]
          %s495 = scalar_lea.vmem %s279, 136
          %v496 = vld [vmem:[%s495] sm:$0xf]
          %v497 = vstv %s494
          %v498 = vmul.f32 %v497, %v496
          %v499 = vadd.f32 %v493, %v498
          %s500 = sld [smem:[#allocation3 + $0x23]]
          %s501 = scalar_lea.vmem %s279, 140
          %v502 = vld [vmem:[%s501] sm:$0xf]
          %v503 = vstv %s500
          %v504 = vmul.f32 %v503, %v502
          %v505 = vadd.f32 %v499, %v504
          %s506 = sld [smem:[#allocation3 + $0x24]]
          %s507 = scalar_lea.vmem %s279, 144
          %v508 = vld [vmem:[%s507] sm:$0xf]
          %v509 = vstv %s506
          %v510 = vmul.f32 %v509, %v508
          %v511 = vadd.f32 %v505, %v510
          %s512 = sld [smem:[#allocation3 + $0x25]]
          %s513 = scalar_lea.vmem %s279, 148
          %v514 = vld [vmem:[%s513] sm:$0xf]
          %v515 = vstv %s512
          %v516 = vmul.f32 %v515, %v514
          %v517 = vadd.f32 %v511, %v516
          %s518 = sld [smem:[#allocation3 + $0x26]]
          %s519 = scalar_lea.vmem %s279, 152
          %v520 = vld [vmem:[%s519] sm:$0xf]
          %v521 = vstv %s518
          %v522 = vmul.f32 %v521, %v520
          %v523 = vadd.f32 %v517, %v522
          %s524 = sld [smem:[#allocation3 + $0x27]]
          %s525 = scalar_lea.vmem %s279, 156
          %v526 = vld [vmem:[%s525] sm:$0xf]
          %v527 = vstv %s524
          %v528 = vmul.f32 %v527, %v526
          %v529 = vadd.f32 %v523, %v528
          %s530 = sld [smem:[#allocation3 + $0x28]]
          %s531 = scalar_lea.vmem %s279, 160
          %v532 = vld [vmem:[%s531] sm:$0xf]
          %v533 = vstv %s530
          %v534 = vmul.f32 %v533, %v532
          %v535 = vadd.f32 %v529, %v534
          %s536 = sld [smem:[#allocation3 + $0x29]]
          %s537 = scalar_lea.vmem %s279, 164
          %v538 = vld [vmem:[%s537] sm:$0xf]
          %v539 = vstv %s536
          %v540 = vmul.f32 %v539, %v538
          %v541 = vadd.f32 %v535, %v540
          %s542 = sld [smem:[#allocation3 + $0x2a]]
          %s543 = scalar_lea.vmem %s279, 168
          %v544 = vld [vmem:[%s543] sm:$0xf]
          %v545 = vstv %s542
          %v546 = vmul.f32 %v545, %v544
          %v547 = vadd.f32 %v541, %v546
          %s548 = sld [smem:[#allocation3 + $0x2b]]
          %s549 = scalar_lea.vmem %s279, 172
          %v550 = vld [vmem:[%s549] sm:$0xf]
          %v551 = vstv %s548
          %v552 = vmul.f32 %v551, %v550
          %v553 = vadd.f32 %v547, %v552
          %s554 = sld [smem:[#allocation3 + $0x2c]]
          %s555 = scalar_lea.vmem %s279, 176
          %v556 = vld [vmem:[%s555] sm:$0xf]
          %v557 = vstv %s554
          %v558 = vmul.f32 %v557, %v556
          %v559 = vadd.f32 %v553, %v558
          %s560 = sld [smem:[#allocation3 + $0x2d]]
          %s561 = scalar_lea.vmem %s279, 180
          %v562 = vld [vmem:[%s561] sm:$0xf]
          %v563 = vstv %s560
          %v564 = vmul.f32 %v563, %v562
          %v565 = vadd.f32 %v559, %v564
          %s566 = sld [smem:[#allocation3 + $0x2e]]
          %s567 = scalar_lea.vmem %s279, 184
          %v568 = vld [vmem:[%s567] sm:$0xf]
          %v569 = vstv %s566
          %v570 = vmul.f32 %v569, %v568
          %v571 = vadd.f32 %v565, %v570
          %s572 = sld [smem:[#allocation3 + $0x2f]]
          %s573 = scalar_lea.vmem %s279, 188
          %v574 = vld [vmem:[%s573] sm:$0xf]
          %v575 = vstv %s572
          %v576 = vmul.f32 %v575, %v574
          %v577 = vadd.f32 %v571, %v576
          %s578 = sld [smem:[#allocation3 + $0x30]]
          %s579 = scalar_lea.vmem %s279, 192
          %v580 = vld [vmem:[%s579] sm:$0xf]
          %v581 = vstv %s578
          %v582 = vmul.f32 %v581, %v580
          %v583 = vadd.f32 %v577, %v582
          %s584 = sld [smem:[#allocation3 + $0x31]]
          %s585 = scalar_lea.vmem %s279, 196
          %v586 = vld [vmem:[%s585] sm:$0xf]
          %v587 = vstv %s584
          %v588 = vmul.f32 %v587, %v586
          %v589 = vadd.f32 %v583, %v588
          %s590 = sld [smem:[#allocation3 + $0x32]]
          %s591 = scalar_lea.vmem %s279, 200
          %v592 = vld [vmem:[%s591] sm:$0xf]
          %v593 = vstv %s590
          %v594 = vmul.f32 %v593, %v592
          %v595 = vadd.f32 %v589, %v594
          %s596 = sld [smem:[#allocation3 + $0x33]]
          %s597 = scalar_lea.vmem %s279, 204
          %v598 = vld [vmem:[%s597] sm:$0xf]
          %v599 = vstv %s596
          %v600 = vmul.f32 %v599, %v598
          %v601 = vadd.f32 %v595, %v600
          %s602 = sld [smem:[#allocation3 + $0x34]]
          %s603 = scalar_lea.vmem %s279, 208
          %v604 = vld [vmem:[%s603] sm:$0xf]
          %v605 = vstv %s602
          %v606 = vmul.f32 %v605, %v604
          %v607 = vadd.f32 %v601, %v606
          %s608 = sld [smem:[#allocation3 + $0x35]]
          %s609 = scalar_lea.vmem %s279, 212
          %v610 = vld [vmem:[%s609] sm:$0xf]
          %v611 = vstv %s608
          %v612 = vmul.f32 %v611, %v610
          %v613 = vadd.f32 %v607, %v612
          %s614 = sld [smem:[#allocation3 + $0x36]]
          %s615 = scalar_lea.vmem %s279, 216
          %v616 = vld [vmem:[%s615] sm:$0xf]
          %v617 = vstv %s614
          %v618 = vmul.f32 %v617, %v616
          %v619 = vadd.f32 %v613, %v618
          %s620 = sld [smem:[#allocation3 + $0x37]]
          %s621 = scalar_lea.vmem %s279, 220
          %v622 = vld [vmem:[%s621] sm:$0xf]
          %v623 = vstv %s620
          %v624 = vmul.f32 %v623, %v622
          %v625 = vadd.f32 %v619, %v624
          %s626 = sld [smem:[#allocation3 + $0x38]]
          %s627 = scalar_lea.vmem %s279, 224
          %v628 = vld [vmem:[%s627] sm:$0xf]
          %v629 = vstv %s626
          %v630 = vmul.f32 %v629, %v628
          %v631 = vadd.f32 %v625, %v630
          %s632 = sld [smem:[#allocation3 + $0x39]]
          %s633 = scalar_lea.vmem %s279, 228
          %v634 = vld [vmem:[%s633] sm:$0xf]
          %v635 = vstv %s632
          %v636 = vmul.f32 %v635, %v634
          %v637 = vadd.f32 %v631, %v636
          %s638 = sld [smem:[#allocation3 + $0x3a]]
          %s639 = scalar_lea.vmem %s279, 232
          %v640 = vld [vmem:[%s639] sm:$0xf]
          %v641 = vstv %s638
          %v642 = vmul.f32 %v641, %v640
          %v643 = vadd.f32 %v637, %v642
          %s644 = sld [smem:[#allocation3 + $0x3b]]
          %s645 = scalar_lea.vmem %s279, 236
          %v646 = vld [vmem:[%s645] sm:$0xf]
          %v647 = vstv %s644
          %v648 = vmul.f32 %v647, %v646
          %v649 = vadd.f32 %v643, %v648
          %s650 = sld [smem:[#allocation3 + $0x3c]]
          %s651 = scalar_lea.vmem %s279, 240
          %v652 = vld [vmem:[%s651] sm:$0xf]
          %v653 = vstv %s650
          %v654 = vmul.f32 %v653, %v652
          %v655 = vadd.f32 %v649, %v654
          %s656 = sld [smem:[#allocation3 + $0x3d]]
          %s657 = scalar_lea.vmem %s279, 244
          %v658 = vld [vmem:[%s657] sm:$0xf]
          %v659 = vstv %s656
          %v660 = vmul.f32 %v659, %v658
          %v661 = vadd.f32 %v655, %v660
          %s662 = sld [smem:[#allocation3 + $0x3e]]
          %s663 = scalar_lea.vmem %s279, 248
          %v664 = vld [vmem:[%s663] sm:$0xf]
          %v665 = vstv %s662
          %v666 = vmul.f32 %v665, %v664
          %v667 = vadd.f32 %v661, %v666
          %s668 = sld [smem:[#allocation3 + $0x3f]]
          %s669 = scalar_lea.vmem %s279, 252
          %v670 = vld [vmem:[%s669] sm:$0xf]
          %v671 = vstv %s668
          %v672 = vmul.f32 %v671, %v670
          %v673 = vadd.f32 %v667, %v672
          %s674 = sld [smem:[#allocation6]]
          %v675 = vstv %s674
          %v676 = vadd.f32 %v673, %v675
          %vm677 = vcmask 27648
          %678 = vst.msk [vmem:[#allocation2] sm:$0xf] %vm677, %v676
          %s679 = sld [smem:[#allocation3 + $0x40]]
          %v680 = vld [vmem:[%s279] sm:$0xf]
          %v681 = vstv %s679
          %v682 = vmul.f32 %v681, %v680
          %v683 = vadd.f32 %v682, 0.0
          %s684 = sld [smem:[#allocation3 + $0x41]]
          %v685 = vld [vmem:[%s297] sm:$0xf]
          %v686 = vstv %s684
          %v687 = vmul.f32 %v686, %v685
          %v688 = vadd.f32 %v683, %v687
          %s689 = sld [smem:[#allocation3 + $0x42]]
          %v690 = vld [vmem:[%s303] sm:$0xf]
          %v691 = vstv %s689
          %v692 = vmul.f32 %v691, %v690
          %v693 = vadd.f32 %v688, %v692
          %s694 = sld [smem:[#allocation3 + $0x43]]
          %v695 = vld [vmem:[%s309] sm:$0xf]
          %v696 = vstv %s694
          %v697 = vmul.f32 %v696, %v695
          %v698 = vadd.f32 %v693, %v697
          %s699 = sld [smem:[#allocation3 + $0x44]]
          %v700 = vld [vmem:[%s315] sm:$0xf]
          %v701 = vstv %s699
          %v702 = vmul.f32 %v701, %v700
          %v703 = vadd.f32 %v698, %v702
          %s704 = sld [smem:[#allocation3 + $0x45]]
          %v705 = vld [vmem:[%s321] sm:$0xf]
          %v706 = vstv %s704
          %v707 = vmul.f32 %v706, %v705
          %v708 = vadd.f32 %v703, %v707
          %s709 = sld [smem:[#allocation3 + $0x46]]
          %v710 = vld [vmem:[%s327] sm:$0xf]
          %v711 = vstv %s709
          %v712 = vmul.f32 %v711, %v710
          %v713 = vadd.f32 %v708, %v712
          %s714 = sld [smem:[#allocation3 + $0x47]]
          %v715 = vld [vmem:[%s333] sm:$0xf]
          %v716 = vstv %s714
          %v717 = vmul.f32 %v716, %v715
          %v718 = vadd.f32 %v713, %v717
          %s719 = sld [smem:[#allocation3 + $0x48]]
          %v720 = vld [vmem:[%s339] sm:$0xf]
          %v721 = vstv %s719
          %v722 = vmul.f32 %v721, %v720
          %v723 = vadd.f32 %v718, %v722
          %s724 = sld [smem:[#allocation3 + $0x49]]
          %v725 = vld [vmem:[%s345] sm:$0xf]
          %v726 = vstv %s724
          %v727 = vmul.f32 %v726, %v725
          %v728 = vadd.f32 %v723, %v727
          %s729 = sld [smem:[#allocation3 + $0x4a]]
          %v730 = vld [vmem:[%s351] sm:$0xf]
          %v731 = vstv %s729
          %v732 = vmul.f32 %v731, %v730
          %v733 = vadd.f32 %v728, %v732
          %s734 = sld [smem:[#allocation3 + $0x4b]]
          %v735 = vld [vmem:[%s357] sm:$0xf]
          %v736 = vstv %s734
          %v737 = vmul.f32 %v736, %v735
          %v738 = vadd.f32 %v733, %v737
          %s739 = sld [smem:[#allocation3 + $0x4c]]
          %v740 = vld [vmem:[%s363] sm:$0xf]
          %v741 = vstv %s739
          %v742 = vmul.f32 %v741, %v740
          %v743 = vadd.f32 %v738, %v742
          %s744 = sld [smem:[#allocation3 + $0x4d]]
          %v745 = vld [vmem:[%s369] sm:$0xf]
          %v746 = vstv %s744
          %v747 = vmul.f32 %v746, %v745
          %v748 = vadd.f32 %v743, %v747
          %s749 = sld [smem:[#allocation3 + $0x4e]]
          %v750 = vld [vmem:[%s375] sm:$0xf]
          %v751 = vstv %s749
          %v752 = vmul.f32 %v751, %v750
          %v753 = vadd.f32 %v748, %v752
          %s754 = sld [smem:[#allocation3 + $0x4f]]
          %v755 = vld [vmem:[%s381] sm:$0xf]
          %v756 = vstv %s754
          %v757 = vmul.f32 %v756, %v755
          %v758 = vadd.f32 %v753, %v757
          %s759 = sld [smem:[#allocation3 + $0x50]]
          %v760 = vld [vmem:[%s387] sm:$0xf]
          %v761 = vstv %s759
          %v762 = vmul.f32 %v761, %v760
          %v763 = vadd.f32 %v758, %v762
          %s764 = sld [smem:[#allocation3 + $0x51]]
          %v765 = vld [vmem:[%s393] sm:$0xf]
          %v766 = vstv %s764
          %v767 = vmul.f32 %v766, %v765
          %v768 = vadd.f32 %v763, %v767
          %s769 = sld [smem:[#allocation3 + $0x52]]
          %v770 = vld [vmem:[%s399] sm:$0xf]
          %v771 = vstv %s769
          %v772 = vmul.f32 %v771, %v770
          %v773 = vadd.f32 %v768, %v772
          %s774 = sld [smem:[#allocation3 + $0x53]]
          %v775 = vld [vmem:[%s405] sm:$0xf]
          %v776 = vstv %s774
          %v777 = vmul.f32 %v776, %v775
          %v778 = vadd.f32 %v773, %v777
          %s779 = sld [smem:[#allocation3 + $0x54]]
          %v780 = vld [vmem:[%s411] sm:$0xf]
          %v781 = vstv %s779
          %v782 = vmul.f32 %v781, %v780
          %v783 = vadd.f32 %v778, %v782
          %s784 = sld [smem:[#allocation3 + $0x55]]
          %v785 = vld [vmem:[%s417] sm:$0xf]
          %v786 = vstv %s784
          %v787 = vmul.f32 %v786, %v785
          %v788 = vadd.f32 %v783, %v787
          %s789 = sld [smem:[#allocation3 + $0x56]]
          %v790 = vld [vmem:[%s423] sm:$0xf]
          %v791 = vstv %s789
          %v792 = vmul.f32 %v791, %v790
          %v793 = vadd.f32 %v788, %v792
          %s794 = sld [smem:[#allocation3 + $0x57]]
          %v795 = vld [vmem:[%s429] sm:$0xf]
          %v796 = vstv %s794
          %v797 = vmul.f32 %v796, %v795
          %v798 = vadd.f32 %v793, %v797
          %s799 = sld [smem:[#allocation3 + $0x58]]
          %v800 = vld [vmem:[%s435] sm:$0xf]
          %v801 = vstv %s799
          %v802 = vmul.f32 %v801, %v800
          %v803 = vadd.f32 %v798, %v802
          %s804 = sld [smem:[#allocation3 + $0x59]]
          %v805 = vld [vmem:[%s441] sm:$0xf]
          %v806 = vstv %s804
          %v807 = vmul.f32 %v806, %v805
          %v808 = vadd.f32 %v803, %v807
          %s809 = sld [smem:[#allocation3 + $0x5a]]
          %v810 = vld [vmem:[%s447] sm:$0xf]
          %v811 = vstv %s809
          %v812 = vmul.f32 %v811, %v810
          %v813 = vadd.f32 %v808, %v812
          %s814 = sld [smem:[#allocation3 + $0x5b]]
          %v815 = vld [vmem:[%s453] sm:$0xf]
          %v816 = vstv %s814
          %v817 = vmul.f32 %v816, %v815
          %v818 = vadd.f32 %v813, %v817
          %s819 = sld [smem:[#allocation3 + $0x5c]]
          %v820 = vld [vmem:[%s459] sm:$0xf]
          %v821 = vstv %s819
          %v822 = vmul.f32 %v821, %v820
          %v823 = vadd.f32 %v818, %v822
          %s824 = sld [smem:[#allocation3 + $0x5d]]
          %v825 = vld [vmem:[%s465] sm:$0xf]
          %v826 = vstv %s824
          %v827 = vmul.f32 %v826, %v825
          %v828 = vadd.f32 %v823, %v827
          %s829 = sld [smem:[#allocation3 + $0x5e]]
          %v830 = vld [vmem:[%s471] sm:$0xf]
          %v831 = vstv %s829
          %v832 = vmul.f32 %v831, %v830
          %v833 = vadd.f32 %v828, %v832
          %s834 = sld [smem:[#allocation3 + $0x5f]]
          %v835 = vld [vmem:[%s477] sm:$0xf]
          %v836 = vstv %s834
          %v837 = vmul.f32 %v836, %v835
          %v838 = vadd.f32 %v833, %v837
          %s839 = sld [smem:[#allocation3 + $0x60]]
          %v840 = vld [vmem:[%s483] sm:$0xf]
          %v841 = vstv %s839
          %v842 = vmul.f32 %v841, %v840
          %v843 = vadd.f32 %v838, %v842
          %s844 = sld [smem:[#allocation3 + $0x61]]
          %v845 = vld [vmem:[%s489] sm:$0xf]
          %v846 = vstv %s844
          %v847 = vmul.f32 %v846, %v845
          %v848 = vadd.f32 %v843, %v847
          %s849 = sld [smem:[#allocation3 + $0x62]]
          %v850 = vld [vmem:[%s495] sm:$0xf]
          %v851 = vstv %s849
          %v852 = vmul.f32 %v851, %v850
          %v853 = vadd.f32 %v848, %v852
          %s854 = sld [smem:[#allocation3 + $0x63]]
          %v855 = vld [vmem:[%s501] sm:$0xf]
          %v856 = vstv %s854
          %v857 = vmul.f32 %v856, %v855
          %v858 = vadd.f32 %v853, %v857
          %s859 = sld [smem:[#allocation3 + $0x64]]
          %v860 = vld [vmem:[%s507] sm:$0xf]
          %v861 = vstv %s859
          %v862 = vmul.f32 %v861, %v860
          %v863 = vadd.f32 %v858, %v862
          %s864 = sld [smem:[#allocation3 + $0x65]]
          %v865 = vld [vmem:[%s513] sm:$0xf]
          %v866 = vstv %s864
          %v867 = vmul.f32 %v866, %v865
          %v868 = vadd.f32 %v863, %v867
          %s869 = sld [smem:[#allocation3 + $0x66]]
          %v870 = vld [vmem:[%s519] sm:$0xf]
          %v871 = vstv %s869
          %v872 = vmul.f32 %v871, %v870
          %v873 = vadd.f32 %v868, %v872
          %s874 = sld [smem:[#allocation3 + $0x67]]
          %v875 = vld [vmem:[%s525] sm:$0xf]
          %v876 = vstv %s874
          %v877 = vmul.f32 %v876, %v875
          %v878 = vadd.f32 %v873, %v877
          %s879 = sld [smem:[#allocation3 + $0x68]]
          %v880 = vld [vmem:[%s531] sm:$0xf]
          %v881 = vstv %s879
          %v882 = vmul.f32 %v881, %v880
          %v883 = vadd.f32 %v878, %v882
          %s884 = sld [smem:[#allocation3 + $0x69]]
          %v885 = vld [vmem:[%s537] sm:$0xf]
          %v886 = vstv %s884
          %v887 = vmul.f32 %v886, %v885
          %v888 = vadd.f32 %v883, %v887
          %s889 = sld [smem:[#allocation3 + $0x6a]]
          %v890 = vld [vmem:[%s543] sm:$0xf]
          %v891 = vstv %s889
          %v892 = vmul.f32 %v891, %v890
          %v893 = vadd.f32 %v888, %v892
          %s894 = sld [smem:[#allocation3 + $0x6b]]
          %v895 = vld [vmem:[%s549] sm:$0xf]
          %v896 = vstv %s894
          %v897 = vmul.f32 %v896, %v895
          %v898 = vadd.f32 %v893, %v897
          %s899 = sld [smem:[#allocation3 + $0x6c]]
          %v900 = vld [vmem:[%s555] sm:$0xf]
          %v901 = vstv %s899
          %v902 = vmul.f32 %v901, %v900
          %v903 = vadd.f32 %v898, %v902
          %s904 = sld [smem:[#allocation3 + $0x6d]]
          %v905 = vld [vmem:[%s561] sm:$0xf]
          %v906 = vstv %s904
          %v907 = vmul.f32 %v906, %v905
          %v908 = vadd.f32 %v903, %v907
          %s909 = sld [smem:[#allocation3 + $0x6e]]
          %v910 = vld [vmem:[%s567] sm:$0xf]
          %v911 = vstv %s909
          %v912 = vmul.f32 %v911, %v910
          %v913 = vadd.f32 %v908, %v912
          %s914 = sld [smem:[#allocation3 + $0x6f]]
          %v915 = vld [vmem:[%s573] sm:$0xf]
          %v916 = vstv %s914
          %v917 = vmul.f32 %v916, %v915
          %v918 = vadd.f32 %v913, %v917
          %s919 = sld [smem:[#allocation3 + $0x70]]
          %v920 = vld [vmem:[%s579] sm:$0xf]
          %v921 = vstv %s919
          %v922 = vmul.f32 %v921, %v920
          %v923 = vadd.f32 %v918, %v922
          %s924 = sld [smem:[#allocation3 + $0x71]]
          %v925 = vld [vmem:[%s585] sm:$0xf]
          %v926 = vstv %s924
          %v927 = vmul.f32 %v926, %v925
          %v928 = vadd.f32 %v923, %v927
          %s929 = sld [smem:[#allocation3 + $0x72]]
          %v930 = vld [vmem:[%s591] sm:$0xf]
          %v931 = vstv %s929
          %v932 = vmul.f32 %v931, %v930
          %v933 = vadd.f32 %v928, %v932
          %s934 = sld [smem:[#allocation3 + $0x73]]
          %v935 = vld [vmem:[%s597] sm:$0xf]
          %v936 = vstv %s934
          %v937 = vmul.f32 %v936, %v935
          %v938 = vadd.f32 %v933, %v937
          %s939 = sld [smem:[#allocation3 + $0x74]]
          %v940 = vld [vmem:[%s603] sm:$0xf]
          %v941 = vstv %s939
          %v942 = vmul.f32 %v941, %v940
          %v943 = vadd.f32 %v938, %v942
          %s944 = sld [smem:[#allocation3 + $0x75]]
          %v945 = vld [vmem:[%s609] sm:$0xf]
          %v946 = vstv %s944
          %v947 = vmul.f32 %v946, %v945
          %v948 = vadd.f32 %v943, %v947
          %s949 = sld [smem:[#allocation3 + $0x76]]
          %v950 = vld [vmem:[%s615] sm:$0xf]
          %v951 = vstv %s949
          %v952 = vmul.f32 %v951, %v950
          %v953 = vadd.f32 %v948, %v952
          %s954 = sld [smem:[#allocation3 + $0x77]]
          %v955 = vld [vmem:[%s621] sm:$0xf]
          %v956 = vstv %s954
          %v957 = vmul.f32 %v956, %v955
          %v958 = vadd.f32 %v953, %v957
          %s959 = sld [smem:[#allocation3 + $0x78]]
          %v960 = vld [vmem:[%s627] sm:$0xf]
          %v961 = vstv %s959
          %v962 = vmul.f32 %v961, %v960
          %v963 = vadd.f32 %v958, %v962
          %s964 = sld [smem:[#allocation3 + $0x79]]
          %v965 = vld [vmem:[%s633] sm:$0xf]
          %v966 = vstv %s964
          %v967 = vmul.f32 %v966, %v965
          %v968 = vadd.f32 %v963, %v967
          %s969 = sld [smem:[#allocation3 + $0x7a]]
          %v970 = vld [vmem:[%s639] sm:$0xf]
          %v971 = vstv %s969
          %v972 = vmul.f32 %v971, %v970
          %v973 = vadd.f32 %v968, %v972
          %s974 = sld [smem:[#allocation3 + $0x7b]]
          %v975 = vld [vmem:[%s645] sm:$0xf]
          %v976 = vstv %s974
          %v977 = vmul.f32 %v976, %v975
          %v978 = vadd.f32 %v973, %v977
          %s979 = sld [smem:[#allocation3 + $0x7c]]
          %v980 = vld [vmem:[%s651] sm:$0xf]
          %v981 = vstv %s979
          %v982 = vmul.f32 %v981, %v980
          %v983 = vadd.f32 %v978, %v982
          %s984 = sld [smem:[#allocation3 + $0x7d]]
          %v985 = vld [vmem:[%s657] sm:$0xf]
          %v986 = vstv %s984
          %v987 = vmul.f32 %v986, %v985
          %v988 = vadd.f32 %v983, %v987
          %s989 = sld [smem:[#allocation3 + $0x7e]]
          %v990 = vld [vmem:[%s663] sm:$0xf]
          %v991 = vstv %s989
          %v992 = vmul.f32 %v991, %v990
          %v993 = vadd.f32 %v988, %v992
          %s994 = sld [smem:[#allocation3 + $0x7f]]
          %v995 = vld [vmem:[%s669] sm:$0xf]
          %v996 = vstv %s994
          %v997 = vmul.f32 %v996, %v995
          %v998 = vadd.f32 %v993, %v997
          %s999 = sld [smem:[#allocation6 + $0x1]]
          %v1000 = vstv %s999
          %v1001 = vadd.f32 %v998, %v1000
          %s1002 = scalar_lea.vmem [#allocation2], 4
          %1003 = vst.msk [vmem:[%s1002] sm:$0xf] %vm677, %v1001
          %s1004 = sld [smem:[#allocation3 + $0x80]]
          %v1005 = vld [vmem:[%s279] sm:$0xf]
          %v1006 = vstv %s1004
          %v1007 = vmul.f32 %v1006, %v1005
          %v1008 = vadd.f32 %v1007, 0.0
          %s1009 = sld [smem:[#allocation3 + $0x81]]
          %v1010 = vld [vmem:[%s297] sm:$0xf]
          %v1011 = vstv %s1009
          %v1012 = vmul.f32 %v1011, %v1010
          %v1013 = vadd.f32 %v1008, %v1012
          %s1014 = sld [smem:[#allocation3 + $0x82]]
          %v1015 = vld [vmem:[%s303] sm:$0xf]
          %v1016 = vstv %s1014
          %v1017 = vmul.f32 %v1016, %v1015
          %v1018 = vadd.f32 %v1013, %v1017
          %s1019 = sld [smem:[#allocation3 + $0x83]]
          %v1020 = vld [vmem:[%s309] sm:$0xf]
          %v1021 = vstv %s1019
          %v1022 = vmul.f32 %v1021, %v1020
          %v1023 = vadd.f32 %v1018, %v1022
          %s1024 = sld [smem:[#allocation3 + $0x84]]
          %v1025 = vld [vmem:[%s315] sm:$0xf]
          %v1026 = vstv %s1024
          %v1027 = vmul.f32 %v1026, %v1025
          %v1028 = vadd.f32 %v1023, %v1027
          %s1029 = sld [smem:[#allocation3 + $0x85]]
          %v1030 = vld [vmem:[%s321] sm:$0xf]
          %v1031 = vstv %s1029
          %v1032 = vmul.f32 %v1031, %v1030
          %v1033 = vadd.f32 %v1028, %v1032
          %s1034 = sld [smem:[#allocation3 + $0x86]]
          %v1035 = vld [vmem:[%s327] sm:$0xf]
          %v1036 = vstv %s1034
          %v1037 = vmul.f32 %v1036, %v1035
          %v1038 = vadd.f32 %v1033, %v1037
          %s1039 = sld [smem:[#allocation3 + $0x87]]
          %v1040 = vld [vmem:[%s333] sm:$0xf]
          %v1041 = vstv %s1039
          %v1042 = vmul.f32 %v1041, %v1040
          %v1043 = vadd.f32 %v1038, %v1042
          %s1044 = sld [smem:[#allocation3 + $0x88]]
          %v1045 = vld [vmem:[%s339] sm:$0xf]
          %v1046 = vstv %s1044
          %v1047 = vmul.f32 %v1046, %v1045
          %v1048 = vadd.f32 %v1043, %v1047
          %s1049 = sld [smem:[#allocation3 + $0x89]]
          %v1050 = vld [vmem:[%s345] sm:$0xf]
          %v1051 = vstv %s1049
          %v1052 = vmul.f32 %v1051, %v1050
          %v1053 = vadd.f32 %v1048, %v1052
          %s1054 = sld [smem:[#allocation3 + $0x8a]]
          %v1055 = vld [vmem:[%s351] sm:$0xf]
          %v1056 = vstv %s1054
          %v1057 = vmul.f32 %v1056, %v1055
          %v1058 = vadd.f32 %v1053, %v1057
          %s1059 = sld [smem:[#allocation3 + $0x8b]]
          %v1060 = vld [vmem:[%s357] sm:$0xf]
          %v1061 = vstv %s1059
          %v1062 = vmul.f32 %v1061, %v1060
          %v1063 = vadd.f32 %v1058, %v1062
          %s1064 = sld [smem:[#allocation3 + $0x8c]]
          %v1065 = vld [vmem:[%s363] sm:$0xf]
          %v1066 = vstv %s1064
          %v1067 = vmul.f32 %v1066, %v1065
          %v1068 = vadd.f32 %v1063, %v1067
          %s1069 = sld [smem:[#allocation3 + $0x8d]]
          %v1070 = vld [vmem:[%s369] sm:$0xf]
          %v1071 = vstv %s1069
          %v1072 = vmul.f32 %v1071, %v1070
          %v1073 = vadd.f32 %v1068, %v1072
          %s1074 = sld [smem:[#allocation3 + $0x8e]]
          %v1075 = vld [vmem:[%s375] sm:$0xf]
          %v1076 = vstv %s1074
          %v1077 = vmul.f32 %v1076, %v1075
          %v1078 = vadd.f32 %v1073, %v1077
          %s1079 = sld [smem:[#allocation3 + $0x8f]]
          %v1080 = vld [vmem:[%s381] sm:$0xf]
          %v1081 = vstv %s1079
          %v1082 = vmul.f32 %v1081, %v1080
          %v1083 = vadd.f32 %v1078, %v1082
          %s1084 = sld [smem:[#allocation3 + $0x90]]
          %v1085 = vld [vmem:[%s387] sm:$0xf]
          %v1086 = vstv %s1084
          %v1087 = vmul.f32 %v1086, %v1085
          %v1088 = vadd.f32 %v1083, %v1087
          %s1089 = sld [smem:[#allocation3 + $0x91]]
          %v1090 = vld [vmem:[%s393] sm:$0xf]
          %v1091 = vstv %s1089
          %v1092 = vmul.f32 %v1091, %v1090
          %v1093 = vadd.f32 %v1088, %v1092
          %s1094 = sld [smem:[#allocation3 + $0x92]]
          %v1095 = vld [vmem:[%s399] sm:$0xf]
          %v1096 = vstv %s1094
          %v1097 = vmul.f32 %v1096, %v1095
          %v1098 = vadd.f32 %v1093, %v1097
          %s1099 = sld [smem:[#allocation3 + $0x93]]
          %v1100 = vld [vmem:[%s405] sm:$0xf]
          %v1101 = vstv %s1099
          %v1102 = vmul.f32 %v1101, %v1100
          %v1103 = vadd.f32 %v1098, %v1102
          %s1104 = sld [smem:[#allocation3 + $0x94]]
          %v1105 = vld [vmem:[%s411] sm:$0xf]
          %v1106 = vstv %s1104
          %v1107 = vmul.f32 %v1106, %v1105
          %v1108 = vadd.f32 %v1103, %v1107
          %s1109 = sld [smem:[#allocation3 + $0x95]]
          %v1110 = vld [vmem:[%s417] sm:$0xf]
          %v1111 = vstv %s1109
          %v1112 = vmul.f32 %v1111, %v1110
          %v1113 = vadd.f32 %v1108, %v1112
          %s1114 = sld [smem:[#allocation3 + $0x96]]
          %v1115 = vld [vmem:[%s423] sm:$0xf]
          %v1116 = vstv %s1114
          %v1117 = vmul.f32 %v1116, %v1115
          %v1118 = vadd.f32 %v1113, %v1117
          %s1119 = sld [smem:[#allocation3 + $0x97]]
          %v1120 = vld [vmem:[%s429] sm:$0xf]
          %v1121 = vstv %s1119
          %v1122 = vmul.f32 %v1121, %v1120
          %v1123 = vadd.f32 %v1118, %v1122
          %s1124 = sld [smem:[#allocation3 + $0x98]]
          %v1125 = vld [vmem:[%s435] sm:$0xf]
          %v1126 = vstv %s1124
          %v1127 = vmul.f32 %v1126, %v1125
          %v1128 = vadd.f32 %v1123, %v1127
          %s1129 = sld [smem:[#allocation3 + $0x99]]
          %v1130 = vld [vmem:[%s441] sm:$0xf]
          %v1131 = vstv %s1129
          %v1132 = vmul.f32 %v1131, %v1130
          %v1133 = vadd.f32 %v1128, %v1132
          %s1134 = sld [smem:[#allocation3 + $0x9a]]
          %v1135 = vld [vmem:[%s447] sm:$0xf]
          %v1136 = vstv %s1134
          %v1137 = vmul.f32 %v1136, %v1135
          %v1138 = vadd.f32 %v1133, %v1137
          %s1139 = sld [smem:[#allocation3 + $0x9b]]
          %v1140 = vld [vmem:[%s453] sm:$0xf]
          %v1141 = vstv %s1139
          %v1142 = vmul.f32 %v1141, %v1140
          %v1143 = vadd.f32 %v1138, %v1142
          %s1144 = sld [smem:[#allocation3 + $0x9c]]
          %v1145 = vld [vmem:[%s459] sm:$0xf]
          %v1146 = vstv %s1144
          %v1147 = vmul.f32 %v1146, %v1145
          %v1148 = vadd.f32 %v1143, %v1147
          %s1149 = sld [smem:[#allocation3 + $0x9d]]
          %v1150 = vld [vmem:[%s465] sm:$0xf]
          %v1151 = vstv %s1149
          %v1152 = vmul.f32 %v1151, %v1150
          %v1153 = vadd.f32 %v1148, %v1152
          %s1154 = sld [smem:[#allocation3 + $0x9e]]
          %v1155 = vld [vmem:[%s471] sm:$0xf]
          %v1156 = vstv %s1154
          %v1157 = vmul.f32 %v1156, %v1155
          %v1158 = vadd.f32 %v1153, %v1157
          %s1159 = sld [smem:[#allocation3 + $0x9f]]
          %v1160 = vld [vmem:[%s477] sm:$0xf]
          %v1161 = vstv %s1159
          %v1162 = vmul.f32 %v1161, %v1160
          %v1163 = vadd.f32 %v1158, %v1162
          %s1164 = sld [smem:[#allocation3 + $0xa0]]
          %v1165 = vld [vmem:[%s483] sm:$0xf]
          %v1166 = vstv %s1164
          %v1167 = vmul.f32 %v1166, %v1165
          %v1168 = vadd.f32 %v1163, %v1167
          %s1169 = sld [smem:[#allocation3 + $0xa1]]
          %v1170 = vld [vmem:[%s489] sm:$0xf]
          %v1171 = vstv %s1169
          %v1172 = vmul.f32 %v1171, %v1170
          %v1173 = vadd.f32 %v1168, %v1172
          %s1174 = sld [smem:[#allocation3 + $0xa2]]
          %v1175 = vld [vmem:[%s495] sm:$0xf]
          %v1176 = vstv %s1174
          %v1177 = vmul.f32 %v1176, %v1175
          %v1178 = vadd.f32 %v1173, %v1177
          %s1179 = sld [smem:[#allocation3 + $0xa3]]
          %v1180 = vld [vmem:[%s501] sm:$0xf]
          %v1181 = vstv %s1179
          %v1182 = vmul.f32 %v1181, %v1180
          %v1183 = vadd.f32 %v1178, %v1182
          %s1184 = sld [smem:[#allocation3 + $0xa4]]
          %v1185 = vld [vmem:[%s507] sm:$0xf]
          %v1186 = vstv %s1184
          %v1187 = vmul.f32 %v1186, %v1185
          %v1188 = vadd.f32 %v1183, %v1187
          %s1189 = sld [smem:[#allocation3 + $0xa5]]
          %v1190 = vld [vmem:[%s513] sm:$0xf]
          %v1191 = vstv %s1189
          %v1192 = vmul.f32 %v1191, %v1190
          %v1193 = vadd.f32 %v1188, %v1192
          %s1194 = sld [smem:[#allocation3 + $0xa6]]
          %v1195 = vld [vmem:[%s519] sm:$0xf]
          %v1196 = vstv %s1194
          %v1197 = vmul.f32 %v1196, %v1195
          %v1198 = vadd.f32 %v1193, %v1197
          %s1199 = sld [smem:[#allocation3 + $0xa7]]
          %v1200 = vld [vmem:[%s525] sm:$0xf]
          %v1201 = vstv %s1199
          %v1202 = vmul.f32 %v1201, %v1200
          %v1203 = vadd.f32 %v1198, %v1202
          %s1204 = sld [smem:[#allocation3 + $0xa8]]
          %v1205 = vld [vmem:[%s531] sm:$0xf]
          %v1206 = vstv %s1204
          %v1207 = vmul.f32 %v1206, %v1205
          %v1208 = vadd.f32 %v1203, %v1207
          %s1209 = sld [smem:[#allocation3 + $0xa9]]
          %v1210 = vld [vmem:[%s537] sm:$0xf]
          %v1211 = vstv %s1209
          %v1212 = vmul.f32 %v1211, %v1210
          %v1213 = vadd.f32 %v1208, %v1212
          %s1214 = sld [smem:[#allocation3 + $0xaa]]
          %v1215 = vld [vmem:[%s543] sm:$0xf]
          %v1216 = vstv %s1214
          %v1217 = vmul.f32 %v1216, %v1215
          %v1218 = vadd.f32 %v1213, %v1217
          %s1219 = sld [smem:[#allocation3 + $0xab]]
          %v1220 = vld [vmem:[%s549] sm:$0xf]
          %v1221 = vstv %s1219
          %v1222 = vmul.f32 %v1221, %v1220
          %v1223 = vadd.f32 %v1218, %v1222
          %s1224 = sld [smem:[#allocation3 + $0xac]]
          %v1225 = vld [vmem:[%s555] sm:$0xf]
          %v1226 = vstv %s1224
          %v1227 = vmul.f32 %v1226, %v1225
          %v1228 = vadd.f32 %v1223, %v1227
          %s1229 = sld [smem:[#allocation3 + $0xad]]
          %v1230 = vld [vmem:[%s561] sm:$0xf]
          %v1231 = vstv %s1229
          %v1232 = vmul.f32 %v1231, %v1230
          %v1233 = vadd.f32 %v1228, %v1232
          %s1234 = sld [smem:[#allocation3 + $0xae]]
          %v1235 = vld [vmem:[%s567] sm:$0xf]
          %v1236 = vstv %s1234
          %v1237 = vmul.f32 %v1236, %v1235
          %v1238 = vadd.f32 %v1233, %v1237
          %s1239 = sld [smem:[#allocation3 + $0xaf]]
          %v1240 = vld [vmem:[%s573] sm:$0xf]
          %v1241 = vstv %s1239
          %v1242 = vmul.f32 %v1241, %v1240
          %v1243 = vadd.f32 %v1238, %v1242
          %s1244 = sld [smem:[#allocation3 + $0xb0]]
          %v1245 = vld [vmem:[%s579] sm:$0xf]
          %v1246 = vstv %s1244
          %v1247 = vmul.f32 %v1246, %v1245
          %v1248 = vadd.f32 %v1243, %v1247
          %s1249 = sld [smem:[#allocation3 + $0xb1]]
          %v1250 = vld [vmem:[%s585] sm:$0xf]
          %v1251 = vstv %s1249
          %v1252 = vmul.f32 %v1251, %v1250
          %v1253 = vadd.f32 %v1248, %v1252
          %s1254 = sld [smem:[#allocation3 + $0xb2]]
          %v1255 = vld [vmem:[%s591] sm:$0xf]
          %v1256 = vstv %s1254
          %v1257 = vmul.f32 %v1256, %v1255
          %v1258 = vadd.f32 %v1253, %v1257
          %s1259 = sld [smem:[#allocation3 + $0xb3]]
          %v1260 = vld [vmem:[%s597] sm:$0xf]
          %v1261 = vstv %s1259
          %v1262 = vmul.f32 %v1261, %v1260
          %v1263 = vadd.f32 %v1258, %v1262
          %s1264 = sld [smem:[#allocation3 + $0xb4]]
          %v1265 = vld [vmem:[%s603] sm:$0xf]
          %v1266 = vstv %s1264
          %v1267 = vmul.f32 %v1266, %v1265
          %v1268 = vadd.f32 %v1263, %v1267
          %s1269 = sld [smem:[#allocation3 + $0xb5]]
          %v1270 = vld [vmem:[%s609] sm:$0xf]
          %v1271 = vstv %s1269
          %v1272 = vmul.f32 %v1271, %v1270
          %v1273 = vadd.f32 %v1268, %v1272
          %s1274 = sld [smem:[#allocation3 + $0xb6]]
          %v1275 = vld [vmem:[%s615] sm:$0xf]
          %v1276 = vstv %s1274
          %v1277 = vmul.f32 %v1276, %v1275
          %v1278 = vadd.f32 %v1273, %v1277
          %s1279 = sld [smem:[#allocation3 + $0xb7]]
          %v1280 = vld [vmem:[%s621] sm:$0xf]
          %v1281 = vstv %s1279
          %v1282 = vmul.f32 %v1281, %v1280
          %v1283 = vadd.f32 %v1278, %v1282
          %s1284 = sld [smem:[#allocation3 + $0xb8]]
          %v1285 = vld [vmem:[%s627] sm:$0xf]
          %v1286 = vstv %s1284
          %v1287 = vmul.f32 %v1286, %v1285
          %v1288 = vadd.f32 %v1283, %v1287
          %s1289 = sld [smem:[#allocation3 + $0xb9]]
          %v1290 = vld [vmem:[%s633] sm:$0xf]
          %v1291 = vstv %s1289
          %v1292 = vmul.f32 %v1291, %v1290
          %v1293 = vadd.f32 %v1288, %v1292
          %s1294 = sld [smem:[#allocation3 + $0xba]]
          %v1295 = vld [vmem:[%s639] sm:$0xf]
          %v1296 = vstv %s1294
          %v1297 = vmul.f32 %v1296, %v1295
          %v1298 = vadd.f32 %v1293, %v1297
          %s1299 = sld [smem:[#allocation3 + $0xbb]]
          %v1300 = vld [vmem:[%s645] sm:$0xf]
          %v1301 = vstv %s1299
          %v1302 = vmul.f32 %v1301, %v1300
          %v1303 = vadd.f32 %v1298, %v1302
          %s1304 = sld [smem:[#allocation3 + $0xbc]]
          %v1305 = vld [vmem:[%s651] sm:$0xf]
          %v1306 = vstv %s1304
          %v1307 = vmul.f32 %v1306, %v1305
          %v1308 = vadd.f32 %v1303, %v1307
          %s1309 = sld [smem:[#allocation3 + $0xbd]]
          %v1310 = vld [vmem:[%s657] sm:$0xf]
          %v1311 = vstv %s1309
          %v1312 = vmul.f32 %v1311, %v1310
          %v1313 = vadd.f32 %v1308, %v1312
          %s1314 = sld [smem:[#allocation3 + $0xbe]]
          %v1315 = vld [vmem:[%s663] sm:$0xf]
          %v1316 = vstv %s1314
          %v1317 = vmul.f32 %v1316, %v1315
          %v1318 = vadd.f32 %v1313, %v1317
          %s1319 = sld [smem:[#allocation3 + $0xbf]]
          %v1320 = vld [vmem:[%s669] sm:$0xf]
          %v1321 = vstv %s1319
          %v1322 = vmul.f32 %v1321, %v1320
          %v1323 = vadd.f32 %v1318, %v1322
          %s1324 = sld [smem:[#allocation6 + $0x2]]
          %v1325 = vstv %s1324
          %v1326 = vadd.f32 %v1323, %v1325
          %s1327 = scalar_lea.vmem [#allocation2], 8
          %1328 = vst.msk [vmem:[%s1327] sm:$0xf] %vm677, %v1326
        $region52: #{huggingface_wrapper_forward.1} parent=39 // pred_fallthru
          _
        %v1329 = vld [vmem:[%s284] sm:$0xff]
        %v1330 = vld [vmem:[%s284 + $0x8] sm:$0xff]
        %v1331 = vld [vmem:[#allocation2] sm:$0xf]
        %vm1332 = vcmask 31744
        %v1334 = vsel %vm1332, %v1329, 0
        %v1337 = vsel %vm1332, %v1330, 0
        %vm1339 = vcmask 1043456
        %v1341 = vsel %vm1339, %v1331, 0
        %1343 = vmatprep.subr.mxu0 0.0
        %1344 = vmatpush1.msra.mxu0 %v1341
        %1345 = vmatprep.subr.mxu0 0.0
        %1346 = vmatpush1.msra.mxu0 0.0
        %1347 = vmatprep.subr.mxu0 0.0
        %1348 = vmatpush1.msra.mxu0 0.0
        %1349 = vmatprep.subr.mxu0 0.0
        %1350 = vmatpush1.msra.mxu0 0.0
        %1351 = vmatprep.subr.mxu0 0.0
        %1352 = vmatpush1.msra.mxu0 0.0
        %1353 = vmatprep.subr.mxu0 0.0
        %1354 = vmatpush1.msra.mxu0 0.0
        %1355 = vmatprep.subr.mxu0 0.0
        %1356 = vmatpush1.msra.mxu0 0.0
        %1357 = vmatprep.subr.mxu0 0.0
        %1358 = vmatpush1.msra.mxu0 0.0
        %1359 = vmatprep.subr.mxu0 0.0
        %1360 = vmatpush1.msra.mxu0 0.0
        %1361 = vmatprep.subr.mxu0 0.0
        %1362 = vmatpush1.msra.mxu0 0.0
        %1363 = vmatprep.subr.mxu0 0.0
        %1364 = vmatpush1.msra.mxu0 0.0
        %1365 = vmatprep.subr.mxu0 0.0
        %1366 = vmatpush1.msra.mxu0 0.0
        %1367 = vmatprep.subr.mxu0 0.0
        %1368 = vmatpush1.msra.mxu0 0.0
        %1369 = vmatprep.subr.mxu0 0.0
        %1370 = vmatpush1.msra.mxu0 0.0
        %1371 = vmatprep.subr.mxu0 0.0
        %1372 = vmatpush1.msra.mxu0 0.0
        %1373 = vmatprep.subr.mxu0 0.0
        %1374 = vmatpush1.msra.mxu0 0.0
        %1375 = vmatprep.subr.mxu0 0.0
        %1376 = vmatpush1.msra.mxu0 0.0
        %1377 = vmatprep.subr.mxu0 0.0
        %1378 = vmatpush1.msra.mxu0 0.0
        %1379 = vmatprep.subr.mxu0 0.0
        %1380 = vmatpush1.msra.mxu0 0.0
        %1381 = vmatprep.subr.mxu0 0.0
        %1382 = vmatpush1.msra.mxu0 0.0
        %1383 = vmatprep.subr.mxu0 0.0
        %1384 = vmatpush1.msra.mxu0 0.0
        %1385 = vmatprep.subr.mxu0 0.0
        %1386 = vmatpush1.msra.mxu0 0.0
        %1387 = vmatprep.subr.mxu0 0.0
        %1388 = vmatpush1.msra.mxu0 0.0
        %1389 = vmatprep.subr.mxu0 0.0
        %1390 = vmatpush1.msra.mxu0 0.0
        %1391 = vmatprep.subr.mxu0 0.0
        %1392 = vmatpush1.msra.mxu0 0.0
        %1393 = vmatprep.subr.mxu0 0.0
        %1394 = vmatpush1.msra.mxu0 0.0
        %1395 = vmatprep.subr.mxu0 0.0
        %1396 = vmatpush1.msra.mxu0 0.0
        %1397 = vmatprep.subr.mxu0 0.0
        %1398 = vmatpush1.msra.mxu0 0.0
        %1399 = vmatprep.subr.mxu0 0.0
        %1400 = vmatpush1.msra.mxu0 0.0
        %1401 = vmatprep.subr.mxu0 0.0
        %1402 = vmatpush1.msra.mxu0 0.0
        %1403 = vmatprep.subr.mxu0 0.0
        %1404 = vmatpush1.msra.mxu0 0.0
        %1405 = vmatprep.subr.mxu0 0.0
        %1406 = vmatpush1.msra.mxu0 0.0
        %1407 = vmatprep.mubr.f32.mxu0 0.0
        %1408 = vmatmul.mubr.f32.gmra.mrb[0].mxu0 %v1334
        %v1409 = vpop.f32.mrb[0].mxu0
        %v1410 = vadd.f32 0.0, %v1409
        %v1411 = vpop.f32.mrb[0].mxu0
        %1412 = vmatprep.mubr.f32.mxu0 0.0
        %1413 = vmatmul.mubr.f32.gmra.mrb[0].mxu0 %v1337
        %v1414 = vpop.f32.mrb[0].mxu0
        %v1415 = vadd.f32 0.0, %v1414
        %v1416 = vpop.f32.mrb[0].mxu0
        %1417 = vdwg.mxu0
        %v1418 = vld [vmem:[%s4] sm:$0xf]
        %v1420 = vsel %vm1332, %v1410, 0
        %v1423 = vsel %vm1332, %v1415, 0
        %v1426 = vsel %vm1339, %v1418, 0
        %1428 = vmatprep.subr.mxu0 0.0
        %1429 = vmatpush1.msra.mxu0 %v1426
        %1430 = vmatprep.subr.mxu0 0.0
        %1431 = vmatpush1.msra.mxu0 0.0
        %1432 = vmatprep.subr.mxu0 0.0
        %1433 = vmatpush1.msra.mxu0 0.0
        %1434 = vmatprep.subr.mxu0 0.0
        %1435 = vmatpush1.msra.mxu0 0.0
        %1436 = vmatprep.subr.mxu0 0.0
        %1437 = vmatpush1.msra.mxu0 0.0
        %1438 = vmatprep.subr.mxu0 0.0
        %1439 = vmatpush1.msra.mxu0 0.0
        %1440 = vmatprep.subr.mxu0 0.0
        %1441 = vmatpush1.msra.mxu0 0.0
        %1442 = vmatprep.subr.mxu0 0.0
        %1443 = vmatpush1.msra.mxu0 0.0
        %1444 = vmatprep.subr.mxu0 0.0
        %1445 = vmatpush1.msra.mxu0 0.0
        %1446 = vmatprep.subr.mxu0 0.0
        %1447 = vmatpush1.msra.mxu0 0.0
        %1448 = vmatprep.subr.mxu0 0.0
        %1449 = vmatpush1.msra.mxu0 0.0
        %1450 = vmatprep.subr.mxu0 0.0
        %1451 = vmatpush1.msra.mxu0 0.0
        %1452 = vmatprep.subr.mxu0 0.0
        %1453 = vmatpush1.msra.mxu0 0.0
        %1454 = vmatprep.subr.mxu0 0.0
        %1455 = vmatpush1.msra.mxu0 0.0
        %1456 = vmatprep.subr.mxu0 0.0
        %1457 = vmatpush1.msra.mxu0 0.0
        %1458 = vmatprep.subr.mxu0 0.0
        %1459 = vmatpush1.msra.mxu0 0.0
        %1460 = vmatprep.subr.mxu0 0.0
        %1461 = vmatpush1.msra.mxu0 0.0
        %1462 = vmatprep.subr.mxu0 0.0
        %1463 = vmatpush1.msra.mxu0 0.0
        %1464 = vmatprep.subr.mxu0 0.0
        %1465 = vmatpush1.msra.mxu0 0.0
        %1466 = vmatprep.subr.mxu0 0.0
        %1467 = vmatpush1.msra.mxu0 0.0
        %1468 = vmatprep.subr.mxu0 0.0
        %1469 = vmatpush1.msra.mxu0 0.0
        %1470 = vmatprep.subr.mxu0 0.0
        %1471 = vmatpush1.msra.mxu0 0.0
        %1472 = vmatprep.subr.mxu0 0.0
        %1473 = vmatpush1.msra.mxu0 0.0
        %1474 = vmatprep.subr.mxu0 0.0
        %1475 = vmatpush1.msra.mxu0 0.0
        %1476 = vmatprep.subr.mxu0 0.0
        %1477 = vmatpush1.msra.mxu0 0.0
        %1478 = vmatprep.subr.mxu0 0.0
        %1479 = vmatpush1.msra.mxu0 0.0
        %1480 = vmatprep.subr.mxu0 0.0
        %1481 = vmatpush1.msra.mxu0 0.0
        %1482 = vmatprep.subr.mxu0 0.0
        %1483 = vmatpush1.msra.mxu0 0.0
        %1484 = vmatprep.subr.mxu0 0.0
        %1485 = vmatpush1.msra.mxu0 0.0
        %1486 = vmatprep.subr.mxu0 0.0
        %1487 = vmatpush1.msra.mxu0 0.0
        %1488 = vmatprep.subr.mxu0 0.0
        %1489 = vmatpush1.msra.mxu0 0.0
        %1490 = vmatprep.subr.mxu0 0.0
        %1491 = vmatpush1.msra.mxu0 0.0
        %1492 = vmatprep.mubr.f32.mxu0 0.0
        %1493 = vmatmul.mubr.f32.gmra.mrb[0].mxu0 %v1420
        %v1494 = vpop.f32.mrb[0].mxu0
        %v1495 = vadd.f32 0.0, %v1494
        %v1496 = vpop.f32.mrb[0].mxu0
        %1497 = vmatprep.mubr.f32.mxu0 0.0
        %1498 = vmatmul.mubr.f32.gmra.mrb[0].mxu0 %v1423
        %v1499 = vpop.f32.mrb[0].mxu0
        %v1500 = vadd.f32 0.0, %v1499
        %v1501 = vpop.f32.mrb[0].mxu0
        %1502 = vdwg.mxu0
        %vm1503 = vcmask 130048
        %1504 = vst.msk [vmem:[%s274] sm:$0xff] %vm1503, %v1495
        %1505 = vst.msk [vmem:[%s274 + $0x8] sm:$0xff] %vm1503, %v1500
        %v1506 = vld [vmem:[%s284] sm:$0xff]
        %v1507 = vld [vmem:[%s284 + $0x8] sm:$0xff]
        %s1508 = scalar_lea.vmem [#allocation2], 4
        %v1509 = vld [vmem:[%s1508] sm:$0xf]
        %v1511 = vsel %vm1332, %v1506, 0
        %v1514 = vsel %vm1332, %v1507, 0
        %v1517 = vsel %vm1339, %v1509, 0
        %1519 = vmatprep.subr.mxu0 0.0
        %1520 = vmatpush1.msra.mxu0 %v1517
        %1521 = vmatprep.subr.mxu0 0.0
        %1522 = vmatpush1.msra.mxu0 0.0
        %1523 = vmatprep.subr.mxu0 0.0
        %1524 = vmatpush1.msra.mxu0 0.0
        %1525 = vmatprep.subr.mxu0 0.0
        %1526 = vmatpush1.msra.mxu0 0.0
        %1527 = vmatprep.subr.mxu0 0.0
        %1528 = vmatpush1.msra.mxu0 0.0
        %1529 = vmatprep.subr.mxu0 0.0
        %1530 = vmatpush1.msra.mxu0 0.0
        %1531 = vmatprep.subr.mxu0 0.0
        %1532 = vmatpush1.msra.mxu0 0.0
        %1533 = vmatprep.subr.mxu0 0.0
        %1534 = vmatpush1.msra.mxu0 0.0
        %1535 = vmatprep.subr.mxu0 0.0
        %1536 = vmatpush1.msra.mxu0 0.0
        %1537 = vmatprep.subr.mxu0 0.0
        %1538 = vmatpush1.msra.mxu0 0.0
        %1539 = vmatprep.subr.mxu0 0.0
        %1540 = vmatpush1.msra.mxu0 0.0
        %1541 = vmatprep.subr.mxu0 0.0
        %1542 = vmatpush1.msra.mxu0 0.0
        %1543 = vmatprep.subr.mxu0 0.0
        %1544 = vmatpush1.msra.mxu0 0.0
        %1545 = vmatprep.subr.mxu0 0.0
        %1546 = vmatpush1.msra.mxu0 0.0
        %1547 = vmatprep.subr.mxu0 0.0
        %1548 = vmatpush1.msra.mxu0 0.0
        %1549 = vmatprep.subr.mxu0 0.0
        %1550 = vmatpush1.msra.mxu0 0.0
        %1551 = vmatprep.subr.mxu0 0.0
        %1552 = vmatpush1.msra.mxu0 0.0
        %1553 = vmatprep.subr.mxu0 0.0
        %1554 = vmatpush1.msra.mxu0 0.0
        %1555 = vmatprep.subr.mxu0 0.0
        %1556 = vmatpush1.msra.mxu0 0.0
        %1557 = vmatprep.subr.mxu0 0.0
        %1558 = vmatpush1.msra.mxu0 0.0
        %1559 = vmatprep.subr.mxu0 0.0
        %1560 = vmatpush1.msra.mxu0 0.0
        %1561 = vmatprep.subr.mxu0 0.0
        %1562 = vmatpush1.msra.mxu0 0.0
        %1563 = vmatprep.subr.mxu0 0.0
        %1564 = vmatpush1.msra.mxu0 0.0
        %1565 = vmatprep.subr.mxu0 0.0
        %1566 = vmatpush1.msra.mxu0 0.0
        %1567 = vmatprep.subr.mxu0 0.0
        %1568 = vmatpush1.msra.mxu0 0.0
        %1569 = vmatprep.subr.mxu0 0.0
        %1570 = vmatpush1.msra.mxu0 0.0
        %1571 = vmatprep.subr.mxu0 0.0
        %1572 = vmatpush1.msra.mxu0 0.0
        %1573 = vmatprep.subr.mxu0 0.0
        %1574 = vmatpush1.msra.mxu0 0.0
        %1575 = vmatprep.subr.mxu0 0.0
        %1576 = vmatpush1.msra.mxu0 0.0
        %1577 = vmatprep.subr.mxu0 0.0
        %1578 = vmatpush1.msra.mxu0 0.0
        %1579 = vmatprep.subr.mxu0 0.0
        %1580 = vmatpush1.msra.mxu0 0.0
        %1581 = vmatprep.subr.mxu0 0.0
        %1582 = vmatpush1.msra.mxu0 0.0
        %1583 = vmatprep.mubr.f32.mxu0 0.0
        %1584 = vmatmul.mubr.f32.gmra.mrb[0].mxu0 %v1511
        %v1585 = vpop.f32.mrb[0].mxu0
        %v1586 = vadd.f32 0.0, %v1585
        %v1587 = vpop.f32.mrb[0].mxu0
        %1588 = vmatprep.mubr.f32.mxu0 0.0
        %1589 = vmatmul.mubr.f32.gmra.mrb[0].mxu0 %v1514
        %v1590 = vpop.f32.mrb[0].mxu0
        %v1591 = vadd.f32 0.0, %v1590
        %v1592 = vpop.f32.mrb[0].mxu0
        %1593 = vdwg.mxu0
        %v1594 = vld [vmem:[%s4] sm:$0xf]
        %v1596 = vsel %vm1332, %v1586, 0
        %v1599 = vsel %vm1332, %v1591, 0
        %v1602 = vsel %vm1339, %v1594, 0
        %1604 = vmatprep.subr.mxu0 0.0
        %1605 = vmatpush1.msra.mxu0 %v1602
        %1606 = vmatprep.subr.mxu0 0.0
        %1607 = vmatpush1.msra.mxu0 0.0
        %1608 = vmatprep.subr.mxu0 0.0
        %1609 = vmatpush1.msra.mxu0 0.0
        %1610 = vmatprep.subr.mxu0 0.0
        %1611 = vmatpush1.msra.mxu0 0.0
        %1612 = vmatprep.subr.mxu0 0.0
        %1613 = vmatpush1.msra.mxu0 0.0
        %1614 = vmatprep.subr.mxu0 0.0
        %1615 = vmatpush1.msra.mxu0 0.0
        %1616 = vmatprep.subr.mxu0 0.0
        %1617 = vmatpush1.msra.mxu0 0.0
        %1618 = vmatprep.subr.mxu0 0.0
        %1619 = vmatpush1.msra.mxu0 0.0
        %1620 = vmatprep.subr.mxu0 0.0
        %1621 = vmatpush1.msra.mxu0 0.0
        %1622 = vmatprep.subr.mxu0 0.0
        %1623 = vmatpush1.msra.mxu0 0.0
        %1624 = vmatprep.subr.mxu0 0.0
        %1625 = vmatpush1.msra.mxu0 0.0
        %1626 = vmatprep.subr.mxu0 0.0
        %1627 = vmatpush1.msra.mxu0 0.0
        %1628 = vmatprep.subr.mxu0 0.0
        %1629 = vmatpush1.msra.mxu0 0.0
        %1630 = vmatprep.subr.mxu0 0.0
        %1631 = vmatpush1.msra.mxu0 0.0
        %1632 = vmatprep.subr.mxu0 0.0
        %1633 = vmatpush1.msra.mxu0 0.0
        %1634 = vmatprep.subr.mxu0 0.0
        %1635 = vmatpush1.msra.mxu0 0.0
        %1636 = vmatprep.subr.mxu0 0.0
        %1637 = vmatpush1.msra.mxu0 0.0
        %1638 = vmatprep.subr.mxu0 0.0
        %1639 = vmatpush1.msra.mxu0 0.0
        %1640 = vmatprep.subr.mxu0 0.0
        %1641 = vmatpush1.msra.mxu0 0.0
        %1642 = vmatprep.subr.mxu0 0.0
        %1643 = vmatpush1.msra.mxu0 0.0
        %1644 = vmatprep.subr.mxu0 0.0
        %1645 = vmatpush1.msra.mxu0 0.0
        %1646 = vmatprep.subr.mxu0 0.0
        %1647 = vmatpush1.msra.mxu0 0.0
        %1648 = vmatprep.subr.mxu0 0.0
        %1649 = vmatpush1.msra.mxu0 0.0
        %1650 = vmatprep.subr.mxu0 0.0
        %1651 = vmatpush1.msra.mxu0 0.0
        %1652 = vmatprep.subr.mxu0 0.0
        %1653 = vmatpush1.msra.mxu0 0.0
        %1654 = vmatprep.subr.mxu0 0.0
        %1655 = vmatpush1.msra.mxu0 0.0
        %1656 = vmatprep.subr.mxu0 0.0
        %1657 = vmatpush1.msra.mxu0 0.0
        %1658 = vmatprep.subr.mxu0 0.0
        %1659 = vmatpush1.msra.mxu0 0.0
        %1660 = vmatprep.subr.mxu0 0.0
        %1661 = vmatpush1.msra.mxu0 0.0
        %1662 = vmatprep.subr.mxu0 0.0
        %1663 = vmatpush1.msra.mxu0 0.0
        %1664 = vmatprep.subr.mxu0 0.0
        %1665 = vmatpush1.msra.mxu0 0.0
        %1666 = vmatprep.subr.mxu0 0.0
        %1667 = vmatpush1.msra.mxu0 0.0
        %1668 = vmatprep.mubr.f32.mxu0 0.0
        %1669 = vmatmul.mubr.f32.gmra.mrb[0].mxu0 %v1596
        %v1670 = vpop.f32.mrb[0].mxu0
        %v1671 = vadd.f32 0.0, %v1670
        %v1672 = vpop.f32.mrb[0].mxu0
        %1673 = vmatprep.mubr.f32.mxu0 0.0
        %1674 = vmatmul.mubr.f32.gmra.mrb[0].mxu0 %v1599
        %v1675 = vpop.f32.mrb[0].mxu0
        %v1676 = vadd.f32 0.0, %v1675
        %v1677 = vpop.f32.mrb[0].mxu0
        %1678 = vdwg.mxu0
        %s1679 = scalar_lea.vmem %s274, 16 [#allocation8]
        %1680 = vst.msk [vmem:[%s1679] sm:$0xff] %vm1503, %v1671
        %1681 = vst.msk [vmem:[%s1679 + $0x8] sm:$0xff] %vm1503, %v1676
        %v1682 = vld [vmem:[%s284] sm:$0xff]
        %v1683 = vld [vmem:[%s284 + $0x8] sm:$0xff]
        %s1684 = scalar_lea.vmem [#allocation2], 8
        %v1685 = vld [vmem:[%s1684] sm:$0xf]
        %v1687 = vsel %vm1332, %v1682, 0
        %v1690 = vsel %vm1332, %v1683, 0
        %v1693 = vsel %vm1339, %v1685, 0
        %1695 = vmatprep.subr.mxu0 0.0
        %1696 = vmatpush1.msra.mxu0 %v1693
        %1697 = vmatprep.subr.mxu0 0.0
        %1698 = vmatpush1.msra.mxu0 0.0
        %1699 = vmatprep.subr.mxu0 0.0
        %1700 = vmatpush1.msra.mxu0 0.0
        %1701 = vmatprep.subr.mxu0 0.0
        %1702 = vmatpush1.msra.mxu0 0.0
        %1703 = vmatprep.subr.mxu0 0.0
        %1704 = vmatpush1.msra.mxu0 0.0
        %1705 = vmatprep.subr.mxu0 0.0
        %1706 = vmatpush1.msra.mxu0 0.0
        %1707 = vmatprep.subr.mxu0 0.0
        %1708 = vmatpush1.msra.mxu0 0.0
        %1709 = vmatprep.subr.mxu0 0.0
        %1710 = vmatpush1.msra.mxu0 0.0
        %1711 = vmatprep.subr.mxu0 0.0
        %1712 = vmatpush1.msra.mxu0 0.0
        %1713 = vmatprep.subr.mxu0 0.0
        %1714 = vmatpush1.msra.mxu0 0.0
        %1715 = vmatprep.subr.mxu0 0.0
        %1716 = vmatpush1.msra.mxu0 0.0
        %1717 = vmatprep.subr.mxu0 0.0
        %1718 = vmatpush1.msra.mxu0 0.0
        %1719 = vmatprep.subr.mxu0 0.0
        %1720 = vmatpush1.msra.mxu0 0.0
        %1721 = vmatprep.subr.mxu0 0.0
        %1722 = vmatpush1.msra.mxu0 0.0
        %1723 = vmatprep.subr.mxu0 0.0
        %1724 = vmatpush1.msra.mxu0 0.0
        %1725 = vmatprep.subr.mxu0 0.0
        %1726 = vmatpush1.msra.mxu0 0.0
        %1727 = vmatprep.subr.mxu0 0.0
        %1728 = vmatpush1.msra.mxu0 0.0
        %1729 = vmatprep.subr.mxu0 0.0
        %1730 = vmatpush1.msra.mxu0 0.0
        %1731 = vmatprep.subr.mxu0 0.0
        %1732 = vmatpush1.msra.mxu0 0.0
        %1733 = vmatprep.subr.mxu0 0.0
        %1734 = vmatpush1.msra.mxu0 0.0
        %1735 = vmatprep.subr.mxu0 0.0
        %1736 = vmatpush1.msra.mxu0 0.0
        %1737 = vmatprep.subr.mxu0 0.0
        %1738 = vmatpush1.msra.mxu0 0.0
        %1739 = vmatprep.subr.mxu0 0.0
        %1740 = vmatpush1.msra.mxu0 0.0
        %1741 = vmatprep.subr.mxu0 0.0
        %1742 = vmatpush1.msra.mxu0 0.0
        %1743 = vmatprep.subr.mxu0 0.0
        %1744 = vmatpush1.msra.mxu0 0.0
        %1745 = vmatprep.subr.mxu0 0.0
        %1746 = vmatpush1.msra.mxu0 0.0
        %1747 = vmatprep.subr.mxu0 0.0
        %1748 = vmatpush1.msra.mxu0 0.0
        %1749 = vmatprep.subr.mxu0 0.0
        %1750 = vmatpush1.msra.mxu0 0.0
        %1751 = vmatprep.subr.mxu0 0.0
        %1752 = vmatpush1.msra.mxu0 0.0
        %1753 = vmatprep.subr.mxu0 0.0
        %1754 = vmatpush1.msra.mxu0 0.0
        %1755 = vmatprep.subr.mxu0 0.0
        %1756 = vmatpush1.msra.mxu0 0.0
        %1757 = vmatprep.subr.mxu0 0.0
        %1758 = vmatpush1.msra.mxu0 0.0
        %1759 = vmatprep.mubr.f32.mxu0 0.0
        %1760 = vmatmul.mubr.f32.gmra.mrb[0].mxu0 %v1687
        %v1761 = vpop.f32.mrb[0].mxu0
        %v1762 = vadd.f32 0.0, %v1761
        %v1763 = vpop.f32.mrb[0].mxu0
        %1764 = vmatprep.mubr.f32.mxu0 0.0
        %1765 = vmatmul.mubr.f32.gmra.mrb[0].mxu0 %v1690
        %v1766 = vpop.f32.mrb[0].mxu0
        %v1767 = vadd.f32 0.0, %v1766
        %v1768 = vpop.f32.mrb[0].mxu0
        %1769 = vdwg.mxu0
        %v1770 = vld [vmem:[%s4] sm:$0xf]
        %v1772 = vsel %vm1332, %v1762, 0
        %v1775 = vsel %vm1332, %v1767, 0
        %v1778 = vsel %vm1339, %v1770, 0
        %1780 = vmatprep.subr.mxu0 0.0
        %1781 = vmatpush1.msra.mxu0 %v1778
        %1782 = vmatprep.subr.mxu0 0.0
        %1783 = vmatpush1.msra.mxu0 0.0
        %1784 = vmatprep.subr.mxu0 0.0
        %1785 = vmatpush1.msra.mxu0 0.0
        %1786 = vmatprep.subr.mxu0 0.0
        %1787 = vmatpush1.msra.mxu0 0.0
        %1788 = vmatprep.subr.mxu0 0.0
        %1789 = vmatpush1.msra.mxu0 0.0
        %1790 = vmatprep.subr.mxu0 0.0
        %1791 = vmatpush1.msra.mxu0 0.0
        %1792 = vmatprep.subr.mxu0 0.0
        %1793 = vmatpush1.msra.mxu0 0.0
        %1794 = vmatprep.subr.mxu0 0.0
        %1795 = vmatpush1.msra.mxu0 0.0
        %1796 = vmatprep.subr.mxu0 0.0
        %1797 = vmatpush1.msra.mxu0 0.0
        %1798 = vmatprep.subr.mxu0 0.0
        %1799 = vmatpush1.msra.mxu0 0.0
        %1800 = vmatprep.subr.mxu0 0.0
        %1801 = vmatpush1.msra.mxu0 0.0
        %1802 = vmatprep.subr.mxu0 0.0
        %1803 = vmatpush1.msra.mxu0 0.0
        %1804 = vmatprep.subr.mxu0 0.0
        %1805 = vmatpush1.msra.mxu0 0.0
        %1806 = vmatprep.subr.mxu0 0.0
        %1807 = vmatpush1.msra.mxu0 0.0
        %1808 = vmatprep.subr.mxu0 0.0
        %1809 = vmatpush1.msra.mxu0 0.0
        %1810 = vmatprep.subr.mxu0 0.0
        %1811 = vmatpush1.msra.mxu0 0.0
        %1812 = vmatprep.subr.mxu0 0.0
        %1813 = vmatpush1.msra.mxu0 0.0
        %1814 = vmatprep.subr.mxu0 0.0
        %1815 = vmatpush1.msra.mxu0 0.0
        %1816 = vmatprep.subr.mxu0 0.0
        %1817 = vmatpush1.msra.mxu0 0.0
        %1818 = vmatprep.subr.mxu0 0.0
        %1819 = vmatpush1.msra.mxu0 0.0
        %1820 = vmatprep.subr.mxu0 0.0
        %1821 = vmatpush1.msra.mxu0 0.0
        %1822 = vmatprep.subr.mxu0 0.0
        %1823 = vmatpush1.msra.mxu0 0.0
        %1824 = vmatprep.subr.mxu0 0.0
        %1825 = vmatpush1.msra.mxu0 0.0
        %1826 = vmatprep.subr.mxu0 0.0
        %1827 = vmatpush1.msra.mxu0 0.0
        %1828 = vmatprep.subr.mxu0 0.0
        %1829 = vmatpush1.msra.mxu0 0.0
        %1830 = vmatprep.subr.mxu0 0.0
        %1831 = vmatpush1.msra.mxu0 0.0
        %1832 = vmatprep.subr.mxu0 0.0
        %1833 = vmatpush1.msra.mxu0 0.0
        %1834 = vmatprep.subr.mxu0 0.0
        %1835 = vmatpush1.msra.mxu0 0.0
        %1836 = vmatprep.subr.mxu0 0.0
        %1837 = vmatpush1.msra.mxu0 0.0
        %1838 = vmatprep.subr.mxu0 0.0
        %1839 = vmatpush1.msra.mxu0 0.0
        %1840 = vmatprep.subr.mxu0 0.0
        %1841 = vmatpush1.msra.mxu0 0.0
        %1842 = vmatprep.subr.mxu0 0.0
        %1843 = vmatpush1.msra.mxu0 0.0
        %1844 = vmatprep.mubr.f32.mxu0 0.0
        %1845 = vmatmul.mubr.f32.gmra.mrb[0].mxu0 %v1772
        %v1846 = vpop.f32.mrb[0].mxu0
        %v1847 = vadd.f32 0.0, %v1846
        %v1848 = vpop.f32.mrb[0].mxu0
        %1849 = vmatprep.mubr.f32.mxu0 0.0
        %1850 = vmatmul.mubr.f32.gmra.mrb[0].mxu0 %v1775
        %v1851 = vpop.f32.mrb[0].mxu0
        %v1852 = vadd.f32 0.0, %v1851
        %v1853 = vpop.f32.mrb[0].mxu0
        %1854 = vdwg.mxu0
        %s1855 = scalar_lea.vmem %s274, 32 [#allocation8]
        %1856 = vst.msk [vmem:[%s1855] sm:$0xff] %vm1503, %v1847
        %1857 = vst.msk [vmem:[%s1855 + $0x8] sm:$0xff] %vm1503, %v1852
        %s1858 = sand.u32 %s158, 1
        %s1859 = scalar_lea.sflag [#allocation4], %s1858
        %s1860 = sand.u32 %s158, 1
        %s1861 = smul.addr %s1860, 48
        %s1862 = scalar_lea.vmem [#allocation8], %s1861
        // Predicated region
        $region53: #{huggingface_wrapper_forward.1} parent=39 // pred_check
          %p1863 = pneg %p168
        $region54: #{huggingface_wrapper_forward.1} parent=39 // pred_check_branch
          %1865 = sbr.rel (%p1863) target = $region56
        $region55: #{huggingface_wrapper_forward.1} parent=39 // pred_region
          %s1866 = smul.u32 2, %s26
          %s1868 = ssub.s32 768, 768
          %1869 = vsyncadd %s1859, %s1868
          %s1870 = smul.addr %s25, 6
          %s1871 = sadd.s32 %s1866, %s1870
          %s1872 = smul.addr %s1871, 128
          %s1873 = scalar_lea.hbm %s5, %s1872
          %s1874 = sshll.u32 %s1862, 4
          %s1875 = int_to_ptr.vmem [resolvable:$true] %s1874
          %1880 = dma.vmem_to_hbm [thread:$0]  %s1875, 768, %s1873, %s1859, 128, 128, 8
        $region56: #{huggingface_wrapper_forward.1} parent=39 // pred_fallthru
          _
      $region40: #{huggingface_wrapper_forward.1} parent=5 // pred_fallthru
        _
      %p1881 = scmp.le.s32.totalorder 2, %s16
      // Predicated region
      $region57: #{huggingface_wrapper_forward.1} parent=5 // pred_check
        %p1882 = pneg %p1881
      $region58: #{huggingface_wrapper_forward.1} parent=5 // pred_check_branch
        %1884 = sbr.rel (%p1882) target = $region60
      $region59: #{huggingface_wrapper_forward.1} parent=5 // pred_region
        %s1885 = ssub.s32 %s16, 2
        // Predicated region
        $region61: #{huggingface_wrapper_forward.1} parent=59 // pred_check
          %p1886 = pneg %p174
        $region62: #{huggingface_wrapper_forward.1} parent=59 // pred_check_branch
          %1888 = sbr.rel (%p1886) target = $region64
        $region63: #{huggingface_wrapper_forward.1} parent=59 // pred_region
          %s1889 = sand.u32 %s159, 1
          %s1890 = scalar_lea.sflag [#allocation4], %s1889
          %s1891 = sand.u32 %s159, 1
          %s1892 = smul.addr %s1891, 48
          %s1893 = scalar_lea.vmem [#allocation8], %s1892
          %1894 = dma.done %s1890, 768
        $region64: #{huggingface_wrapper_forward.1} parent=59 // pred_fallthru
          _
      $region60: #{huggingface_wrapper_forward.1} parent=5 // pred_fallthru
        _
    $region6: #{huggingface_wrapper_forward.1} parent=1 // loop_footer
      %s20 = sadd.s32 1, %s16
    $region7: #{huggingface_wrapper_forward.1} parent=1 // loop_footer_branch
      %15 = sbr.rel target = $region3
    $region8: #{huggingface_wrapper_forward.1} parent=1 // loop_exit
      _
    %1895 = vsyncpa [#allocation4], 1
    %s1896 = scalar_lea.sflag [#allocation4], 1
    %1897 = vsyncpa %s1896, 1
    %1898 = vsyncpa [#allocation5], 1
    %s1899 = scalar_lea.sflag [#allocation5], 1
    %1900 = vsyncpa %s1899, 1
    %1901 = vsyncpa [#allocation7], 1

</llo_original>
